<compile_context>
chip_gen: v7x
topology: tpu7x:2x2x1
jax: 0.10.0
libtpu: 0.0.40
codegen_flags: <defaults>
</compile_context>

<pallas_src>
import functools

import jax
import jax.numpy as jnp
from jax.experimental import pallas as pl
from jax.experimental.pallas import tpu as pltpu

EPS = 1e-5
LANES = 128


def _round_up(n, m):
    return ((n + m - 1) // m) * m


# ---------------------------------------------------------------------------
# Pallas kernel bodies
# ---------------------------------------------------------------------------
def _im2col_matmul(xt, w_ref, th, wd, cp):
    """xt: (th+2, wd+2, cp) bf16 tile (reflect-padded, with 1-row halos).
    One fused MXU matmul with K = 9*cp; returns (th*wd, cp) f32."""
    cols = [xt[dy:dy + th, dx:dx + wd, :].reshape(th * wd, cp)
            for dy in range(3) for dx in range(3)]
    patches = jnp.concatenate(cols, axis=-1)                  # (th*wd, 9*cp)
    return jnp.dot(patches, w_ref[...], preferred_element_type=jnp.float32)


def _write_conv_outputs(acc, o_ref, stats_ref, th, wd, cp):
    o_ref[...] = acc.reshape(th, wd, cp)
    # Single-pass per-tile, per-channel sum and sum-of-squares while the tile
    # is still resident; finalized into mean/var outside the kernel.
    stats_ref[...] = jnp.concatenate(
        [jnp.sum(acc, axis=0, keepdims=True),
         jnp.sum(acc * acc, axis=0, keepdims=True)], axis=0)


def _conv_stats_kernel(x_ref, w_ref, o_ref, stats_ref):
    th, wd, cp = o_ref.shape
    acc = _im2col_matmul(x_ref[...], w_ref, th, wd, cp)
    _write_conv_outputs(acc, o_ref, stats_ref, th, wd, cp)


def _bn_relu_conv_stats_kernel(h_ref, scale_ref, shift_ref, w_ref, o_ref,
                               stats_ref):
    th, wd, cp = o_ref.shape
    # BN1 (per-channel affine) + ReLU fused into conv2's prologue, in f32;
    # then cast to bf16 only for the MXU matmul.
    h = jnp.maximum(h_ref[...] * scale_ref[...] + shift_ref[...], 0.0)
    acc = _im2col_matmul(h.astype(jnp.bfloat16), w_ref, th, wd, cp)
    _write_conv_outputs(acc, o_ref, stats_ref, th, wd, cp)


def _bn_residual_kernel(h_ref, x_ref, scale_ref, shift_ref, o_ref):
    # BN2 (per-channel affine) + residual add, all in f32.
    o_ref[...] = x_ref[...] + h_ref[...] * scale_ref[...] + shift_ref[...]


# ---------------------------------------------------------------------------
# XLA-side helpers (layout plumbing, halo tiles, BN stat finalization)
# ---------------------------------------------------------------------------
def _reflect_pad_hw(x):
    return jnp.pad(x, ((0, 0), (1, 1), (1, 1), (0, 0)), mode="reflect")


def _halo_row_tiles(xp, tile_h):
    # xp: (B, H+2, W+2, Cp) -> (B, nT, tile_h+2, W+2, Cp) overlapping row tiles
    H = xp.shape[1] - 2
    nT = H // tile_h
    return jnp.stack(
        [xp[:, t * tile_h: t * tile_h + tile_h + 2] for t in range(nT)],
        axis=1)


def _pack_weight(w_pt, Cp):
    # PyTorch Conv2d weight (Cout, Cin, 3, 3) -> (9*Cp, Cp) bf16, zero-padded
    # channels, tap order (dy, dx, cin) matching the im2col concatenation.
    Cout, Cin = w_pt.shape[0], w_pt.shape[1]
    w = jnp.transpose(w_pt, (2, 3, 1, 0))                    # (3, 3, Cin, Cout)
    w = jnp.pad(w, ((0, 0), (0, 0), (0, Cp - Cin), (0, Cp - Cout)))
    return w.reshape(9 * Cp, Cp).astype(jnp.bfloat16)


def _pad_channels(v, Cp, value):
    C = v.shape[-1]
    return jnp.pad(v.reshape(-1), (0, Cp - C), constant_values=value)


def _finalize_stats(stats, gamma_p, beta_p, count):
    # stats: (B, nT, 2, Cp) per-tile (sum, sum_sq) -> per-channel scale/shift
    # for training-mode BatchNorm2d (biased variance, eps=1e-5).
    s = jnp.sum(stats[:, :, 0, :], axis=(0, 1))
    ss = jnp.sum(stats[:, :, 1, :], axis=(0, 1))
    mean = s / count
    var = jnp.maximum(ss / count - mean * mean, 0.0)
    scale = gamma_p * jax.lax.rsqrt(var + EPS)
    shift = beta_p - mean * scale
    return (scale.reshape(1, -1).astype(jnp.float32),
            shift.reshape(1, -1).astype(jnp.float32))


# ---------------------------------------------------------------------------
# pallas_call wrappers
# ---------------------------------------------------------------------------
def _compiler_params():
    return pltpu.CompilerParams(
        dimension_semantics=("parallel", "parallel"),
        vmem_limit_bytes=32 * 1024 * 1024)


def _conv_call(tiles, w_packed, scale_shift=None):
    """tiles: (B, nT, tile_h+2, W+2, Cp). Returns the raw conv output
    (B, H, W, Cp) f32 and per-tile BN partial stats (B, nT, 2, Cp) f32."""
    B, nT, thp2, wp2, Cp = tiles.shape
    tile_h, W = thp2 - 2, wp2 - 2
    H = nT * tile_h

    tile_spec = pl.BlockSpec((None, None, thp2, wp2, Cp),
                             lambda b, t: (b, t, 0, 0, 0))
    w_spec = pl.BlockSpec((9 * Cp, Cp), lambda b, t: (0, 0))
    vec_spec = pl.BlockSpec((1, Cp), lambda b, t: (0, 0))
    out_specs = (
        pl.BlockSpec((None, tile_h, W, Cp), lambda b, t: (b, t, 0, 0)),
        pl.BlockSpec((None, None, 2, Cp), lambda b, t: (b, t, 0, 0)),
    )
    out_shape = (jax.ShapeDtypeStruct((B, H, W, Cp), jnp.float32),
                 jax.ShapeDtypeStruct((B, nT, 2, Cp), jnp.float32))

    flops = 2 * B * H * W * (9 * Cp) * Cp
    bytes_accessed = int(tiles.size * tiles.dtype.itemsize
                         + w_packed.size * 2
                         + B * H * W * Cp * 4
                         + B * nT * 2 * Cp * 4)
    cost = pl.CostEstimate(flops=flops, transcendentals=0,
                           bytes_accessed=bytes_accessed)

    if scale_shift is None:
        return pl.pallas_call(
            _conv_stats_kernel,
            grid=(B, nT),
            in_specs=[tile_spec, w_spec],
            out_specs=out_specs,
            out_shape=out_shape,
            compiler_params=_compiler_params(),
            cost_estimate=cost,
        )(tiles, w_packed)

    scale, shift = scale_shift
    return pl.pallas_call(
        _bn_relu_conv_stats_kernel,
        grid=(B, nT),
        in_specs=[tile_spec, vec_spec, vec_spec, w_spec],
        out_specs=out_specs,
        out_shape=out_shape,
        compiler_params=_compiler_params(),
        cost_estimate=cost,
    )(tiles, scale, shift, w_packed)


def _bn_add_call(h2, x, scale, shift, tile_h):
    B, H, W, Cp = h2.shape
    nT = H // tile_h
    t_spec = lambda: pl.BlockSpec((None, tile_h, W, Cp),
                                  lambda b, t: (b, t, 0, 0))
    vec_spec = pl.BlockSpec((1, Cp), lambda b, t: (0, 0))
    return pl.pallas_call(
        _bn_residual_kernel,
        grid=(B, nT),
        in_specs=[t_spec(), t_spec(), vec_spec, vec_spec],
        out_specs=t_spec(),
        out_shape=jax.ShapeDtypeStruct((B, H, W, Cp), jnp.float32),
        compiler_params=_compiler_params(),
    )(h2, x, scale, shift)


# ---------------------------------------------------------------------------
# Full ResnetBlock forward
# ---------------------------------------------------------------------------
@functools.partial(jax.jit, static_argnames=("tile_h",))
def resnet_block(x_nchw, params, tile_h=8):
    """x_nchw: (B, C, H, W) f32. params = (w1, g1, b1, w2, g2, b2) in PyTorch
    layouts: w*: (C, C, 3, 3), g*/b*: (C,). Returns (B, C, H, W) f32."""
    w1_pt, g1, b1, w2_pt, g2, b2 = params
    B, C, H, W = x_nchw.shape
    assert H % tile_h == 0, "tile_h must divide H"
    Cp = _round_up(C, LANES)
    nT = H // tile_h
    count = B * H * W

    # NCHW -> NHWC, channel-pad to a multiple of 128 (dense lane axis).
    x = jnp.transpose(x_nchw, (0, 2, 3, 1)).astype(jnp.float32)
    if Cp != C:
        x = jnp.pad(x, ((0, 0), (0, 0), (0, 0), (0, Cp - C)))

    w1r = _pack_weight(w1_pt, Cp)
    w2r = _pack_weight(w2_pt, Cp)
    g1p = _pad_channels(g1, Cp, 1.0)
    b1p = _pad_channels(b1, Cp, 0.0)
    g2p = _pad_channels(g2, Cp, 1.0)
    b2p = _pad_channels(b2, Cp, 0.0)

    # --- conv1 (+ per-tile BN1 partial stats); activations fed as bf16 ------
    x_tiles = _halo_row_tiles(_reflect_pad_hw(x), tile_h).astype(jnp.bfloat16)
    h1, st1 = _conv_call(x_tiles, w1r)
    scale1, shift1 = _finalize_stats(st1, g1p, b1p, count)

    # --- BN1 + ReLU fused into conv2 (+ per-tile BN2 partial stats) ---------
    # BN1 is applied in-kernel in f32 on the raw conv1 output tiles; reflect
    # padding / halo construction commutes with the per-channel affine.
    h1_tiles = _halo_row_tiles(_reflect_pad_hw(h1), tile_h)
    h2, st2 = _conv_call(h1_tiles, w2r, scale_shift=(scale1, shift1))
    scale2, shift2 = _finalize_stats(st2, g2p, b2p, count)

    # --- BN2 + residual add --------------------------------------------------
    out = _bn_add_call(h2, x, scale2, shift2, tile_h)

    out = out[..., :C]
    return jnp.transpose(out, (0, 3, 1, 2))


# ---------------------------------------------------------------------------
# Pure-JAX reference (mirrors the kernel's bf16-input / f32-accumulate matmul
# numerics; BN / ReLU / residual in f32) for a tight correctness check.
# ---------------------------------------------------------------------------
def _ref_forward(x_nchw, params):
    x = jnp.transpose(x_nchw, (0, 2, 3, 1)).astype(jnp.float32)
    w1_pt, g1, b1, w2_pt, g2, b2 = params

    def conv(h, w_pt):
        w = jnp.transpose(w_pt, (2, 3, 1, 0)).astype(jnp.bfloat16)
        hp = jnp.pad(h, ((0, 0), (1, 1), (1, 1), (0, 0)),
                     mode="reflect").astype(jnp.bfloat16)
        B, H, W, _ = h.shape
        acc = jnp.zeros((B, H, W, w.shape[-1]), jnp.float32)
        for dy in range(3):
            for dx in range(3):
                acc = acc + jnp.einsum(
                    "bhwc,cd->bhwd", hp[:, dy:dy + H, dx:dx + W, :], w[dy, dx],
                    preferred_element_type=jnp.float32)
        return acc

    def bn(h, g, b):
        mean = jnp.mean(h, axis=(0, 1, 2), keepdims=True)
        var = jnp.mean((h - mean) ** 2, axis=(0, 1, 2), keepdims=True)
        return ((h - mean) * jax.lax.rsqrt(var + EPS) * g.reshape(1, 1, 1, -1)
                + b.reshape(1, 1, 1, -1))

    h = jnp.maximum(bn(conv(x, w1_pt), g1, b1), 0.0)
    h = bn(conv(h, w2_pt), g2, b2)
    return jnp.transpose(x + h, (0, 3, 1, 2))


# ---------------------------------------------------------------------------
# Deterministic parameters (PyTorch layouts: Conv2d (Cout,Cin,3,3), BN (C,)).
# ---------------------------------------------------------------------------
def make_params(key, dim):
    k1, k2 = jax.random.split(key)
    w1 = jax.random.normal(k1, (dim, dim, 3, 3), jnp.float32) * 0.1
    w2 = jax.random.normal(k2, (dim, dim, 3, 3), jnp.float32) * 0.1
    g1 = jnp.ones((dim,), jnp.float32)
    b1 = jnp.zeros((dim,), jnp.float32)
    g2 = jnp.ones((dim,), jnp.float32)
    b2 = jnp.zeros((dim,), jnp.float32)
    return (w1, g1, b1, w2, g2, b2)


if __name__ == "__main__":
    B, C, H, W = 2, 4, 16, 16
    key = jax.random.PRNGKey(0)
    kx, kp = jax.random.split(key)
    x = jax.random.normal(kx, (B, C, H, W), jnp.float32)
    params = make_params(kp, C)

    out = jax.block_until_ready(resnet_block(x, params, tile_h=8))
    ref = jax.block_until_ready(_ref_forward(x, params))

    assert out.shape == (B, C, H, W)
    max_err = float(jnp.max(jnp.abs(out - ref)))
    assert jnp.allclose(out, ref, rtol=1e-3, atol=1e-3), \
        f"mismatch vs reference (max abs err {max_err})"

    print("KERNEL_OK")
</pallas_src>

<mosaic_0001>
module attributes {stable_mosaic.version = 11 : i64} {
  func.func @_conv_stats_kernel(%arg0: i32, %arg1: i32, %arg2: memref<1x1x10x18x128xbf16, #tpu.memory_space<vmem>>, %arg3: memref<1152x128xbf16, #tpu.memory_space<vmem>>, %arg4: memref<1x8x16x128xf32, #tpu.memory_space<vmem>>, %arg5: memref<1x1x2x128xf32, #tpu.memory_space<vmem>>) attributes {dimension_semantics = [#tpu.dimension_semantics<parallel>, #tpu.dimension_semantics<parallel>], iteration_bounds = array<i64: 2, 2>, scalar_prefetch = 0 : i64, scratch_operands = 0 : i64, tpu.core_type = #tpu.core_type<tc>, window_params = [{transform_indices = @transform_0, window_bounds = array<i64: 1, 1, 10, 18, 128>}, {pipeline_mode = #tpu.pipeline_mode<synchronous>, transform_indices = @transform_1, window_bounds = array<i64: 1152, 128>}, {transform_indices = @transform_2, window_bounds = array<i64: 1, 8, 16, 128>}, {transform_indices = @transform_3, window_bounds = array<i64: 1, 1, 2, 128>}]} {
    %c0 = arith.constant 0 : index
    %c0_0 = arith.constant 0 : index
    %c0_1 = arith.constant 0 : index
    %c0_2 = arith.constant 0 : index
    %c0_3 = arith.constant 0 : index
    %0 = vector.load %arg2[%c0, %c0_0, %c0_1, %c0_2, %c0_3] : memref<1x1x10x18x128xbf16, #tpu.memory_space<vmem>>, vector<1x1x10x18x128xbf16>
    %1 = vector.shape_cast %0 : vector<1x1x10x18x128xbf16> to vector<10x18x128xbf16>
    %2 = vector.extract_strided_slice %1 {offsets = [0, 0, 0], sizes = [8, 16, 128], strides = [1, 1, 1]} : vector<10x18x128xbf16> to vector<8x16x128xbf16>
    %3 = vector.shape_cast %2 : vector<8x16x128xbf16> to vector<128x128xbf16>
    %4 = vector.extract_strided_slice %1 {offsets = [0, 1, 0], sizes = [8, 16, 128], strides = [1, 1, 1]} : vector<10x18x128xbf16> to vector<8x16x128xbf16>
    %5 = vector.shape_cast %4 : vector<8x16x128xbf16> to vector<128x128xbf16>
    %6 = vector.extract_strided_slice %1 {offsets = [0, 2, 0], sizes = [8, 16, 128], strides = [1, 1, 1]} : vector<10x18x128xbf16> to vector<8x16x128xbf16>
    %7 = vector.shape_cast %6 : vector<8x16x128xbf16> to vector<128x128xbf16>
    %8 = vector.extract_strided_slice %1 {offsets = [1, 0, 0], sizes = [8, 16, 128], strides = [1, 1, 1]} : vector<10x18x128xbf16> to vector<8x16x128xbf16>
    %9 = vector.shape_cast %8 : vector<8x16x128xbf16> to vector<128x128xbf16>
    %10 = vector.extract_strided_slice %1 {offsets = [1, 1, 0], sizes = [8, 16, 128], strides = [1, 1, 1]} : vector<10x18x128xbf16> to vector<8x16x128xbf16>
    %11 = vector.shape_cast %10 : vector<8x16x128xbf16> to vector<128x128xbf16>
    %12 = vector.extract_strided_slice %1 {offsets = [1, 2, 0], sizes = [8, 16, 128], strides = [1, 1, 1]} : vector<10x18x128xbf16> to vector<8x16x128xbf16>
    %13 = vector.shape_cast %12 : vector<8x16x128xbf16> to vector<128x128xbf16>
    %14 = vector.extract_strided_slice %1 {offsets = [2, 0, 0], sizes = [8, 16, 128], strides = [1, 1, 1]} : vector<10x18x128xbf16> to vector<8x16x128xbf16>
    %15 = vector.shape_cast %14 : vector<8x16x128xbf16> to vector<128x128xbf16>
    %16 = vector.extract_strided_slice %1 {offsets = [2, 1, 0], sizes = [8, 16, 128], strides = [1, 1, 1]} : vector<10x18x128xbf16> to vector<8x16x128xbf16>
    %17 = vector.shape_cast %16 : vector<8x16x128xbf16> to vector<128x128xbf16>
    %18 = vector.extract_strided_slice %1 {offsets = [2, 2, 0], sizes = [8, 16, 128], strides = [1, 1, 1]} : vector<10x18x128xbf16> to vector<8x16x128xbf16>
    %19 = vector.shape_cast %18 : vector<8x16x128xbf16> to vector<128x128xbf16>
    %20 = tpu.concatenate %3, %5, %7, %9, %11, %13, %15, %17, %19 in 1 : vector<128x128xbf16>, vector<128x128xbf16>, vector<128x128xbf16>, vector<128x128xbf16>, vector<128x128xbf16>, vector<128x128xbf16>, vector<128x128xbf16>, vector<128x128xbf16>, vector<128x128xbf16> -> vector<128x1152xbf16>
    %c0_4 = arith.constant 0 : index
    %c0_5 = arith.constant 0 : index
    %21 = vector.load %arg3[%c0_4, %c0_5] : memref<1152x128xbf16, #tpu.memory_space<vmem>>, vector<1152x128xbf16>
    %cst = arith.constant dense<0.000000e+00> : vector<128x128xf32>
    %22 = tpu.matmul %20, %21, %cst {dimension_numbers = #tpu.dot_dimension_numbers<[1], [0], [0], [1], [0, 0, 1, 1], [], []>} : vector<128x1152xbf16>, vector<1152x128xbf16>, vector<128x128xf32> -> vector<128x128xf32>
    %23 = vector.shape_cast %22 : vector<128x128xf32> to vector<8x16x128xf32>
    %c0_6 = arith.constant 0 : index
    %c0_7 = arith.constant 0 : index
    %c0_8 = arith.constant 0 : index
    %c0_9 = arith.constant 0 : index
    %24 = vector.load %arg4[%c0_6, %c0_7, %c0_8, %c0_9] : memref<1x8x16x128xf32, #tpu.memory_space<vmem>>, vector<1x8x16x128xf32>
    %25 = vector.shape_cast %24 : vector<1x8x16x128xf32> to vector<8x16x128xf32>
    %26 = vector.shape_cast %23 : vector<8x16x128xf32> to vector<1x8x16x128xf32>
    tpu.vector_store %arg4[%c0_6, %c0_7, %c0_8, %c0_9], %26 {strides = array<i32>} : memref<1x8x16x128xf32, #tpu.memory_space<vmem>>, vector<1x8x16x128xf32>,
    %cst_10 = arith.constant dense<0.000000e+00> : vector<128xf32>
    %27 = vector.multi_reduction <add>, %22, %cst_10 [0] : vector<128x128xf32> to vector<128xf32>
    %28 = vector.shape_cast %27 : vector<128xf32> to vector<1x128xf32>
    %29 = arith.mulf %22, %22 : vector<128x128xf32>
    %cst_11 = arith.constant dense<0.000000e+00> : vector<128xf32>
    %30 = vector.multi_reduction <add>, %29, %cst_11 [0] : vector<128x128xf32> to vector<128xf32>
    %31 = vector.shape_cast %30 : vector<128xf32> to vector<1x128xf32>
    %32 = tpu.concatenate %28, %31 in 0 : vector<1x128xf32>, vector<1x128xf32> -> vector<2x128xf32>
    %c0_12 = arith.constant 0 : index
    %c0_13 = arith.constant 0 : index
    %c0_14 = arith.constant 0 : index
    %c0_15 = arith.constant 0 : index
    %33 = vector.load %arg5[%c0_12, %c0_13, %c0_14, %c0_15] : memref<1x1x2x128xf32, #tpu.memory_space<vmem>>, vector<1x1x2x128xf32>
    %34 = vector.shape_cast %33 : vector<1x1x2x128xf32> to vector<2x128xf32>
    %35 = vector.shape_cast %32 : vector<2x128xf32> to vector<1x1x2x128xf32>
    tpu.vector_store %arg5[%c0_12, %c0_13, %c0_14, %c0_15], %35 {strides = array<i32>} : memref<1x1x2x128xf32, #tpu.memory_space<vmem>>, vector<1x1x2x128xf32>,
    return
  }
  func.func @transform_0(%arg0: i32, %arg1: i32) -> (i32, i32, i32, i32, i32) {
    %c0_i32 = arith.constant 0 : i32
    %c0_i32_0 = arith.constant 0 : i32
    %c0_i32_1 = arith.constant 0 : i32
    %c0_i32_2 = arith.constant 0 : i32
    return %arg0, %arg1, %c0_i32, %c0_i32_0, %c0_i32_1 : i32, i32, i32, i32, i32
  }
  func.func @transform_1(%arg0: i32, %arg1: i32) -> (i32, i32) {
    %c0_i32 = arith.constant 0 : i32
    %c0_i32_0 = arith.constant 0 : i32
    %c0_i32_1 = arith.constant 0 : i32
    return %c0_i32, %c0_i32_0 : i32, i32
  }
  func.func @transform_2(%arg0: i32, %arg1: i32) -> (i32, i32, i32, i32) {
    %c0_i32 = arith.constant 0 : i32
    %c0_i32_0 = arith.constant 0 : i32
    %c0_i32_1 = arith.constant 0 : i32
    return %arg0, %arg1, %c0_i32, %c0_i32_0 : i32, i32, i32, i32
  }
  func.func @transform_3(%arg0: i32, %arg1: i32) -> (i32, i32, i32, i32) {
    %c0_i32 = arith.constant 0 : i32
    %c0_i32_0 = arith.constant 0 : i32
    %c0_i32_1 = arith.constant 0 : i32
    return %arg0, %arg1, %c0_i32, %c0_i32_0 : i32, i32, i32, i32
  }
}

module attributes {stable_mosaic.version = 11 : i64} {
  func.func @_bn_residual_kernel(%arg0: i32, %arg1: i32, %arg2: memref<1x8x16x128xf32, #tpu.memory_space<vmem>>, %arg3: memref<1x8x16x128xf32, #tpu.memory_space<vmem>>, %arg4: memref<1x128xf32, #tpu.memory_space<vmem>>, %arg5: memref<1x128xf32, #tpu.memory_space<vmem>>, %arg6: memref<1x8x16x128xf32, #tpu.memory_space<vmem>>) attributes {dimension_semantics = [#tpu.dimension_semantics<parallel>, #tpu.dimension_semantics<parallel>], iteration_bounds = array<i64: 2, 2>, scalar_prefetch = 0 : i64, scratch_operands = 0 : i64, tpu.core_type = #tpu.core_type<tc>, window_params = [{transform_indices = @transform_0, window_bounds = array<i64: 1, 8, 16, 128>}, {transform_indices = @transform_1, window_bounds = array<i64: 1, 8, 16, 128>}, {pipeline_mode = #tpu.pipeline_mode<synchronous>, transform_indices = @transform_2, window_bounds = array<i64: 1, 128>}, {pipeline_mode = #tpu.pipeline_mode<synchronous>, transform_indices = @transform_3, window_bounds = array<i64: 1, 128>}, {transform_indices = @transform_4, window_bounds = array<i64: 1, 8, 16, 128>}]} {
    %c0 = arith.constant 0 : index
    %c0_0 = arith.constant 0 : index
    %c0_1 = arith.constant 0 : index
    %c0_2 = arith.constant 0 : index
    %0 = vector.load %arg3[%c0, %c0_0, %c0_1, %c0_2] : memref<1x8x16x128xf32, #tpu.memory_space<vmem>>, vector<1x8x16x128xf32>
    %1 = vector.shape_cast %0 : vector<1x8x16x128xf32> to vector<8x16x128xf32>
    %c0_3 = arith.constant 0 : index
    %c0_4 = arith.constant 0 : index
    %c0_5 = arith.constant 0 : index
    %c0_6 = arith.constant 0 : index
    %2 = vector.load %arg2[%c0_3, %c0_4, %c0_5, %c0_6] : memref<1x8x16x128xf32, #tpu.memory_space<vmem>>, vector<1x8x16x128xf32>
    %3 = vector.shape_cast %2 : vector<1x8x16x128xf32> to vector<8x16x128xf32>
    %c0_7 = arith.constant 0 : index
    %c0_8 = arith.constant 0 : index
    %4 = vector.load %arg4[%c0_7, %c0_8] : memref<1x128xf32, #tpu.memory_space<vmem>>, vector<1x128xf32>
    %5 = vector.shape_cast %4 : vector<1x128xf32> to vector<1x1x128xf32>
    %6 = vector.broadcast %5 : vector<1x1x128xf32> to vector<8x16x128xf32>
    %7 = arith.mulf %3, %6 : vector<8x16x128xf32>
    %8 = arith.addf %1, %7 : vector<8x16x128xf32>
    %c0_9 = arith.constant 0 : index
    %c0_10 = arith.constant 0 : index
    %9 = vector.load %arg5[%c0_9, %c0_10] : memref<1x128xf32, #tpu.memory_space<vmem>>, vector<1x128xf32>
    %10 = vector.shape_cast %9 : vector<1x128xf32> to vector<1x1x128xf32>
    %11 = vector.broadcast %10 : vector<1x1x128xf32> to vector<8x16x128xf32>
    %12 = arith.addf %8, %11 : vector<8x16x128xf32>
    %c0_11 = arith.constant 0 : index
    %c0_12 = arith.constant 0 : index
    %c0_13 = arith.constant 0 : index
    %c0_14 = arith.constant 0 : index
    %13 = vector.load %arg6[%c0_11, %c0_12, %c0_13, %c0_14] : memref<1x8x16x128xf32, #tpu.memory_space<vmem>>, vector<1x8x16x128xf32>
    %14 = vector.shape_cast %13 : vector<1x8x16x128xf32> to vector<8x16x128xf32>
    %15 = vector.shape_cast %12 : vector<8x16x128xf32> to vector<1x8x16x128xf32>
    tpu.vector_store %arg6[%c0_11, %c0_12, %c0_13, %c0_14], %15 {strides = array<i32>} : memref<1x8x16x128xf32, #tpu.memory_space<vmem>>, vector<1x8x16x128xf32>,
    return
  }
  func.func @transform_0(%arg0: i32, %arg1: i32) -> (i32, i32, i32, i32) {
    %c0_i32 = arith.constant 0 : i32
    %c0_i32_0 = arith.constant 0 : i32
    %c0_i32_1 = arith.constant 0 : i32
    return %arg0, %arg1, %c0_i32, %c0_i32_0 : i32, i32, i32, i32
  }
  func.func @transform_1(%arg0: i32, %arg1: i32) -> (i32, i32, i32, i32) {
    %c0_i32 = arith.constant 0 : i32
    %c0_i32_0 = arith.constant 0 : i32
    %c0_i32_1 = arith.constant 0 : i32
    return %arg0, %arg1, %c0_i32, %c0_i32_0 : i32, i32, i32, i32
  }
  func.func @transform_2(%arg0: i32, %arg1: i32) -> (i32, i32) {
    %c0_i32 = arith.constant 0 : i32
    %c0_i32_0 = arith.constant 0 : i32
    %c0_i32_1 = arith.constant 0 : i32
    return %c0_i32, %c0_i32_0 : i32, i32
  }
  func.func @transform_3(%arg0: i32, %arg1: i32) -> (i32, i32) {
    %c0_i32 = arith.constant 0 : i32
    %c0_i32_0 = arith.constant 0 : i32
    %c0_i32_1 = arith.constant 0 : i32
    return %c0_i32, %c0_i32_0 : i32, i32
  }
  func.func @transform_4(%arg0: i32, %arg1: i32) -> (i32, i32, i32, i32) {
    %c0_i32 = arith.constant 0 : i32
    %c0_i32_0 = arith.constant 0 : i32
    %c0_i32_1 = arith.constant 0 : i32
    return %arg0, %arg1, %c0_i32, %c0_i32_0 : i32, i32, i32, i32
  }
}

module attributes {stable_mosaic.version = 11 : i64} {
  func.func @_bn_relu_conv_stats_kernel(%arg0: i32, %arg1: i32, %arg2: memref<1x1x10x18x128xf32, #tpu.memory_space<vmem>>, %arg3: memref<1x128xf32, #tpu.memory_space<vmem>>, %arg4: memref<1x128xf32, #tpu.memory_space<vmem>>, %arg5: memref<1152x128xbf16, #tpu.memory_space<vmem>>, %arg6: memref<1x8x16x128xf32, #tpu.memory_space<vmem>>, %arg7: memref<1x1x2x128xf32, #tpu.memory_space<vmem>>) attributes {dimension_semantics = [#tpu.dimension_semantics<parallel>, #tpu.dimension_semantics<parallel>], iteration_bounds = array<i64: 2, 2>, scalar_prefetch = 0 : i64, scratch_operands = 0 : i64, tpu.core_type = #tpu.core_type<tc>, window_params = [{transform_indices = @transform_0, window_bounds = array<i64: 1, 1, 10, 18, 128>}, {pipeline_mode = #tpu.pipeline_mode<synchronous>, transform_indices = @transform_1, window_bounds = array<i64: 1, 128>}, {pipeline_mode = #tpu.pipeline_mode<synchronous>, transform_indices = @transform_2, window_bounds = array<i64: 1, 128>}, {pipeline_mode = #tpu.pipeline_mode<synchronous>, transform_indices = @transform_3, window_bounds = array<i64: 1152, 128>}, {transform_indices = @transform_4, window_bounds = array<i64: 1, 8, 16, 128>}, {transform_indices = @transform_5, window_bounds = array<i64: 1, 1, 2, 128>}]} {
    %c0 = arith.constant 0 : index
    %c0_0 = arith.constant 0 : index
    %c0_1 = arith.constant 0 : index
    %c0_2 = arith.constant 0 : index
    %c0_3 = arith.constant 0 : index
    %0 = vector.load %arg2[%c0, %c0_0, %c0_1, %c0_2, %c0_3] : memref<1x1x10x18x128xf32, #tpu.memory_space<vmem>>, vector<1x1x10x18x128xf32>
    %1 = vector.shape_cast %0 : vector<1x1x10x18x128xf32> to vector<10x18x128xf32>
    %c0_4 = arith.constant 0 : index
    %c0_5 = arith.constant 0 : index
    %2 = vector.load %arg3[%c0_4, %c0_5] : memref<1x128xf32, #tpu.memory_space<vmem>>, vector<1x128xf32>
    %3 = vector.shape_cast %2 : vector<1x128xf32> to vector<1x1x128xf32>
    %4 = vector.broadcast %3 : vector<1x1x128xf32> to vector<10x18x128xf32>
    %5 = arith.mulf %1, %4 : vector<10x18x128xf32>
    %c0_6 = arith.constant 0 : index
    %c0_7 = arith.constant 0 : index
    %6 = vector.load %arg4[%c0_6, %c0_7] : memref<1x128xf32, #tpu.memory_space<vmem>>, vector<1x128xf32>
    %7 = vector.shape_cast %6 : vector<1x128xf32> to vector<1x1x128xf32>
    %8 = vector.broadcast %7 : vector<1x1x128xf32> to vector<10x18x128xf32>
    %9 = arith.addf %5, %8 : vector<10x18x128xf32>
    %cst = arith.constant 0.000000e+00 : f32
    %10 = vector.broadcast %cst : f32 to vector<10x18x128xf32>
    %11 = arith.maximumf %9, %10 : vector<10x18x128xf32>
    %12 = arith.truncf %11 : vector<10x18x128xf32> to vector<10x18x128xbf16>
    %13 = vector.extract_strided_slice %12 {offsets = [0, 0, 0], sizes = [8, 16, 128], strides = [1, 1, 1]} : vector<10x18x128xbf16> to vector<8x16x128xbf16>
    %14 = vector.shape_cast %13 : vector<8x16x128xbf16> to vector<128x128xbf16>
    %15 = vector.extract_strided_slice %12 {offsets = [0, 1, 0], sizes = [8, 16, 128], strides = [1, 1, 1]} : vector<10x18x128xbf16> to vector<8x16x128xbf16>
    %16 = vector.shape_cast %15 : vector<8x16x128xbf16> to vector<128x128xbf16>
    %17 = vector.extract_strided_slice %12 {offsets = [0, 2, 0], sizes = [8, 16, 128], strides = [1, 1, 1]} : vector<10x18x128xbf16> to vector<8x16x128xbf16>
    %18 = vector.shape_cast %17 : vector<8x16x128xbf16> to vector<128x128xbf16>
    %19 = vector.extract_strided_slice %12 {offsets = [1, 0, 0], sizes = [8, 16, 128], strides = [1, 1, 1]} : vector<10x18x128xbf16> to vector<8x16x128xbf16>
    %20 = vector.shape_cast %19 : vector<8x16x128xbf16> to vector<128x128xbf16>
    %21 = vector.extract_strided_slice %12 {offsets = [1, 1, 0], sizes = [8, 16, 128], strides = [1, 1, 1]} : vector<10x18x128xbf16> to vector<8x16x128xbf16>
    %22 = vector.shape_cast %21 : vector<8x16x128xbf16> to vector<128x128xbf16>
    %23 = vector.extract_strided_slice %12 {offsets = [1, 2, 0], sizes = [8, 16, 128], strides = [1, 1, 1]} : vector<10x18x128xbf16> to vector<8x16x128xbf16>
    %24 = vector.shape_cast %23 : vector<8x16x128xbf16> to vector<128x128xbf16>
    %25 = vector.extract_strided_slice %12 {offsets = [2, 0, 0], sizes = [8, 16, 128], strides = [1, 1, 1]} : vector<10x18x128xbf16> to vector<8x16x128xbf16>
    %26 = vector.shape_cast %25 : vector<8x16x128xbf16> to vector<128x128xbf16>
    %27 = vector.extract_strided_slice %12 {offsets = [2, 1, 0], sizes = [8, 16, 128], strides = [1, 1, 1]} : vector<10x18x128xbf16> to vector<8x16x128xbf16>
    %28 = vector.shape_cast %27 : vector<8x16x128xbf16> to vector<128x128xbf16>
    %29 = vector.extract_strided_slice %12 {offsets = [2, 2, 0], sizes = [8, 16, 128], strides = [1, 1, 1]} : vector<10x18x128xbf16> to vector<8x16x128xbf16>
    %30 = vector.shape_cast %29 : vector<8x16x128xbf16> to vector<128x128xbf16>
    %31 = tpu.concatenate %14, %16, %18, %20, %22, %24, %26, %28, %30 in 1 : vector<128x128xbf16>, vector<128x128xbf16>, vector<128x128xbf16>, vector<128x128xbf16>, vector<128x128xbf16>, vector<128x128xbf16>, vector<128x128xbf16>, vector<128x128xbf16>, vector<128x128xbf16> -> vector<128x1152xbf16>
    %c0_8 = arith.constant 0 : index
    %c0_9 = arith.constant 0 : index
    %32 = vector.load %arg5[%c0_8, %c0_9] : memref<1152x128xbf16, #tpu.memory_space<vmem>>, vector<1152x128xbf16>
    %cst_10 = arith.constant dense<0.000000e+00> : vector<128x128xf32>
    %33 = tpu.matmul %31, %32, %cst_10 {dimension_numbers = #tpu.dot_dimension_numbers<[1], [0], [0], [1], [0, 0, 1, 1], [], []>} : vector<128x1152xbf16>, vector<1152x128xbf16>, vector<128x128xf32> -> vector<128x128xf32>
    %34 = vector.shape_cast %33 : vector<128x128xf32> to vector<8x16x128xf32>
    %c0_11 = arith.constant 0 : index
    %c0_12 = arith.constant 0 : index
    %c0_13 = arith.constant 0 : index
    %c0_14 = arith.constant 0 : index
    %35 = vector.load %arg6[%c0_11, %c0_12, %c0_13, %c0_14] : memref<1x8x16x128xf32, #tpu.memory_space<vmem>>, vector<1x8x16x128xf32>
    %36 = vector.shape_cast %35 : vector<1x8x16x128xf32> to vector<8x16x128xf32>
    %37 = vector.shape_cast %34 : vector<8x16x128xf32> to vector<1x8x16x128xf32>
    tpu.vector_store %arg6[%c0_11, %c0_12, %c0_13, %c0_14], %37 {strides = array<i32>} : memref<1x8x16x128xf32, #tpu.memory_space<vmem>>, vector<1x8x16x128xf32>,
    %cst_15 = arith.constant dense<0.000000e+00> : vector<128xf32>
    %38 = vector.multi_reduction <add>, %33, %cst_15 [0] : vector<128x128xf32> to vector<128xf32>
    %39 = vector.shape_cast %38 : vector<128xf32> to vector<1x128xf32>
    %40 = arith.mulf %33, %33 : vector<128x128xf32>
    %cst_16 = arith.constant dense<0.000000e+00> : vector<128xf32>
    %41 = vector.multi_reduction <add>, %40, %cst_16 [0] : vector<128x128xf32> to vector<128xf32>
    %42 = vector.shape_cast %41 : vector<128xf32> to vector<1x128xf32>
    %43 = tpu.concatenate %39, %42 in 0 : vector<1x128xf32>, vector<1x128xf32> -> vector<2x128xf32>
    %c0_17 = arith.constant 0 : index
    %c0_18 = arith.constant 0 : index
    %c0_19 = arith.constant 0 : index
    %c0_20 = arith.constant 0 : index
    %44 = vector.load %arg7[%c0_17, %c0_18, %c0_19, %c0_20] : memref<1x1x2x128xf32, #tpu.memory_space<vmem>>, vector<1x1x2x128xf32>
    %45 = vector.shape_cast %44 : vector<1x1x2x128xf32> to vector<2x128xf32>
    %46 = vector.shape_cast %43 : vector<2x128xf32> to vector<1x1x2x128xf32>
    tpu.vector_store %arg7[%c0_17, %c0_18, %c0_19, %c0_20], %46 {strides = array<i32>} : memref<1x1x2x128xf32, #tpu.memory_space<vmem>>, vector<1x1x2x128xf32>,
    return
  }
  func.func @transform_0(%arg0: i32, %arg1: i32) -> (i32, i32, i32, i32, i32) {
    %c0_i32 = arith.constant 0 : i32
    %c0_i32_0 = arith.constant 0 : i32
    %c0_i32_1 = arith.constant 0 : i32
    %c0_i32_2 = arith.constant 0 : i32
    return %arg0, %arg1, %c0_i32, %c0_i32_0, %c0_i32_1 : i32, i32, i32, i32, i32
  }
  func.func @transform_1(%arg0: i32, %arg1: i32) -> (i32, i32) {
    %c0_i32 = arith.constant 0 : i32
    %c0_i32_0 = arith.constant 0 : i32
    %c0_i32_1 = arith.constant 0 : i32
    return %c0_i32, %c0_i32_0 : i32, i32
  }
  func.func @transform_2(%arg0: i32, %arg1: i32) -> (i32, i32) {
    %c0_i32 = arith.constant 0 : i32
    %c0_i32_0 = arith.constant 0 : i32
    %c0_i32_1 = arith.constant 0 : i32
    return %c0_i32, %c0_i32_0 : i32, i32
  }
  func.func @transform_3(%arg0: i32, %arg1: i32) -> (i32, i32) {
    %c0_i32 = arith.constant 0 : i32
    %c0_i32_0 = arith.constant 0 : i32
    %c0_i32_1 = arith.constant 0 : i32
    return %c0_i32, %c0_i32_0 : i32, i32
  }
  func.func @transform_4(%arg0: i32, %arg1: i32) -> (i32, i32, i32, i32) {
    %c0_i32 = arith.constant 0 : i32
    %c0_i32_0 = arith.constant 0 : i32
    %c0_i32_1 = arith.constant 0 : i32
    return %arg0, %arg1, %c0_i32, %c0_i32_0 : i32, i32, i32, i32
  }
  func.func @transform_5(%arg0: i32, %arg1: i32) -> (i32, i32, i32, i32) {
    %c0_i32 = arith.constant 0 : i32
    %c0_i32_0 = arith.constant 0 : i32
    %c0_i32_1 = arith.constant 0 : i32
    return %arg0, %arg1, %c0_i32, %c0_i32_0 : i32, i32, i32, i32
  }
}

</mosaic_0001>

<llo_original>
// kernel: resnet_block.5
$region0: #{resnet_block.5}
  #allocation0 [shape = 'u32[]', space=smem, size = 0x4, offset = 0x4, fixed_abs, tag = 'smem constant byte address 0x4 - core index']
  #allocation1 [shape = 'u32[144,128]{1,0:T(1,128)}', space=vmem, size = 0x12000, scoped, tag = 'internal scratch']
  %s0 = inlined_call_operand.vmem [shape: f32[2,16,16,128], index: 0, kind: input, shape index: {}]
  %s1 = inlined_call_operand.vmem [shape: f32[2,16,16,128], index: 1, kind: input, shape index: {}]
  %s2 = inlined_call_operand.vmem [shape: f32[1,128], index: 2, kind: input, shape index: {}]
  %s3 = inlined_call_operand.vmem [shape: f32[1,128], index: 3, kind: input, shape index: {}]
  %s4 = inlined_call_operand.vmem [shape: f32[2,16,16,128], index: 4, kind: output, shape index: {}]
  %s5 = sld [smem:[#allocation0]]
  $region49: #{resnet_block.5} parent=0
    _
  %s7 = ssub.s32 1, %s5
  %s8 = scalar_select 0, %s7, %s5
  loop: start=0, step=1, limit=6
  $region2: #{resnet_block.5} parent=0 // loop_pre_header
    _
  $region3: #{resnet_block.5} parent=0 // loop_header
    %s10 = sphi 0, %s14
    %p11 = scmp.ge.s32.totalorder %s10, 6
    %s17 = sphi 0, %s29
    %s18 = sphi 0, %s25
    %s19 = sphi 0, %s17
    %s20 = sphi 0, %s18
    %s21 = sphi 0, %s19
    %s22 = sphi 0, %s20
    %s34 = sphi 0, %s36
    %s37 = sphi 0, %s34
    %s38 = sphi 0, %s37
    %s54 = sphi 0, %s38
    %s62 = sphi 0, %s64
    %s65 = sphi 0, %s62
    %s66 = sphi 0, %s65
    %s82 = sphi 0, %s66
    %s86 = sphi 0, %s86
    %s88 = sphi 0, %s86
    %s89 = sphi 0, %s88
    %s103 = sphi 0, %s89
    %s107 = sphi 0, %s107
    %s109 = sphi 0, %s107
    %s110 = sphi 0, %s109
    %s124 = sphi 0, %s110
    %s132 = sphi 0, %s134
    %s135 = sphi 0, %s132
    %s136 = sphi 0, %s135
    %s152 = sphi 0, %s136
  $region4: #{resnet_block.5} parent=0 // loop_header_branch
    %13 = sbr.rel (%p11) target = $region8
  $region5: #{resnet_block.5} parent=0 // loop_body
    %s15 = ssub.s32 %s10, 1
    %s16 = ssub.s32 %s10, 2
    %s23 = sadd.s32 1, %s18
    %p24 = scmp.ge.s32.totalorder %s23, 2
    %s25 = scalar_select %p24, 0, %s23
    %s26 = sadd.s32 1, %s17
    %s27 = scalar_select %p24, %s26, %s17
    %p28 = scmp.ge.s32.totalorder %s27, 2
    %s29 = scalar_select %p28, 0, %s27
    %s30 = ssub.s32 %s17, %s29
    %s31 = ssub.s32 %s18, %s25
    %s32 = sor.u32 %s30, %s31
    %p33 = scmp.eq.s32.totalorder %s32, 0
    %s35 = sadd.s32 %s34, 1
    %s36 = scalar_select %p33, %s34, %s35
    %p39 = pneg %p33
    %p40 = scmp.eq.s32.totalorder %s10, 3
    %p41 = por %p39, %p40
    %p42 = scmp.ne.s32.totalorder %s34, %s37
    %p43 = scmp.eq.s32.totalorder %s10, 0
    %p44 = por %p42, %p43
    %p45 = scmp.ne.s32.totalorder %s34, %s37
    %p46 = scmp.eq.s32.totalorder %s15, 3
    %p47 = por %p45, %p46
    %p48 = scmp.ne.s32.totalorder %s37, %s38
    %p49 = scmp.eq.s32.totalorder %s15, 0
    %p50 = por %p48, %p49
    %p51 = scmp.ne.s32.totalorder %s37, %s38
    %p52 = scmp.eq.s32.totalorder %s16, 3
    %p53 = por %p51, %p52
    %p55 = scmp.ne.s32.totalorder %s38, %s54
    %p56 = scmp.eq.s32.totalorder %s16, 0
    %p57 = por %p55, %p56
    %s58 = ssub.s32 %s17, %s29
    %s59 = ssub.s32 %s18, %s25
    %s60 = sor.u32 %s58, %s59
    %p61 = scmp.eq.s32.totalorder %s60, 0
    %s63 = sadd.s32 %s62, 1
    %s64 = scalar_select %p61, %s62, %s63
    %p67 = pneg %p61
    %p68 = scmp.eq.s32.totalorder %s10, 3
    %p69 = por %p67, %p68
    %p70 = scmp.ne.s32.totalorder %s62, %s65
    %p71 = scmp.eq.s32.totalorder %s10, 0
    %p72 = por %p70, %p71
    %p73 = scmp.ne.s32.totalorder %s62, %s65
    %p74 = scmp.eq.s32.totalorder %s15, 3
    %p75 = por %p73, %p74
    %p76 = scmp.ne.s32.totalorder %s65, %s66
    %p77 = scmp.eq.s32.totalorder %s15, 0
    %p78 = por %p76, %p77
    %p79 = scmp.ne.s32.totalorder %s65, %s66
    %p80 = scmp.eq.s32.totalorder %s16, 3
    %p81 = por %p79, %p80
    %p83 = scmp.ne.s32.totalorder %s66, %s82
    %p84 = scmp.eq.s32.totalorder %s16, 0
    %p85 = por %p83, %p84
    %s87 = sadd.s32 %s86, 1
    %p90 = scmp.eq.s32.totalorder %s10, 3
    %p91 = scmp.ne.s32.totalorder %s86, %s88
    %p92 = scmp.eq.s32.totalorder %s10, 0
    %p93 = por %p91, %p92
    %p94 = scmp.ne.s32.totalorder %s86, %s88
    %p95 = scmp.eq.s32.totalorder %s15, 3
    %p96 = por %p94, %p95
    %p97 = scmp.ne.s32.totalorder %s88, %s89
    %p98 = scmp.eq.s32.totalorder %s15, 0
    %p99 = por %p97, %p98
    %p100 = scmp.ne.s32.totalorder %s88, %s89
    %p101 = scmp.eq.s32.totalorder %s16, 3
    %p102 = por %p100, %p101
    %p104 = scmp.ne.s32.totalorder %s89, %s103
    %p105 = scmp.eq.s32.totalorder %s16, 0
    %p106 = por %p104, %p105
    %s108 = sadd.s32 %s107, 1
    %p111 = scmp.eq.s32.totalorder %s10, 3
    %p112 = scmp.ne.s32.totalorder %s107, %s109
    %p113 = scmp.eq.s32.totalorder %s10, 0
    %p114 = por %p112, %p113
    %p115 = scmp.ne.s32.totalorder %s107, %s109
    %p116 = scmp.eq.s32.totalorder %s15, 3
    %p117 = por %p115, %p116
    %p118 = scmp.ne.s32.totalorder %s109, %s110
    %p119 = scmp.eq.s32.totalorder %s15, 0
    %p120 = por %p118, %p119
    %p121 = scmp.ne.s32.totalorder %s109, %s110
    %p122 = scmp.eq.s32.totalorder %s16, 3
    %p123 = por %p121, %p122
    %p125 = scmp.ne.s32.totalorder %s110, %s124
    %p126 = scmp.eq.s32.totalorder %s16, 0
    %p127 = por %p125, %p126
    %s128 = ssub.s32 %s17, %s29
    %s129 = ssub.s32 %s18, %s25
    %s130 = sor.u32 %s128, %s129
    %p131 = scmp.eq.s32.totalorder %s130, 0
    %s133 = sadd.s32 %s132, 1
    %s134 = scalar_select %p131, %s132, %s133
    %p137 = pneg %p131
    %p138 = scmp.eq.s32.totalorder %s10, 3
    %p139 = por %p137, %p138
    %p140 = scmp.ne.s32.totalorder %s132, %s135
    %p141 = scmp.eq.s32.totalorder %s10, 0
    %p142 = por %p140, %p141
    %p143 = scmp.ne.s32.totalorder %s132, %s135
    %p144 = scmp.eq.s32.totalorder %s15, 3
    %p145 = por %p143, %p144
    %p146 = scmp.ne.s32.totalorder %s135, %s136
    %p147 = scmp.eq.s32.totalorder %s15, 0
    %p148 = por %p146, %p147
    %p149 = scmp.ne.s32.totalorder %s135, %s136
    %p150 = scmp.eq.s32.totalorder %s16, 3
    %p151 = por %p149, %p150
    %p153 = scmp.ne.s32.totalorder %s136, %s152
    %p154 = scmp.eq.s32.totalorder %s16, 0
    %p155 = por %p153, %p154
    %p156 = scmp.le.s32.totalorder 1, %s10
    %p157 = scmp.lt.s32.totalorder %s10, 5
    %p158 = pnand %p156, %p157
    %p159 = pneg %p158
    // Predicated region
    $region9: #{resnet_block.5} parent=5 // pred_check
      _
    $region10: #{resnet_block.5} parent=5 // pred_check_branch
      %161 = sbr.rel (%p158) target = $region12
    $region11: #{resnet_block.5} parent=5 // pred_region
      %s162 = ssub.s32 %s10, 1
      // Predicated region
      $region13: #{resnet_block.5} parent=11 // pred_check
        %p163 = pneg %p99
      $region14: #{resnet_block.5} parent=11 // pred_check_branch
        %165 = sbr.rel (%p163) target = $region16
      $region15: #{resnet_block.5} parent=11 // pred_region
        _
      $region16: #{resnet_block.5} parent=11 // pred_fallthru
        _
      // Predicated region
      $region17: #{resnet_block.5} parent=11 // pred_check
        %p166 = pneg %p120
      $region18: #{resnet_block.5} parent=11 // pred_check_branch
        %168 = sbr.rel (%p166) target = $region20
      $region19: #{resnet_block.5} parent=11 // pred_region
        _
      $region20: #{resnet_block.5} parent=11 // pred_fallthru
        _
    $region12: #{resnet_block.5} parent=5 // pred_fallthru
      _
    %p169 = scmp.lt.s32.totalorder %s10, 4
    // Predicated region
    $region21: #{resnet_block.5} parent=5 // pred_check
      %p170 = pneg %p169
    $region22: #{resnet_block.5} parent=5 // pred_check_branch
      %172 = sbr.rel (%p170) target = $region24
    $region23: #{resnet_block.5} parent=5 // pred_region
      // Predicated region
      $region25: #{resnet_block.5} parent=23 // pred_check
        %p173 = pneg %p44
      $region26: #{resnet_block.5} parent=23 // pred_check_branch
        %175 = sbr.rel (%p173) target = $region28
      $region27: #{resnet_block.5} parent=23 // pred_region
        %s176 = smul.u32 8, %s18
        %p177 = scmp.lt.s32.totalorder %s17, 1
        %s178 = scalar_select %p177, %s17, 1
        %p179 = scmp.lt.s32.totalorder %s176, 15
        %s180 = scalar_select %p179, %s176, 15
        %s181 = smul.addr %s180, 2
        %s182 = smul.addr %s178, 32
        %s183 = sadd.s32 %s181, %s182
        %s184 = smul.addr %s183, 8
        %s185 = scalar_lea.vmem %s0, %s184
        %s186 = smul.u32 8, %s18
      $region28: #{resnet_block.5} parent=23 // pred_fallthru
        _
      // Predicated region
      $region29: #{resnet_block.5} parent=23 // pred_check
        %p187 = pneg %p72
      $region30: #{resnet_block.5} parent=23 // pred_check_branch
        %189 = sbr.rel (%p187) target = $region32
      $region31: #{resnet_block.5} parent=23 // pred_region
        %s190 = smul.u32 8, %s18
        %p191 = scmp.lt.s32.totalorder %s17, 1
        %s192 = scalar_select %p191, %s17, 1
        %p193 = scmp.lt.s32.totalorder %s190, 15
        %s194 = scalar_select %p193, %s190, 15
        %s195 = smul.addr %s194, 2
        %s196 = smul.addr %s192, 32
        %s197 = sadd.s32 %s195, %s196
        %s198 = smul.addr %s197, 8
        %s199 = scalar_lea.vmem %s1, %s198
        %s200 = smul.u32 8, %s18
      $region32: #{resnet_block.5} parent=23 // pred_fallthru
        _
    $region24: #{resnet_block.5} parent=5 // pred_fallthru
      _
    %p201 = scmp.le.s32.totalorder 1, %s10
    %p202 = scmp.lt.s32.totalorder %s10, 5
    %p203 = pnand %p201, %p202
    %p204 = pneg %p203
    // Predicated region
    $region33: #{resnet_block.5} parent=5 // pred_check
      _
    $region34: #{resnet_block.5} parent=5 // pred_check_branch
      %206 = sbr.rel (%p203) target = $region36
    $region35: #{resnet_block.5} parent=5 // pred_region
      %s207 = ssub.s32 %s10, 1
      %s208 = smul.u32 8, %s20
      %p209 = scmp.lt.s32.totalorder %s19, 1
      %s210 = scalar_select %p209, %s19, 1
      %p211 = scmp.lt.s32.totalorder %s208, 15
      %s212 = scalar_select %p211, %s208, 15
      %s213 = smul.addr %s212, 2
      %s214 = smul.addr %s210, 32
      %s215 = sadd.s32 %s213, %s214
      %s216 = smul.addr %s215, 8
      %s217 = scalar_lea.vmem %s0, %s216
      %p218 = pneg %p50
      %p219 = pneg %p47
      %s220 = smul.u32 8, %s20
      %p221 = scmp.lt.s32.totalorder %s19, 1
      %s222 = scalar_select %p221, %s19, 1
      %p223 = scmp.lt.s32.totalorder %s220, 15
      %s224 = scalar_select %p223, %s220, 15
      %s225 = smul.addr %s224, 2
      %s226 = smul.addr %s222, 32
      %s227 = sadd.s32 %s225, %s226
      %s228 = smul.addr %s227, 8
      %s229 = scalar_lea.vmem %s1, %s228
      %p230 = pneg %p78
      %p231 = pneg %p75
      %p232 = pneg %p99
      %p233 = pneg %p96
      %p234 = pneg %p120
      %p235 = pneg %p117
      %p236 = pneg %p148
      %p237 = pneg %p145
      %s238 = smul.u32 8, %s20
      %p239 = scmp.lt.s32.totalorder %s19, 1
      %s240 = scalar_select %p239, %s19, 1
      %p241 = scmp.lt.s32.totalorder %s238, 15
      %s242 = scalar_select %p241, %s238, 15
      %s243 = smul.addr %s242, 2
      %s244 = smul.addr %s240, 32
      %s245 = sadd.s32 %s243, %s244
      %s246 = smul.addr %s245, 8
      %s247 = scalar_lea.vmem %s4, %s246
      %s248 = smul.u32 8, %s20
      %p249 = scmp.lt.s32.totalorder %s19, 1
      %s250 = scalar_select %p249, %s19, 1
      %p251 = scmp.lt.s32.totalorder %s248, 15
      %s252 = scalar_select %p251, %s248, 15
      %s253 = smul.addr %s252, 2
      %s254 = smul.addr %s250, 32
      %s255 = sadd.s32 %s253, %s254
      %s256 = smul.addr %s255, 8
      %s257 = scalar_lea.vmem %s0, %s256
      %s258 = smul.u32 8, %s20
      %s259 = smul.u32 8, %s20
      %p260 = scmp.lt.s32.totalorder %s19, 1
      %s261 = scalar_select %p260, %s19, 1
      %p262 = scmp.lt.s32.totalorder %s259, 15
      %s263 = scalar_select %p262, %s259, 15
      %s264 = smul.addr %s263, 2
      %s265 = smul.addr %s261, 32
      %s266 = sadd.s32 %s264, %s265
      %s267 = smul.addr %s266, 8
      %s268 = scalar_lea.vmem %s1, %s267
      %s269 = smul.u32 8, %s20
      %s270 = smul.u32 8, %s20
      %p271 = scmp.lt.s32.totalorder %s19, 1
      %s272 = scalar_select %p271, %s19, 1
      %p273 = scmp.lt.s32.totalorder %s270, 15
      %s274 = scalar_select %p273, %s270, 15
      %s275 = smul.addr %s274, 2
      %s276 = smul.addr %s272, 32
      %s277 = sadd.s32 %s275, %s276
      %s278 = smul.addr %s277, 8
      %s279 = scalar_lea.vmem %s4, %s278
      %s280 = smul.u32 8, %s20
      %v281 = vld [vmem:[%s268] sm:$0xff]
      %v282 = vld [vmem:[%s268 + $0x8] sm:$0xff]
      %v283 = vld [vmem:[%s268 + $0x10] sm:$0xff]
      %v284 = vld [vmem:[%s268 + $0x18] sm:$0xff]
      %v285 = vld [vmem:[%s268 + $0x20] sm:$0xff]
      %v286 = vld [vmem:[%s268 + $0x28] sm:$0xff]
      %v287 = vld [vmem:[%s268 + $0x30] sm:$0xff]
      %v288 = vld [vmem:[%s268 + $0x38] sm:$0xff]
      %v289 = vld [vmem:[%s268 + $0x40] sm:$0xff]
      %v290 = vld [vmem:[%s268 + $0x48] sm:$0xff]
      %v291 = vld [vmem:[%s268 + $0x50] sm:$0xff]
      %v292 = vld [vmem:[%s268 + $0x58] sm:$0xff]
      %v293 = vld [vmem:[%s268 + $0x60] sm:$0xff]
      %v294 = vld [vmem:[%s268 + $0x68] sm:$0xff]
      %v295 = vld [vmem:[%s268 + $0x70] sm:$0xff]
      %v296 = vld [vmem:[%s268 + $0x78] sm:$0xff]
      %v297 = vld [vmem:[%s257] sm:$0xff]
      %v298 = vld [vmem:[%s257 + $0x8] sm:$0xff]
      %v299 = vld [vmem:[%s257 + $0x10] sm:$0xff]
      %v300 = vld [vmem:[%s257 + $0x18] sm:$0xff]
      %v301 = vld [vmem:[%s257 + $0x20] sm:$0xff]
      %v302 = vld [vmem:[%s257 + $0x28] sm:$0xff]
      %v303 = vld [vmem:[%s257 + $0x30] sm:$0xff]
      %v304 = vld [vmem:[%s257 + $0x38] sm:$0xff]
      %v305 = vld [vmem:[%s257 + $0x40] sm:$0xff]
      %v306 = vld [vmem:[%s257 + $0x48] sm:$0xff]
      %v307 = vld [vmem:[%s257 + $0x50] sm:$0xff]
      %v308 = vld [vmem:[%s257 + $0x58] sm:$0xff]
      %v309 = vld [vmem:[%s257 + $0x60] sm:$0xff]
      %v310 = vld [vmem:[%s257 + $0x68] sm:$0xff]
      %v311 = vld [vmem:[%s257 + $0x70] sm:$0xff]
      %v312 = vld [vmem:[%s257 + $0x78] sm:$0xff]
      %v313 = vld [vmem:[%s2] sm:$0x1]
      %v315 = vlaneseq
      %v316 = vshrl.u32 %v315, 7
      %v317 = vsub.s32 0, %v316
      %v318 = vrot.slane %v313, %v317
      %v320 = vmul.f32 %v297, %v318
      %v321 = vmul.f32 %v298, %v318
      %v322 = vmul.f32 %v299, %v318
      %v323 = vmul.f32 %v300, %v318
      %v324 = vmul.f32 %v301, %v318
      %v325 = vmul.f32 %v302, %v318
      %v326 = vmul.f32 %v303, %v318
      %v327 = vmul.f32 %v304, %v318
      %v328 = vmul.f32 %v305, %v318
      %v329 = vmul.f32 %v306, %v318
      %v330 = vmul.f32 %v307, %v318
      %v331 = vmul.f32 %v308, %v318
      %v332 = vmul.f32 %v309, %v318
      %v333 = vmul.f32 %v310, %v318
      %v334 = vmul.f32 %v311, %v318
      %v335 = vmul.f32 %v312, %v318
      %v336 = vadd.f32 %v281, %v320
      %v337 = vadd.f32 %v282, %v321
      %v338 = vadd.f32 %v283, %v322
      %v339 = vadd.f32 %v284, %v323
      %v340 = vadd.f32 %v285, %v324
      %v341 = vadd.f32 %v286, %v325
      %v342 = vadd.f32 %v287, %v326
      %v343 = vadd.f32 %v288, %v327
      %v344 = vadd.f32 %v289, %v328
      %v345 = vadd.f32 %v290, %v329
      %v346 = vadd.f32 %v291, %v330
      %v347 = vadd.f32 %v292, %v331
      %v348 = vadd.f32 %v293, %v332
      %v349 = vadd.f32 %v294, %v333
      %v350 = vadd.f32 %v295, %v334
      %v351 = vadd.f32 %v296, %v335
      %v352 = vld [vmem:[%s3] sm:$0x1]
      %v354 = vlaneseq
      %v355 = vshrl.u32 %v354, 7
      %v356 = vsub.s32 0, %v355
      %v357 = vrot.slane %v352, %v356
      %v359 = vadd.f32 %v336, %v357
      %v360 = vadd.f32 %v337, %v357
      %v361 = vadd.f32 %v338, %v357
      %v362 = vadd.f32 %v339, %v357
      %v363 = vadd.f32 %v340, %v357
      %v364 = vadd.f32 %v341, %v357
      %v365 = vadd.f32 %v342, %v357
      %v366 = vadd.f32 %v343, %v357
      %v367 = vadd.f32 %v344, %v357
      %v368 = vadd.f32 %v345, %v357
      %v369 = vadd.f32 %v346, %v357
      %v370 = vadd.f32 %v347, %v357
      %v371 = vadd.f32 %v348, %v357
      %v372 = vadd.f32 %v349, %v357
      %v373 = vadd.f32 %v350, %v357
      %v374 = vadd.f32 %v351, %v357
      %375 = vst [vmem:[%s279] sm:$0xff] %v359
      %376 = vst [vmem:[%s279 + $0x8] sm:$0xff] %v360
      %377 = vst [vmem:[%s279 + $0x10] sm:$0xff] %v361
      %378 = vst [vmem:[%s279 + $0x18] sm:$0xff] %v362
      %379 = vst [vmem:[%s279 + $0x20] sm:$0xff] %v363
      %380 = vst [vmem:[%s279 + $0x28] sm:$0xff] %v364
      %381 = vst [vmem:[%s279 + $0x30] sm:$0xff] %v365
      %382 = vst [vmem:[%s279 + $0x38] sm:$0xff] %v366
      %383 = vst [vmem:[%s279 + $0x40] sm:$0xff] %v367
      %384 = vst [vmem:[%s279 + $0x48] sm:$0xff] %v368
      %385 = vst [vmem:[%s279 + $0x50] sm:$0xff] %v369
      %386 = vst [vmem:[%s279 + $0x58] sm:$0xff] %v370
      %387 = vst [vmem:[%s279 + $0x60] sm:$0xff] %v371
      %388 = vst [vmem:[%s279 + $0x68] sm:$0xff] %v372
      %389 = vst [vmem:[%s279 + $0x70] sm:$0xff] %v373
      %390 = vst [vmem:[%s279 + $0x78] sm:$0xff] %v374
      %s391 = smul.u32 8, %s20
      %p392 = scmp.lt.s32.totalorder %s19, 1
      %s393 = scalar_select %p392, %s19, 1
      %p394 = scmp.lt.s32.totalorder %s391, 15
      %s395 = scalar_select %p394, %s391, 15
      %s396 = smul.addr %s395, 2
      %s397 = smul.addr %s393, 32
      %s398 = sadd.s32 %s396, %s397
      %s399 = smul.addr %s398, 8
      %s400 = scalar_lea.vmem %s4, %s399
      // Predicated region
      $region37: #{resnet_block.5} parent=35 // pred_check
        %p401 = pneg %p145
      $region38: #{resnet_block.5} parent=35 // pred_check_branch
        %403 = sbr.rel (%p401) target = $region40
      $region39: #{resnet_block.5} parent=35 // pred_region
        %s404 = smul.u32 8, %s20
      $region40: #{resnet_block.5} parent=35 // pred_fallthru
        _
    $region36: #{resnet_block.5} parent=5 // pred_fallthru
      _
    %p405 = scmp.le.s32.totalorder 2, %s10
    // Predicated region
    $region41: #{resnet_block.5} parent=5 // pred_check
      %p406 = pneg %p405
    $region42: #{resnet_block.5} parent=5 // pred_check_branch
      %408 = sbr.rel (%p406) target = $region44
    $region43: #{resnet_block.5} parent=5 // pred_region
      %s409 = ssub.s32 %s10, 2
      // Predicated region
      $region45: #{resnet_block.5} parent=43 // pred_check
        %p410 = pneg %p151
      $region46: #{resnet_block.5} parent=43 // pred_check_branch
        %412 = sbr.rel (%p410) target = $region48
      $region47: #{resnet_block.5} parent=43 // pred_region
        %s413 = smul.u32 8, %s22
        %p414 = scmp.lt.s32.totalorder %s21, 1
        %s415 = scalar_select %p414, %s21, 1
        %p416 = scmp.lt.s32.totalorder %s413, 15
        %s417 = scalar_select %p416, %s413, 15
        %s418 = smul.addr %s417, 2
        %s419 = smul.addr %s415, 32
        %s420 = sadd.s32 %s418, %s419
        %s421 = smul.addr %s420, 8
        %s422 = scalar_lea.vmem %s4, %s421
      $region48: #{resnet_block.5} parent=43 // pred_fallthru
        _
    $region44: #{resnet_block.5} parent=5 // pred_fallthru
      _
  $region6: #{resnet_block.5} parent=0 // loop_footer
    %s14 = sadd.s32 1, %s10
  $region7: #{resnet_block.5} parent=0 // loop_footer_branch
    %9 = sbr.rel target = $region3
  $region8: #{resnet_block.5} parent=0 // loop_exit
    _

// kernel: resnet_block.3
$region0: #{resnet_block.3}
  #allocation0 [shape = 'u32[]', space=smem, size = 0x4, offset = 0x4, fixed_abs, tag = 'smem constant byte address 0x4 - core index']
  #allocation1 [shape = 'u32[144,128]{1,0:T(1,128)}', space=vmem, size = 0x12000, scoped, tag = 'internal scratch']
  %s0 = inlined_call_operand.vmem [shape: bf16[2,2,10,18,128], index: 0, kind: input, shape index: {}]
  %s1 = inlined_call_operand.vmem [shape: bf16[1152,128], index: 1, kind: input, shape index: {}]
  %s2 = inlined_call_operand.vmem [shape: f32[2,16,16,128], index: 2, kind: output, shape index: {0}]
  %s3 = inlined_call_operand.vmem [shape: f32[2,2,2,128], index: 3, kind: output, shape index: {1}]
  %4 = xla_tuple %s2, %s3
  %s5 = sld [smem:[#allocation0]]
  $region49: #{resnet_block.3} parent=0
    _
  %s7 = ssub.s32 1, %s5
  %s8 = scalar_select 0, %s7, %s5
  loop: start=0, step=1, limit=6
  $region2: #{resnet_block.3} parent=0 // loop_pre_header
    _
  $region3: #{resnet_block.3} parent=0 // loop_header
    %s10 = sphi 0, %s14
    %p11 = scmp.ge.s32.totalorder %s10, 6
    %s17 = sphi 0, %s29
    %s18 = sphi 0, %s25
    %s19 = sphi 0, %s17
    %s20 = sphi 0, %s18
    %s21 = sphi 0, %s19
    %s22 = sphi 0, %s20
    %s34 = sphi 0, %s36
    %s37 = sphi 0, %s34
    %s38 = sphi 0, %s37
    %s54 = sphi 0, %s38
    %s58 = sphi 0, %s58
    %s60 = sphi 0, %s58
    %s61 = sphi 0, %s60
    %s75 = sphi 0, %s61
    %s83 = sphi 0, %s85
    %s86 = sphi 0, %s83
    %s87 = sphi 0, %s86
    %s103 = sphi 0, %s87
    %s111 = sphi 0, %s113
    %s114 = sphi 0, %s111
    %s115 = sphi 0, %s114
    %s131 = sphi 0, %s115
  $region4: #{resnet_block.3} parent=0 // loop_header_branch
    %13 = sbr.rel (%p11) target = $region8
  $region5: #{resnet_block.3} parent=0 // loop_body
    %s15 = ssub.s32 %s10, 1
    %s16 = ssub.s32 %s10, 2
    %s23 = sadd.s32 1, %s18
    %p24 = scmp.ge.s32.totalorder %s23, 2
    %s25 = scalar_select %p24, 0, %s23
    %s26 = sadd.s32 1, %s17
    %s27 = scalar_select %p24, %s26, %s17
    %p28 = scmp.ge.s32.totalorder %s27, 2
    %s29 = scalar_select %p28, 0, %s27
    %s30 = ssub.s32 %s17, %s29
    %s31 = ssub.s32 %s18, %s25
    %s32 = sor.u32 %s30, %s31
    %p33 = scmp.eq.s32.totalorder %s32, 0
    %s35 = sadd.s32 %s34, 1
    %s36 = scalar_select %p33, %s34, %s35
    %p39 = pneg %p33
    %p40 = scmp.eq.s32.totalorder %s10, 3
    %p41 = por %p39, %p40
    %p42 = scmp.ne.s32.totalorder %s34, %s37
    %p43 = scmp.eq.s32.totalorder %s10, 0
    %p44 = por %p42, %p43
    %p45 = scmp.ne.s32.totalorder %s34, %s37
    %p46 = scmp.eq.s32.totalorder %s15, 3
    %p47 = por %p45, %p46
    %p48 = scmp.ne.s32.totalorder %s37, %s38
    %p49 = scmp.eq.s32.totalorder %s15, 0
    %p50 = por %p48, %p49
    %p51 = scmp.ne.s32.totalorder %s37, %s38
    %p52 = scmp.eq.s32.totalorder %s16, 3
    %p53 = por %p51, %p52
    %p55 = scmp.ne.s32.totalorder %s38, %s54
    %p56 = scmp.eq.s32.totalorder %s16, 0
    %p57 = por %p55, %p56
    %s59 = sadd.s32 %s58, 1
    %p62 = scmp.eq.s32.totalorder %s10, 3
    %p63 = scmp.ne.s32.totalorder %s58, %s60
    %p64 = scmp.eq.s32.totalorder %s10, 0
    %p65 = por %p63, %p64
    %p66 = scmp.ne.s32.totalorder %s58, %s60
    %p67 = scmp.eq.s32.totalorder %s15, 3
    %p68 = por %p66, %p67
    %p69 = scmp.ne.s32.totalorder %s60, %s61
    %p70 = scmp.eq.s32.totalorder %s15, 0
    %p71 = por %p69, %p70
    %p72 = scmp.ne.s32.totalorder %s60, %s61
    %p73 = scmp.eq.s32.totalorder %s16, 3
    %p74 = por %p72, %p73
    %p76 = scmp.ne.s32.totalorder %s61, %s75
    %p77 = scmp.eq.s32.totalorder %s16, 0
    %p78 = por %p76, %p77
    %s79 = ssub.s32 %s17, %s29
    %s80 = ssub.s32 %s18, %s25
    %s81 = sor.u32 %s79, %s80
    %p82 = scmp.eq.s32.totalorder %s81, 0
    %s84 = sadd.s32 %s83, 1
    %s85 = scalar_select %p82, %s83, %s84
    %p88 = pneg %p82
    %p89 = scmp.eq.s32.totalorder %s10, 3
    %p90 = por %p88, %p89
    %p91 = scmp.ne.s32.totalorder %s83, %s86
    %p92 = scmp.eq.s32.totalorder %s10, 0
    %p93 = por %p91, %p92
    %p94 = scmp.ne.s32.totalorder %s83, %s86
    %p95 = scmp.eq.s32.totalorder %s15, 3
    %p96 = por %p94, %p95
    %p97 = scmp.ne.s32.totalorder %s86, %s87
    %p98 = scmp.eq.s32.totalorder %s15, 0
    %p99 = por %p97, %p98
    %p100 = scmp.ne.s32.totalorder %s86, %s87
    %p101 = scmp.eq.s32.totalorder %s16, 3
    %p102 = por %p100, %p101
    %p104 = scmp.ne.s32.totalorder %s87, %s103
    %p105 = scmp.eq.s32.totalorder %s16, 0
    %p106 = por %p104, %p105
    %s107 = ssub.s32 %s17, %s29
    %s108 = ssub.s32 %s18, %s25
    %s109 = sor.u32 %s107, %s108
    %p110 = scmp.eq.s32.totalorder %s109, 0
    %s112 = sadd.s32 %s111, 1
    %s113 = scalar_select %p110, %s111, %s112
    %p116 = pneg %p110
    %p117 = scmp.eq.s32.totalorder %s10, 3
    %p118 = por %p116, %p117
    %p119 = scmp.ne.s32.totalorder %s111, %s114
    %p120 = scmp.eq.s32.totalorder %s10, 0
    %p121 = por %p119, %p120
    %p122 = scmp.ne.s32.totalorder %s111, %s114
    %p123 = scmp.eq.s32.totalorder %s15, 3
    %p124 = por %p122, %p123
    %p125 = scmp.ne.s32.totalorder %s114, %s115
    %p126 = scmp.eq.s32.totalorder %s15, 0
    %p127 = por %p125, %p126
    %p128 = scmp.ne.s32.totalorder %s114, %s115
    %p129 = scmp.eq.s32.totalorder %s16, 3
    %p130 = por %p128, %p129
    %p132 = scmp.ne.s32.totalorder %s115, %s131
    %p133 = scmp.eq.s32.totalorder %s16, 0
    %p134 = por %p132, %p133
    %p135 = scmp.le.s32.totalorder 1, %s10
    %p136 = scmp.lt.s32.totalorder %s10, 5
    %p137 = pnand %p135, %p136
    %p138 = pneg %p137
    // Predicated region
    $region9: #{resnet_block.3} parent=5 // pred_check
      _
    $region10: #{resnet_block.3} parent=5 // pred_check_branch
      %140 = sbr.rel (%p137) target = $region12
    $region11: #{resnet_block.3} parent=5 // pred_region
      %s141 = ssub.s32 %s10, 1
      // Predicated region
      $region13: #{resnet_block.3} parent=11 // pred_check
        %p142 = pneg %p71
      $region14: #{resnet_block.3} parent=11 // pred_check_branch
        %144 = sbr.rel (%p142) target = $region16
      $region15: #{resnet_block.3} parent=11 // pred_region
        _
      $region16: #{resnet_block.3} parent=11 // pred_fallthru
        _
    $region12: #{resnet_block.3} parent=5 // pred_fallthru
      _
    %p145 = scmp.lt.s32.totalorder %s10, 4
    // Predicated region
    $region17: #{resnet_block.3} parent=5 // pred_check
      %p146 = pneg %p145
    $region18: #{resnet_block.3} parent=5 // pred_check_branch
      %148 = sbr.rel (%p146) target = $region20
    $region19: #{resnet_block.3} parent=5 // pred_region
      // Predicated region
      $region21: #{resnet_block.3} parent=19 // pred_check
        %p149 = pneg %p44
      $region22: #{resnet_block.3} parent=19 // pred_check_branch
        %151 = sbr.rel (%p149) target = $region24
      $region23: #{resnet_block.3} parent=19 // pred_region
        %p152 = scmp.lt.s32.totalorder %s17, 1
        %s153 = scalar_select %p152, %s17, 1
        %p154 = scmp.lt.s32.totalorder %s18, 1
        %s155 = scalar_select %p154, %s18, 1
        %s156 = smul.addr %s155, 30
        %s157 = smul.addr %s153, 60
        %s158 = sadd.s32 %s156, %s157
        %s159 = smul.addr %s158, 4
        %s160 = scalar_lea.vmem %s0, %s159
      $region24: #{resnet_block.3} parent=19 // pred_fallthru
        _
    $region20: #{resnet_block.3} parent=5 // pred_fallthru
      _
    %p161 = scmp.le.s32.totalorder 1, %s10
    %p162 = scmp.lt.s32.totalorder %s10, 5
    %p163 = pnand %p161, %p162
    %p164 = pneg %p163
    // Predicated region
    $region25: #{resnet_block.3} parent=5 // pred_check
      _
    $region26: #{resnet_block.3} parent=5 // pred_check_branch
      %166 = sbr.rel (%p163) target = $region28
    $region27: #{resnet_block.3} parent=5 // pred_region
      %s167 = ssub.s32 %s10, 1
      %p168 = scmp.lt.s32.totalorder %s19, 1
      %s169 = scalar_select %p168, %s19, 1
      %p170 = scmp.lt.s32.totalorder %s20, 1
      %s171 = scalar_select %p170, %s20, 1
      %s172 = smul.addr %s171, 30
      %s173 = smul.addr %s169, 60
      %s174 = sadd.s32 %s172, %s173
      %s175 = smul.addr %s174, 4
      %s176 = scalar_lea.vmem %s0, %s175
      %p177 = pneg %p50
      %p178 = pneg %p47
      %p179 = pneg %p71
      %p180 = pneg %p68
      %p181 = pneg %p99
      %p182 = pneg %p96
      %s183 = smul.u32 8, %s20
      %p184 = scmp.lt.s32.totalorder %s19, 1
      %s185 = scalar_select %p184, %s19, 1
      %p186 = scmp.lt.s32.totalorder %s183, 15
      %s187 = scalar_select %p186, %s183, 15
      %s188 = smul.addr %s187, 2
      %s189 = smul.addr %s185, 32
      %s190 = sadd.s32 %s188, %s189
      %s191 = smul.addr %s190, 8
      %s192 = scalar_lea.vmem %s2, %s191
      %p193 = pneg %p127
      %p194 = pneg %p124
      %p195 = scmp.lt.s32.totalorder %s19, 1
      %s196 = scalar_select %p195, %s19, 1
      %p197 = scmp.lt.s32.totalorder %s20, 1
      %s198 = scalar_select %p197, %s20, 1
      %s199 = smul.addr %s196, 2
      %s200 = sadd.s32 %s198, %s199
      %s201 = smul.addr %s200, 2
      %s202 = scalar_lea.vmem %s3, %s201
      %p203 = scmp.lt.s32.totalorder %s19, 1
      %s204 = scalar_select %p203, %s19, 1
      %p205 = scmp.lt.s32.totalorder %s20, 1
      %s206 = scalar_select %p205, %s20, 1
      %s207 = smul.addr %s206, 30
      %s208 = smul.addr %s204, 60
      %s209 = sadd.s32 %s207, %s208
      %s210 = smul.addr %s209, 4
      %s211 = scalar_lea.vmem %s0, %s210
      %s212 = smul.u32 8, %s20
      %p213 = scmp.lt.s32.totalorder %s19, 1
      %s214 = scalar_select %p213, %s19, 1
      %p215 = scmp.lt.s32.totalorder %s212, 15
      %s216 = scalar_select %p215, %s212, 15
      %s217 = smul.addr %s216, 2
      %s218 = smul.addr %s214, 32
      %s219 = sadd.s32 %s217, %s218
      %s220 = smul.addr %s219, 8
      %s221 = scalar_lea.vmem %s2, %s220
      %s222 = smul.u32 8, %s20
      %p223 = scmp.lt.s32.totalorder %s19, 1
      %s224 = scalar_select %p223, %s19, 1
      %p225 = scmp.lt.s32.totalorder %s20, 1
      %s226 = scalar_select %p225, %s20, 1
      %s227 = smul.addr %s224, 2
      %s228 = sadd.s32 %s226, %s227
      %s229 = smul.addr %s228, 2
      %s230 = scalar_lea.vmem %s3, %s229
      %v232 = vld [vmem:[%s211] sm:$0xf]
      %v233 = vld [vmem:[%s211 + $0x4] sm:$0xf]
      %v234 = vld [vmem:[%s211 + $0x8] sm:$0x1]
      %v235 = vld [vmem:[%s211 + $0xc] sm:$0xf]
      %v236 = vld [vmem:[%s211 + $0x10] sm:$0xf]
      %v237 = vld [vmem:[%s211 + $0x14] sm:$0x1]
      %v238 = vld [vmem:[%s211 + $0x18] sm:$0xf]
      %v239 = vld [vmem:[%s211 + $0x1c] sm:$0xf]
      %v240 = vld [vmem:[%s211 + $0x20] sm:$0x1]
      %v241 = vld [vmem:[%s211 + $0x24] sm:$0xf]
      %v242 = vld [vmem:[%s211 + $0x28] sm:$0xf]
      %v243 = vld [vmem:[%s211 + $0x2c] sm:$0x1]
      %v244 = vld [vmem:[%s211 + $0x30] sm:$0xf]
      %v245 = vld [vmem:[%s211 + $0x34] sm:$0xf]
      %v246 = vld [vmem:[%s211 + $0x38] sm:$0x1]
      %v247 = vld [vmem:[%s211 + $0x3c] sm:$0xf]
      %v248 = vld [vmem:[%s211 + $0x40] sm:$0xf]
      %v249 = vld [vmem:[%s211 + $0x44] sm:$0x1]
      %v250 = vld [vmem:[%s211 + $0x48] sm:$0xf]
      %v251 = vld [vmem:[%s211 + $0x4c] sm:$0xf]
      %v252 = vld [vmem:[%s211 + $0x50] sm:$0x1]
      %v253 = vld [vmem:[%s211 + $0x54] sm:$0xf]
      %v254 = vld [vmem:[%s211 + $0x58] sm:$0xf]
      %v255 = vld [vmem:[%s211 + $0x5c] sm:$0x1]
      %v256 = vld [vmem:[%s211 + $0x60] sm:$0xf]
      %v257 = vld [vmem:[%s211 + $0x64] sm:$0xf]
      %v258 = vld [vmem:[%s211 + $0x68] sm:$0x1]
      %v259 = vld [vmem:[%s211 + $0x6c] sm:$0xf]
      %v260 = vld [vmem:[%s211 + $0x70] sm:$0xf]
      %v261 = vld [vmem:[%s211 + $0x74] sm:$0x1]
      %vm262 = vsmask.f32 3328
      %vm263 = vsmask.f32 7440
      %vm264 = vmor %vm262, %vm263
      %v266 = vshrl.u32 %v232, 16
      %v268 = vrot.slane %v266, 4
      %v269 = vshll.u32 %v232, 16
      %v271 = vrot.slane %v269, 5
      %v272 = vor.u32 %v268, %v271
      %v273 = vrot.slane %v272, 4
      %v275 = vshll.u32 %v233, 16
      %v277 = vrot.slane %v275, 5
      %v278 = vsel %vm264, %v273, %v277
      %v279 = vshrl.u32 %v233, 16
      %v281 = vrot.slane %v279, 4
      %v282 = vor.u32 %v281, %v277
      %v283 = vrot.slane %v282, 4
      %v285 = vshll.u32 %v234, 16
      %v287 = vrot.slane %v285, 5
      %v288 = vsel %vm264, %v283, %v287
      %v290 = vshrl.u32 %v235, 16
      %v292 = vrot.slane %v290, 4
      %v293 = vshll.u32 %v235, 16
      %v295 = vrot.slane %v293, 5
      %v296 = vor.u32 %v292, %v295
      %v297 = vrot.slane %v296, 4
      %v299 = vshll.u32 %v236, 16
      %v301 = vrot.slane %v299, 5
      %v302 = vsel %vm264, %v297, %v301
      %v303 = vshrl.u32 %v236, 16
      %v305 = vrot.slane %v303, 4
      %v306 = vor.u32 %v305, %v301
      %v307 = vrot.slane %v306, 4
      %v309 = vshll.u32 %v237, 16
      %v311 = vrot.slane %v309, 5
      %v312 = vsel %vm264, %v307, %v311
      %v314 = vshrl.u32 %v238, 16
      %v316 = vrot.slane %v314, 4
      %v317 = vshll.u32 %v238, 16
      %v319 = vrot.slane %v317, 5
      %v320 = vor.u32 %v316, %v319
      %v321 = vrot.slane %v320, 4
      %v323 = vshll.u32 %v239, 16
      %v325 = vrot.slane %v323, 5
      %v326 = vsel %vm264, %v321, %v325
      %v327 = vshrl.u32 %v239, 16
      %v329 = vrot.slane %v327, 4
      %v330 = vor.u32 %v329, %v325
      %v331 = vrot.slane %v330, 4
      %v333 = vshll.u32 %v240, 16
      %v335 = vrot.slane %v333, 5
      %v336 = vsel %vm264, %v331, %v335
      %v338 = vshrl.u32 %v241, 16
      %v340 = vrot.slane %v338, 4
      %v341 = vshll.u32 %v241, 16
      %v343 = vrot.slane %v341, 5
      %v344 = vor.u32 %v340, %v343
      %v345 = vrot.slane %v344, 4
      %v347 = vshll.u32 %v242, 16
      %v349 = vrot.slane %v347, 5
      %v350 = vsel %vm264, %v345, %v349
      %v351 = vshrl.u32 %v242, 16
      %v353 = vrot.slane %v351, 4
      %v354 = vor.u32 %v353, %v349
      %v355 = vrot.slane %v354, 4
      %v357 = vshll.u32 %v243, 16
      %v359 = vrot.slane %v357, 5
      %v360 = vsel %vm264, %v355, %v359
      %v362 = vshrl.u32 %v244, 16
      %v364 = vrot.slane %v362, 4
      %v365 = vshll.u32 %v244, 16
      %v367 = vrot.slane %v365, 5
      %v368 = vor.u32 %v364, %v367
      %v369 = vrot.slane %v368, 4
      %v371 = vshll.u32 %v245, 16
      %v373 = vrot.slane %v371, 5
      %v374 = vsel %vm264, %v369, %v373
      %v375 = vshrl.u32 %v245, 16
      %v377 = vrot.slane %v375, 4
      %v378 = vor.u32 %v377, %v373
      %v379 = vrot.slane %v378, 4
      %v381 = vshll.u32 %v246, 16
      %v383 = vrot.slane %v381, 5
      %v384 = vsel %vm264, %v379, %v383
      %v386 = vshrl.u32 %v247, 16
      %v388 = vrot.slane %v386, 4
      %v389 = vshll.u32 %v247, 16
      %v391 = vrot.slane %v389, 5
      %v392 = vor.u32 %v388, %v391
      %v393 = vrot.slane %v392, 4
      %v395 = vshll.u32 %v248, 16
      %v397 = vrot.slane %v395, 5
      %v398 = vsel %vm264, %v393, %v397
      %v399 = vshrl.u32 %v248, 16
      %v401 = vrot.slane %v399, 4
      %v402 = vor.u32 %v401, %v397
      %v403 = vrot.slane %v402, 4
      %v405 = vshll.u32 %v249, 16
      %v407 = vrot.slane %v405, 5
      %v408 = vsel %vm264, %v403, %v407
      %v410 = vshrl.u32 %v250, 16
      %v412 = vrot.slane %v410, 4
      %v413 = vshll.u32 %v250, 16
      %v415 = vrot.slane %v413, 5
      %v416 = vor.u32 %v412, %v415
      %v417 = vrot.slane %v416, 4
      %v419 = vshll.u32 %v251, 16
      %v421 = vrot.slane %v419, 5
      %v422 = vsel %vm264, %v417, %v421
      %v423 = vshrl.u32 %v251, 16
      %v425 = vrot.slane %v423, 4
      %v426 = vor.u32 %v425, %v421
      %v427 = vrot.slane %v426, 4
      %v429 = vshll.u32 %v252, 16
      %v431 = vrot.slane %v429, 5
      %v432 = vsel %vm264, %v427, %v431
      %v434 = vshrl.u32 %v253, 16
      %v436 = vrot.slane %v434, 4
      %v437 = vshll.u32 %v253, 16
      %v439 = vrot.slane %v437, 5
      %v440 = vor.u32 %v436, %v439
      %v441 = vrot.slane %v440, 4
      %v443 = vshll.u32 %v254, 16
      %v445 = vrot.slane %v443, 5
      %v446 = vsel %vm264, %v441, %v445
      %v447 = vshrl.u32 %v254, 16
      %v449 = vrot.slane %v447, 4
      %v450 = vor.u32 %v449, %v445
      %v451 = vrot.slane %v450, 4
      %v453 = vshll.u32 %v255, 16
      %v455 = vrot.slane %v453, 5
      %v456 = vsel %vm264, %v451, %v455
      %vm481 = vcmask 1042432
      %vm482 = vcmask 1046532
      %vm483 = vmor %vm481, %vm482
      %v484 = vrot.slane %v232, 5
      %v485 = vrot.slane %v484, 4
      %v486 = vrot.slane %v233, 5
      %v487 = vsel %vm483, %v485, %v486
      %v488 = vrot.slane %v486, 4
      %v489 = vrot.slane %v234, 5
      %v490 = vsel %vm483, %v488, %v489
      %v491 = vrot.slane %v235, 5
      %v492 = vrot.slane %v491, 4
      %v493 = vrot.slane %v236, 5
      %v494 = vsel %vm483, %v492, %v493
      %v495 = vrot.slane %v493, 4
      %v496 = vrot.slane %v237, 5
      %v497 = vsel %vm483, %v495, %v496
      %v498 = vrot.slane %v238, 5
      %v499 = vrot.slane %v498, 4
      %v500 = vrot.slane %v239, 5
      %v501 = vsel %vm483, %v499, %v500
      %v502 = vrot.slane %v500, 4
      %v503 = vrot.slane %v240, 5
      %v504 = vsel %vm483, %v502, %v503
      %v505 = vrot.slane %v241, 5
      %v506 = vrot.slane %v505, 4
      %v507 = vrot.slane %v242, 5
      %v508 = vsel %vm483, %v506, %v507
      %v509 = vrot.slane %v507, 4
      %v510 = vrot.slane %v243, 5
      %v511 = vsel %vm483, %v509, %v510
      %v512 = vrot.slane %v244, 5
      %v513 = vrot.slane %v512, 4
      %v514 = vrot.slane %v245, 5
      %v515 = vsel %vm483, %v513, %v514
      %v516 = vrot.slane %v514, 4
      %v517 = vrot.slane %v246, 5
      %v518 = vsel %vm483, %v516, %v517
      %v519 = vrot.slane %v247, 5
      %v520 = vrot.slane %v519, 4
      %v521 = vrot.slane %v248, 5
      %v522 = vsel %vm483, %v520, %v521
      %v523 = vrot.slane %v521, 4
      %v524 = vrot.slane %v249, 5
      %v525 = vsel %vm483, %v523, %v524
      %v526 = vrot.slane %v250, 5
      %v527 = vrot.slane %v526, 4
      %v528 = vrot.slane %v251, 5
      %v529 = vsel %vm483, %v527, %v528
      %v530 = vrot.slane %v528, 4
      %v531 = vrot.slane %v252, 5
      %v532 = vsel %vm483, %v530, %v531
      %v533 = vrot.slane %v253, 5
      %v534 = vrot.slane %v533, 4
      %v535 = vrot.slane %v254, 5
      %v536 = vsel %vm483, %v534, %v535
      %v537 = vrot.slane %v535, 4
      %v538 = vrot.slane %v255, 5
      %v539 = vsel %vm483, %v537, %v538
      %v541 = vshrl.u32 %v256, 16
      %v543 = vrot.slane %v541, 4
      %v544 = vshll.u32 %v256, 16
      %v546 = vrot.slane %v544, 5
      %v547 = vor.u32 %v543, %v546
      %v548 = vrot.slane %v547, 4
      %v550 = vshll.u32 %v257, 16
      %v552 = vrot.slane %v550, 5
      %v553 = vsel %vm264, %v548, %v552
      %v554 = vshrl.u32 %v257, 16
      %v556 = vrot.slane %v554, 4
      %v557 = vor.u32 %v556, %v552
      %v558 = vrot.slane %v557, 4
      %v560 = vshll.u32 %v258, 16
      %v562 = vrot.slane %v560, 5
      %v563 = vsel %vm264, %v558, %v562
      %v567 = vrot.slane %v256, 5
      %v568 = vrot.slane %v567, 4
      %v569 = vrot.slane %v257, 5
      %v570 = vsel %vm483, %v568, %v569
      %v571 = vrot.slane %v569, 4
      %v572 = vrot.slane %v258, 5
      %v573 = vsel %vm483, %v571, %v572
      %v575 = vshrl.u32 %v259, 16
      %v577 = vrot.slane %v575, 4
      %v578 = vshll.u32 %v259, 16
      %v580 = vrot.slane %v578, 5
      %v581 = vor.u32 %v577, %v580
      %v582 = vrot.slane %v581, 4
      %v584 = vshll.u32 %v260, 16
      %v586 = vrot.slane %v584, 5
      %v587 = vsel %vm264, %v582, %v586
      %v588 = vshrl.u32 %v260, 16
      %v590 = vrot.slane %v588, 4
      %v591 = vor.u32 %v590, %v586
      %v592 = vrot.slane %v591, 4
      %v594 = vshll.u32 %v261, 16
      %v596 = vrot.slane %v594, 5
      %v597 = vsel %vm264, %v592, %v596
      %v601 = vrot.slane %v259, 5
      %v602 = vrot.slane %v601, 4
      %v603 = vrot.slane %v260, 5
      %v604 = vsel %vm483, %v602, %v603
      %v605 = vrot.slane %v603, 4
      %v606 = vrot.slane %v261, 5
      %v607 = vsel %vm483, %v605, %v606
      %v608 = vunpack.c.l.b16 %v232
      %v609 = vunpack.c.l.b16 %v233
      %v610 = vunpack.c.l.b16 %v235
      %v611 = vunpack.c.l.b16 %v236
      %v612 = vunpack.c.l.b16 %v238
      %v613 = vunpack.c.l.b16 %v239
      %v614 = vunpack.c.l.b16 %v241
      %v615 = vunpack.c.l.b16 %v242
      %v616 = vunpack.c.l.b16 %v244
      %v617 = vunpack.c.l.b16 %v245
      %v618 = vunpack.c.l.b16 %v247
      %v619 = vunpack.c.l.b16 %v248
      %v620 = vunpack.c.l.b16 %v250
      %v621 = vunpack.c.l.b16 %v251
      %v622 = vunpack.c.l.b16 %v253
      %v623 = vunpack.c.l.b16 %v254
      %v624 = vpack.c.b16 %v609, %v608
      %v625 = vpack.c.b16 %v611, %v610
      %v626 = vpack.c.b16 %v613, %v612
      %v627 = vpack.c.b16 %v615, %v614
      %v628 = vpack.c.b16 %v617, %v616
      %v629 = vpack.c.b16 %v619, %v618
      %v630 = vpack.c.b16 %v621, %v620
      %v631 = vpack.c.b16 %v623, %v622
      %v640 = vunpack.c.l.b16 %v278
      %v641 = vunpack.c.l.b16 %v288
      %v642 = vunpack.c.l.b16 %v302
      %v643 = vunpack.c.l.b16 %v312
      %v644 = vunpack.c.l.b16 %v326
      %v645 = vunpack.c.l.b16 %v336
      %v646 = vunpack.c.l.b16 %v350
      %v647 = vunpack.c.l.b16 %v360
      %v648 = vunpack.c.l.b16 %v374
      %v649 = vunpack.c.l.b16 %v384
      %v650 = vunpack.c.l.b16 %v398
      %v651 = vunpack.c.l.b16 %v408
      %v652 = vunpack.c.l.b16 %v422
      %v653 = vunpack.c.l.b16 %v432
      %v654 = vunpack.c.l.b16 %v446
      %v655 = vunpack.c.l.b16 %v456
      %v656 = vpack.c.b16 %v641, %v640
      %v657 = vpack.c.b16 %v643, %v642
      %v658 = vpack.c.b16 %v645, %v644
      %v659 = vpack.c.b16 %v647, %v646
      %v660 = vpack.c.b16 %v649, %v648
      %v661 = vpack.c.b16 %v651, %v650
      %v662 = vpack.c.b16 %v653, %v652
      %v663 = vpack.c.b16 %v655, %v654
      %v672 = vunpack.c.l.b16 %v487
      %v673 = vunpack.c.l.b16 %v490
      %v674 = vunpack.c.l.b16 %v494
      %v675 = vunpack.c.l.b16 %v497
      %v676 = vunpack.c.l.b16 %v501
      %v677 = vunpack.c.l.b16 %v504
      %v678 = vunpack.c.l.b16 %v508
      %v679 = vunpack.c.l.b16 %v511
      %v680 = vunpack.c.l.b16 %v515
      %v681 = vunpack.c.l.b16 %v518
      %v682 = vunpack.c.l.b16 %v522
      %v683 = vunpack.c.l.b16 %v525
      %v684 = vunpack.c.l.b16 %v529
      %v685 = vunpack.c.l.b16 %v532
      %v686 = vunpack.c.l.b16 %v536
      %v687 = vunpack.c.l.b16 %v539
      %v688 = vpack.c.b16 %v673, %v672
      %v689 = vpack.c.b16 %v675, %v674
      %v690 = vpack.c.b16 %v677, %v676
      %v691 = vpack.c.b16 %v679, %v678
      %v692 = vpack.c.b16 %v681, %v680
      %v693 = vpack.c.b16 %v683, %v682
      %v694 = vpack.c.b16 %v685, %v684
      %v695 = vpack.c.b16 %v687, %v686
      %v704 = vunpack.c.l.b16 %v256
      %v705 = vunpack.c.l.b16 %v257
      %v706 = vpack.c.b16 %v705, %v704
      %v708 = vunpack.c.l.b16 %v553
      %v709 = vunpack.c.l.b16 %v563
      %v710 = vpack.c.b16 %v709, %v708
      %v712 = vunpack.c.l.b16 %v570
      %v713 = vunpack.c.l.b16 %v573
      %v714 = vpack.c.b16 %v713, %v712
      %v716 = vunpack.c.l.b16 %v259
      %v717 = vunpack.c.l.b16 %v260
      %v718 = vpack.c.b16 %v717, %v716
      %v720 = vunpack.c.l.b16 %v587
      %v721 = vunpack.c.l.b16 %v597
      %v722 = vpack.c.b16 %v721, %v720
      %v724 = vunpack.c.l.b16 %v604
      %v725 = vunpack.c.l.b16 %v607
      %v726 = vpack.c.b16 %v725, %v724
      %v728 = vld [vmem:[%s1] sm:$0xf]
      %v729 = vld [vmem:[%s1 + $0x4] sm:$0xf]
      %v730 = vld [vmem:[%s1 + $0x8] sm:$0xf]
      %v731 = vld [vmem:[%s1 + $0xc] sm:$0xf]
      %v732 = vld [vmem:[%s1 + $0x10] sm:$0xf]
      %v733 = vld [vmem:[%s1 + $0x14] sm:$0xf]
      %v734 = vld [vmem:[%s1 + $0x18] sm:$0xf]
      %v735 = vld [vmem:[%s1 + $0x1c] sm:$0xf]
      %v736 = vld [vmem:[%s1 + $0x20] sm:$0xf]
      %v737 = vld [vmem:[%s1 + $0x24] sm:$0xf]
      %v738 = vld [vmem:[%s1 + $0x28] sm:$0xf]
      %v739 = vld [vmem:[%s1 + $0x2c] sm:$0xf]
      %v740 = vld [vmem:[%s1 + $0x30] sm:$0xf]
      %v741 = vld [vmem:[%s1 + $0x34] sm:$0xf]
      %v742 = vld [vmem:[%s1 + $0x38] sm:$0xf]
      %v743 = vld [vmem:[%s1 + $0x3c] sm:$0xf]
      %v744 = vld [vmem:[%s1 + $0x40] sm:$0xf]
      %v745 = vld [vmem:[%s1 + $0x44] sm:$0xf]
      %v746 = vld [vmem:[%s1 + $0x48] sm:$0xf]
      %v747 = vld [vmem:[%s1 + $0x4c] sm:$0xf]
      %v748 = vld [vmem:[%s1 + $0x50] sm:$0xf]
      %v749 = vld [vmem:[%s1 + $0x54] sm:$0xf]
      %v750 = vld [vmem:[%s1 + $0x58] sm:$0xf]
      %v751 = vld [vmem:[%s1 + $0x5c] sm:$0xf]
      %v752 = vld [vmem:[%s1 + $0x60] sm:$0xf]
      %v753 = vld [vmem:[%s1 + $0x64] sm:$0xf]
      %v754 = vld [vmem:[%s1 + $0x68] sm:$0xf]
      %v755 = vld [vmem:[%s1 + $0x6c] sm:$0xf]
      %v756 = vld [vmem:[%s1 + $0x70] sm:$0xf]
      %v757 = vld [vmem:[%s1 + $0x74] sm:$0xf]
      %v758 = vld [vmem:[%s1 + $0x78] sm:$0xf]
      %v759 = vld [vmem:[%s1 + $0x7c] sm:$0xf]
      %v760 = vld [vmem:[%s1 + $0x80] sm:$0xf]
      %v761 = vld [vmem:[%s1 + $0x84] sm:$0xf]
      %v762 = vld [vmem:[%s1 + $0x88] sm:$0xf]
      %v763 = vld [vmem:[%s1 + $0x8c] sm:$0xf]
      %v764 = vld [vmem:[%s1 + $0x90] sm:$0xf]
      %v765 = vld [vmem:[%s1 + $0x94] sm:$0xf]
      %v766 = vld [vmem:[%s1 + $0x98] sm:$0xf]
      %v767 = vld [vmem:[%s1 + $0x9c] sm:$0xf]
      %v768 = vld [vmem:[%s1 + $0xa0] sm:$0xf]
      %v769 = vld [vmem:[%s1 + $0xa4] sm:$0xf]
      %v770 = vld [vmem:[%s1 + $0xa8] sm:$0xf]
      %v771 = vld [vmem:[%s1 + $0xac] sm:$0xf]
      %v772 = vld [vmem:[%s1 + $0xb0] sm:$0xf]
      %v773 = vld [vmem:[%s1 + $0xb4] sm:$0xf]
      %v774 = vld [vmem:[%s1 + $0xb8] sm:$0xf]
      %v775 = vld [vmem:[%s1 + $0xbc] sm:$0xf]
      %v776 = vld [vmem:[%s1 + $0xc0] sm:$0xf]
      %v777 = vld [vmem:[%s1 + $0xc4] sm:$0xf]
      %v778 = vld [vmem:[%s1 + $0xc8] sm:$0xf]
      %v779 = vld [vmem:[%s1 + $0xcc] sm:$0xf]
      %v780 = vld [vmem:[%s1 + $0xd0] sm:$0xf]
      %v781 = vld [vmem:[%s1 + $0xd4] sm:$0xf]
      %v782 = vld [vmem:[%s1 + $0xd8] sm:$0xf]
      %v783 = vld [vmem:[%s1 + $0xdc] sm:$0xf]
      %v784 = vld [vmem:[%s1 + $0xe0] sm:$0xf]
      %v785 = vld [vmem:[%s1 + $0xe4] sm:$0xf]
      %v786 = vld [vmem:[%s1 + $0xe8] sm:$0xf]
      %v787 = vld [vmem:[%s1 + $0xec] sm:$0xf]
      %v788 = vld [vmem:[%s1 + $0xf0] sm:$0xf]
      %v789 = vld [vmem:[%s1 + $0xf4] sm:$0xf]
      %v790 = vld [vmem:[%s1 + $0xf8] sm:$0xf]
      %v791 = vld [vmem:[%s1 + $0xfc] sm:$0xf]
      %v792 = vld [vmem:[%s1 + $0x100] sm:$0xf]
      %v793 = vld [vmem:[%s1 + $0x104] sm:$0xf]
      %v794 = vld [vmem:[%s1 + $0x108] sm:$0xf]
      %v795 = vld [vmem:[%s1 + $0x10c] sm:$0xf]
      %v796 = vld [vmem:[%s1 + $0x110] sm:$0xf]
      %v797 = vld [vmem:[%s1 + $0x114] sm:$0xf]
      %v798 = vld [vmem:[%s1 + $0x118] sm:$0xf]
      %v799 = vld [vmem:[%s1 + $0x11c] sm:$0xf]
      %v800 = vld [vmem:[%s1 + $0x120] sm:$0xf]
      %v801 = vld [vmem:[%s1 + $0x124] sm:$0xf]
      %v802 = vld [vmem:[%s1 + $0x128] sm:$0xf]
      %v803 = vld [vmem:[%s1 + $0x12c] sm:$0xf]
      %v804 = vld [vmem:[%s1 + $0x130] sm:$0xf]
      %v805 = vld [vmem:[%s1 + $0x134] sm:$0xf]
      %v806 = vld [vmem:[%s1 + $0x138] sm:$0xf]
      %v807 = vld [vmem:[%s1 + $0x13c] sm:$0xf]
      %v808 = vld [vmem:[%s1 + $0x140] sm:$0xf]
      %v809 = vld [vmem:[%s1 + $0x144] sm:$0xf]
      %v810 = vld [vmem:[%s1 + $0x148] sm:$0xf]
      %v811 = vld [vmem:[%s1 + $0x14c] sm:$0xf]
      %v812 = vld [vmem:[%s1 + $0x150] sm:$0xf]
      %v813 = vld [vmem:[%s1 + $0x154] sm:$0xf]
      %v814 = vld [vmem:[%s1 + $0x158] sm:$0xf]
      %v815 = vld [vmem:[%s1 + $0x15c] sm:$0xf]
      %v816 = vld [vmem:[%s1 + $0x160] sm:$0xf]
      %v817 = vld [vmem:[%s1 + $0x164] sm:$0xf]
      %v818 = vld [vmem:[%s1 + $0x168] sm:$0xf]
      %v819 = vld [vmem:[%s1 + $0x16c] sm:$0xf]
      %v820 = vld [vmem:[%s1 + $0x170] sm:$0xf]
      %v821 = vld [vmem:[%s1 + $0x174] sm:$0xf]
      %v822 = vld [vmem:[%s1 + $0x178] sm:$0xf]
      %v823 = vld [vmem:[%s1 + $0x17c] sm:$0xf]
      %v824 = vld [vmem:[%s1 + $0x180] sm:$0xf]
      %v825 = vld [vmem:[%s1 + $0x184] sm:$0xf]
      %v826 = vld [vmem:[%s1 + $0x188] sm:$0xf]
      %v827 = vld [vmem:[%s1 + $0x18c] sm:$0xf]
      %v828 = vld [vmem:[%s1 + $0x190] sm:$0xf]
      %v829 = vld [vmem:[%s1 + $0x194] sm:$0xf]
      %v830 = vld [vmem:[%s1 + $0x198] sm:$0xf]
      %v831 = vld [vmem:[%s1 + $0x19c] sm:$0xf]
      %v832 = vld [vmem:[%s1 + $0x1a0] sm:$0xf]
      %v833 = vld [vmem:[%s1 + $0x1a4] sm:$0xf]
      %v834 = vld [vmem:[%s1 + $0x1a8] sm:$0xf]
      %v835 = vld [vmem:[%s1 + $0x1ac] sm:$0xf]
      %v836 = vld [vmem:[%s1 + $0x1b0] sm:$0xf]
      %v837 = vld [vmem:[%s1 + $0x1b4] sm:$0xf]
      %v838 = vld [vmem:[%s1 + $0x1b8] sm:$0xf]
      %v839 = vld [vmem:[%s1 + $0x1bc] sm:$0xf]
      %v840 = vld [vmem:[%s1 + $0x1c0] sm:$0xf]
      %v841 = vld [vmem:[%s1 + $0x1c4] sm:$0xf]
      %v842 = vld [vmem:[%s1 + $0x1c8] sm:$0xf]
      %v843 = vld [vmem:[%s1 + $0x1cc] sm:$0xf]
      %v844 = vld [vmem:[%s1 + $0x1d0] sm:$0xf]
      %v845 = vld [vmem:[%s1 + $0x1d4] sm:$0xf]
      %v846 = vld [vmem:[%s1 + $0x1d8] sm:$0xf]
      %v847 = vld [vmem:[%s1 + $0x1dc] sm:$0xf]
      %v848 = vld [vmem:[%s1 + $0x1e0] sm:$0xf]
      %v849 = vld [vmem:[%s1 + $0x1e4] sm:$0xf]
      %v850 = vld [vmem:[%s1 + $0x1e8] sm:$0xf]
      %v851 = vld [vmem:[%s1 + $0x1ec] sm:$0xf]
      %v852 = vld [vmem:[%s1 + $0x1f0] sm:$0xf]
      %v853 = vld [vmem:[%s1 + $0x1f4] sm:$0xf]
      %v854 = vld [vmem:[%s1 + $0x1f8] sm:$0xf]
      %v855 = vld [vmem:[%s1 + $0x1fc] sm:$0xf]
      %v856 = vld [vmem:[%s1 + $0x200] sm:$0xf]
      %v857 = vld [vmem:[%s1 + $0x204] sm:$0xf]
      %v858 = vld [vmem:[%s1 + $0x208] sm:$0xf]
      %v859 = vld [vmem:[%s1 + $0x20c] sm:$0xf]
      %v860 = vld [vmem:[%s1 + $0x210] sm:$0xf]
      %v861 = vld [vmem:[%s1 + $0x214] sm:$0xf]
      %v862 = vld [vmem:[%s1 + $0x218] sm:$0xf]
      %v863 = vld [vmem:[%s1 + $0x21c] sm:$0xf]
      %v864 = vld [vmem:[%s1 + $0x220] sm:$0xf]
      %v865 = vld [vmem:[%s1 + $0x224] sm:$0xf]
      %v866 = vld [vmem:[%s1 + $0x228] sm:$0xf]
      %v867 = vld [vmem:[%s1 + $0x22c] sm:$0xf]
      %v868 = vld [vmem:[%s1 + $0x230] sm:$0xf]
      %v869 = vld [vmem:[%s1 + $0x234] sm:$0xf]
      %v870 = vld [vmem:[%s1 + $0x238] sm:$0xf]
      %v871 = vld [vmem:[%s1 + $0x23c] sm:$0xf]
      %v1016 = vunpack.c.l.b16 %v728
      %v1017 = vunpack.c.l.b16 %v729
      %v1018 = vunpack.c.l.b16 %v730
      %v1019 = vunpack.c.l.b16 %v731
      %v1020 = vunpack.c.l.b16 %v732
      %v1021 = vunpack.c.l.b16 %v733
      %v1022 = vunpack.c.l.b16 %v734
      %v1023 = vunpack.c.l.b16 %v735
      %v1024 = vunpack.c.l.b16 %v736
      %v1025 = vunpack.c.l.b16 %v737
      %v1026 = vunpack.c.l.b16 %v738
      %v1027 = vunpack.c.l.b16 %v739
      %v1028 = vunpack.c.l.b16 %v740
      %v1029 = vunpack.c.l.b16 %v741
      %v1030 = vunpack.c.l.b16 %v742
      %v1031 = vunpack.c.l.b16 %v743
      %v1032 = vunpack.c.l.b16 %v744
      %v1033 = vunpack.c.l.b16 %v745
      %v1034 = vunpack.c.l.b16 %v746
      %v1035 = vunpack.c.l.b16 %v747
      %v1036 = vunpack.c.l.b16 %v748
      %v1037 = vunpack.c.l.b16 %v749
      %v1038 = vunpack.c.l.b16 %v750
      %v1039 = vunpack.c.l.b16 %v751
      %v1040 = vunpack.c.l.b16 %v752
      %v1041 = vunpack.c.l.b16 %v753
      %v1042 = vunpack.c.l.b16 %v754
      %v1043 = vunpack.c.l.b16 %v755
      %v1044 = vunpack.c.l.b16 %v756
      %v1045 = vunpack.c.l.b16 %v757
      %v1046 = vunpack.c.l.b16 %v758
      %v1047 = vunpack.c.l.b16 %v759
      %v1048 = vunpack.c.l.b16 %v760
      %v1049 = vunpack.c.l.b16 %v761
      %v1050 = vunpack.c.l.b16 %v762
      %v1051 = vunpack.c.l.b16 %v763
      %v1052 = vunpack.c.l.b16 %v764
      %v1053 = vunpack.c.l.b16 %v765
      %v1054 = vunpack.c.l.b16 %v766
      %v1055 = vunpack.c.l.b16 %v767
      %v1056 = vunpack.c.l.b16 %v768
      %v1057 = vunpack.c.l.b16 %v769
      %v1058 = vunpack.c.l.b16 %v770
      %v1059 = vunpack.c.l.b16 %v771
      %v1060 = vunpack.c.l.b16 %v772
      %v1061 = vunpack.c.l.b16 %v773
      %v1062 = vunpack.c.l.b16 %v774
      %v1063 = vunpack.c.l.b16 %v775
      %v1064 = vunpack.c.l.b16 %v776
      %v1065 = vunpack.c.l.b16 %v777
      %v1066 = vunpack.c.l.b16 %v778
      %v1067 = vunpack.c.l.b16 %v779
      %v1068 = vunpack.c.l.b16 %v780
      %v1069 = vunpack.c.l.b16 %v781
      %v1070 = vunpack.c.l.b16 %v782
      %v1071 = vunpack.c.l.b16 %v783
      %v1072 = vunpack.c.l.b16 %v784
      %v1073 = vunpack.c.l.b16 %v785
      %v1074 = vunpack.c.l.b16 %v786
      %v1075 = vunpack.c.l.b16 %v787
      %v1076 = vunpack.c.l.b16 %v788
      %v1077 = vunpack.c.l.b16 %v789
      %v1078 = vunpack.c.l.b16 %v790
      %v1079 = vunpack.c.l.b16 %v791
      %v1080 = vunpack.c.l.b16 %v792
      %v1081 = vunpack.c.l.b16 %v793
      %v1082 = vunpack.c.l.b16 %v794
      %v1083 = vunpack.c.l.b16 %v795
      %v1084 = vunpack.c.l.b16 %v796
      %v1085 = vunpack.c.l.b16 %v797
      %v1086 = vunpack.c.l.b16 %v798
      %v1087 = vunpack.c.l.b16 %v799
      %v1088 = vunpack.c.l.b16 %v800
      %v1089 = vunpack.c.l.b16 %v801
      %v1090 = vunpack.c.l.b16 %v802
      %v1091 = vunpack.c.l.b16 %v803
      %v1092 = vunpack.c.l.b16 %v804
      %v1093 = vunpack.c.l.b16 %v805
      %v1094 = vunpack.c.l.b16 %v806
      %v1095 = vunpack.c.l.b16 %v807
      %v1096 = vunpack.c.l.b16 %v808
      %v1097 = vunpack.c.l.b16 %v809
      %v1098 = vunpack.c.l.b16 %v810
      %v1099 = vunpack.c.l.b16 %v811
      %v1100 = vunpack.c.l.b16 %v812
      %v1101 = vunpack.c.l.b16 %v813
      %v1102 = vunpack.c.l.b16 %v814
      %v1103 = vunpack.c.l.b16 %v815
      %v1104 = vunpack.c.l.b16 %v816
      %v1105 = vunpack.c.l.b16 %v817
      %v1106 = vunpack.c.l.b16 %v818
      %v1107 = vunpack.c.l.b16 %v819
      %v1108 = vunpack.c.l.b16 %v820
      %v1109 = vunpack.c.l.b16 %v821
      %v1110 = vunpack.c.l.b16 %v822
      %v1111 = vunpack.c.l.b16 %v823
      %v1112 = vunpack.c.l.b16 %v824
      %v1113 = vunpack.c.l.b16 %v825
      %v1114 = vunpack.c.l.b16 %v826
      %v1115 = vunpack.c.l.b16 %v827
      %v1116 = vunpack.c.l.b16 %v828
      %v1117 = vunpack.c.l.b16 %v829
      %v1118 = vunpack.c.l.b16 %v830
      %v1119 = vunpack.c.l.b16 %v831
      %v1120 = vunpack.c.l.b16 %v832
      %v1121 = vunpack.c.l.b16 %v833
      %v1122 = vunpack.c.l.b16 %v834
      %v1123 = vunpack.c.l.b16 %v835
      %v1124 = vunpack.c.l.b16 %v836
      %v1125 = vunpack.c.l.b16 %v837
      %v1126 = vunpack.c.l.b16 %v838
      %v1127 = vunpack.c.l.b16 %v839
      %v1128 = vunpack.c.l.b16 %v840
      %v1129 = vunpack.c.l.b16 %v841
      %v1130 = vunpack.c.l.b16 %v842
      %v1131 = vunpack.c.l.b16 %v843
      %v1132 = vunpack.c.l.b16 %v844
      %v1133 = vunpack.c.l.b16 %v845
      %v1134 = vunpack.c.l.b16 %v846
      %v1135 = vunpack.c.l.b16 %v847
      %v1136 = vunpack.c.l.b16 %v848
      %v1137 = vunpack.c.l.b16 %v849
      %v1138 = vunpack.c.l.b16 %v850
      %v1139 = vunpack.c.l.b16 %v851
      %v1140 = vunpack.c.l.b16 %v852
      %v1141 = vunpack.c.l.b16 %v853
      %v1142 = vunpack.c.l.b16 %v854
      %v1143 = vunpack.c.l.b16 %v855
      %v1144 = vunpack.c.l.b16 %v856
      %v1145 = vunpack.c.l.b16 %v857
      %v1146 = vunpack.c.l.b16 %v858
      %v1147 = vunpack.c.l.b16 %v859
      %v1148 = vunpack.c.l.b16 %v860
      %v1149 = vunpack.c.l.b16 %v861
      %v1150 = vunpack.c.l.b16 %v862
      %v1151 = vunpack.c.l.b16 %v863
      %v1152 = vunpack.c.l.b16 %v864
      %v1153 = vunpack.c.l.b16 %v865
      %v1154 = vunpack.c.l.b16 %v866
      %v1155 = vunpack.c.l.b16 %v867
      %v1156 = vunpack.c.l.b16 %v868
      %v1157 = vunpack.c.l.b16 %v869
      %v1158 = vunpack.c.l.b16 %v870
      %v1159 = vunpack.c.l.b16 %v871
      %v1160 = vpack.c.b16 %v1017, %v1016
      %v1161 = vpack.c.b16 %v1019, %v1018
      %v1162 = vpack.c.b16 %v1021, %v1020
      %v1163 = vpack.c.b16 %v1023, %v1022
      %v1164 = vpack.c.b16 %v1025, %v1024
      %v1165 = vpack.c.b16 %v1027, %v1026
      %v1166 = vpack.c.b16 %v1029, %v1028
      %v1167 = vpack.c.b16 %v1031, %v1030
      %v1168 = vpack.c.b16 %v1033, %v1032
      %v1169 = vpack.c.b16 %v1035, %v1034
      %v1170 = vpack.c.b16 %v1037, %v1036
      %v1171 = vpack.c.b16 %v1039, %v1038
      %v1172 = vpack.c.b16 %v1041, %v1040
      %v1173 = vpack.c.b16 %v1043, %v1042
      %v1174 = vpack.c.b16 %v1045, %v1044
      %v1175 = vpack.c.b16 %v1047, %v1046
      %v1176 = vpack.c.b16 %v1049, %v1048
      %v1177 = vpack.c.b16 %v1051, %v1050
      %v1178 = vpack.c.b16 %v1053, %v1052
      %v1179 = vpack.c.b16 %v1055, %v1054
      %v1180 = vpack.c.b16 %v1057, %v1056
      %v1181 = vpack.c.b16 %v1059, %v1058
      %v1182 = vpack.c.b16 %v1061, %v1060
      %v1183 = vpack.c.b16 %v1063, %v1062
      %v1184 = vpack.c.b16 %v1065, %v1064
      %v1185 = vpack.c.b16 %v1067, %v1066
      %v1186 = vpack.c.b16 %v1069, %v1068
      %v1187 = vpack.c.b16 %v1071, %v1070
      %v1188 = vpack.c.b16 %v1073, %v1072
      %v1189 = vpack.c.b16 %v1075, %v1074
      %v1190 = vpack.c.b16 %v1077, %v1076
      %v1191 = vpack.c.b16 %v1079, %v1078
      %v1192 = vpack.c.b16 %v1081, %v1080
      %v1193 = vpack.c.b16 %v1083, %v1082
      %v1194 = vpack.c.b16 %v1085, %v1084
      %v1195 = vpack.c.b16 %v1087, %v1086
      %v1196 = vpack.c.b16 %v1089, %v1088
      %v1197 = vpack.c.b16 %v1091, %v1090
      %v1198 = vpack.c.b16 %v1093, %v1092
      %v1199 = vpack.c.b16 %v1095, %v1094
      %v1200 = vpack.c.b16 %v1097, %v1096
      %v1201 = vpack.c.b16 %v1099, %v1098
      %v1202 = vpack.c.b16 %v1101, %v1100
      %v1203 = vpack.c.b16 %v1103, %v1102
      %v1204 = vpack.c.b16 %v1105, %v1104
      %v1205 = vpack.c.b16 %v1107, %v1106
      %v1206 = vpack.c.b16 %v1109, %v1108
      %v1207 = vpack.c.b16 %v1111, %v1110
      %v1208 = vpack.c.b16 %v1113, %v1112
      %v1209 = vpack.c.b16 %v1115, %v1114
      %v1210 = vpack.c.b16 %v1117, %v1116
      %v1211 = vpack.c.b16 %v1119, %v1118
      %v1212 = vpack.c.b16 %v1121, %v1120
      %v1213 = vpack.c.b16 %v1123, %v1122
      %v1214 = vpack.c.b16 %v1125, %v1124
      %v1215 = vpack.c.b16 %v1127, %v1126
      %v1216 = vpack.c.b16 %v1129, %v1128
      %v1217 = vpack.c.b16 %v1131, %v1130
      %v1218 = vpack.c.b16 %v1133, %v1132
      %v1219 = vpack.c.b16 %v1135, %v1134
      %v1220 = vpack.c.b16 %v1137, %v1136
      %v1221 = vpack.c.b16 %v1139, %v1138
      %v1222 = vpack.c.b16 %v1141, %v1140
      %v1223 = vpack.c.b16 %v1143, %v1142
      %v1224 = vpack.c.b16 %v1145, %v1144
      %v1225 = vpack.c.b16 %v1147, %v1146
      %v1226 = vpack.c.b16 %v1149, %v1148
      %v1227 = vpack.c.b16 %v1151, %v1150
      %v1228 = vpack.c.b16 %v1153, %v1152
      %v1229 = vpack.c.b16 %v1155, %v1154
      %v1230 = vpack.c.b16 %v1157, %v1156
      %v1231 = vpack.c.b16 %v1159, %v1158
      %1304 = vmatprep.subr.bf16.mxu0 0
      %1305 = vmatpush1.bf16.msra.mxu0 %v1160
      %1306 = vmatprep.subr.bf16.mxu0 0
      %1307 = vmatpush1.bf16.msra.mxu0 %v1161
      %1308 = vmatprep.subr.bf16.mxu0 0
      %1309 = vmatpush1.bf16.msra.mxu0 %v1162
      %1310 = vmatprep.subr.bf16.mxu0 0
      %1311 = vmatpush1.bf16.msra.mxu0 %v1163
      %1312 = vmatprep.subr.bf16.mxu0 0
      %1313 = vmatpush1.bf16.msra.mxu0 %v1164
      %1314 = vmatprep.subr.bf16.mxu0 0
      %1315 = vmatpush1.bf16.msra.mxu0 %v1165
      %1316 = vmatprep.subr.bf16.mxu0 0
      %1317 = vmatpush1.bf16.msra.mxu0 %v1166
      %1318 = vmatprep.subr.bf16.mxu0 0
      %1319 = vmatpush1.bf16.msra.mxu0 %v1167
      %1320 = vmatprep.subr.bf16.mxu0 0
      %1321 = vmatpush1.bf16.msra.mxu0 %v1168
      %1322 = vmatprep.subr.bf16.mxu0 0
      %1323 = vmatpush1.bf16.msra.mxu0 %v1169
      %1324 = vmatprep.subr.bf16.mxu0 0
      %1325 = vmatpush1.bf16.msra.mxu0 %v1170
      %1326 = vmatprep.subr.bf16.mxu0 0
      %1327 = vmatpush1.bf16.msra.mxu0 %v1171
      %1328 = vmatprep.subr.bf16.mxu0 0
      %1329 = vmatpush1.bf16.msra.mxu0 %v1172
      %1330 = vmatprep.subr.bf16.mxu0 0
      %1331 = vmatpush1.bf16.msra.mxu0 %v1173
      %1332 = vmatprep.subr.bf16.mxu0 0
      %1333 = vmatpush1.bf16.msra.mxu0 %v1174
      %1334 = vmatprep.subr.bf16.mxu0 0
      %1335 = vmatpush1.bf16.msra.mxu0 %v1175
      %1336 = vmatprep.mubr.bf16.mxu0 %v656
      %1337 = vmatmul.mubr.bf16.gmra.mrb[0].mxu0 %v624
      %v1338 = vpop.f32.mrb[0].mxu0
      %v1339 = vadd.f32 0.0, %v1338
      %v1340 = vpop.f32.mrb[0].mxu0
      %v1341 = vpop.f32.mrb[0].mxu0
      %v1342 = vadd.f32 0.0, %v1341
      %v1343 = vpop.f32.mrb[0].mxu0
      %1344 = vmatprep.mubr.bf16.mxu0 %v657
      %1345 = vmatmul.mubr.bf16.gmra.mrb[0].mxu0 %v625
      %v1346 = vpop.f32.mrb[0].mxu0
      %v1347 = vadd.f32 0.0, %v1346
      %v1348 = vpop.f32.mrb[0].mxu0
      %v1349 = vpop.f32.mrb[0].mxu0
      %v1350 = vadd.f32 0.0, %v1349
      %v1351 = vpop.f32.mrb[0].mxu0
      %1352 = vmatprep.mubr.bf16.mxu0 %v658
      %1353 = vmatmul.mubr.bf16.gmra.mrb[0].mxu0 %v626
      %v1354 = vpop.f32.mrb[0].mxu0
      %v1355 = vadd.f32 0.0, %v1354
      %v1356 = vpop.f32.mrb[0].mxu0
      %v1357 = vpop.f32.mrb[0].mxu0
      %v1358 = vadd.f32 0.0, %v1357
      %v1359 = vpop.f32.mrb[0].mxu0
      %1360 = vmatprep.mubr.bf16.mxu0 %v659
      %1361 = vmatmul.mubr.bf16.gmra.mrb[0].mxu0 %v627
      %v1362 = vpop.f32.mrb[0].mxu0
      %v1363 = vadd.f32 0.0, %v1362
      %v1364 = vpop.f32.mrb[0].mxu0
      %v1365 = vpop.f32.mrb[0].mxu0
      %v1366 = vadd.f32 0.0, %v1365
      %v1367 = vpop.f32.mrb[0].mxu0
      %1368 = vmatprep.mubr.bf16.mxu0 %v660
      %1369 = vmatmul.mubr.bf16.gmra.mrb[0].mxu0 %v628
      %v1370 = vpop.f32.mrb[0].mxu0
      %v1371 = vadd.f32 0.0, %v1370
      %v1372 = vpop.f32.mrb[0].mxu0
      %v1373 = vpop.f32.mrb[0].mxu0
      %v1374 = vadd.f32 0.0, %v1373
      %v1375 = vpop.f32.mrb[0].mxu0
      %1376 = vmatprep.mubr.bf16.mxu0 %v661
      %1377 = vmatmul.mubr.bf16.gmra.mrb[0].mxu0 %v629
      %v1378 = vpop.f32.mrb[0].mxu0
      %v1379 = vadd.f32 0.0, %v1378
      %v1380 = vpop.f32.mrb[0].mxu0
      %v1381 = vpop.f32.mrb[0].mxu0
      %v1382 = vadd.f32 0.0, %v1381
      %v1383 = vpop.f32.mrb[0].mxu0
      %1384 = vmatprep.mubr.bf16.mxu0 %v662
      %1385 = vmatmul.mubr.bf16.gmra.mrb[0].mxu0 %v630
      %v1386 = vpop.f32.mrb[0].mxu0
      %v1387 = vadd.f32 0.0, %v1386
      %v1388 = vpop.f32.mrb[0].mxu0
      %v1389 = vpop.f32.mrb[0].mxu0
      %v1390 = vadd.f32 0.0, %v1389
      %v1391 = vpop.f32.mrb[0].mxu0
      %1392 = vmatprep.mubr.bf16.mxu0 %v663
      %1393 = vmatmul.mubr.bf16.gmra.mrb[0].mxu0 %v631
      %v1394 = vpop.f32.mrb[0].mxu0
      %v1395 = vadd.f32 0.0, %v1394
      %v1396 = vpop.f32.mrb[0].mxu0
      %v1397 = vpop.f32.mrb[0].mxu0
      %v1398 = vadd.f32 0.0, %v1397
      %v1399 = vpop.f32.mrb[0].mxu0
      %1400 = vdwg.mxu0
      %1401 = vmatprep.subr.bf16.mxu0 0
      %1402 = vmatpush1.bf16.msra.mxu0 %v1176
      %1403 = vmatprep.subr.bf16.mxu0 0
      %1404 = vmatpush1.bf16.msra.mxu0 %v1177
      %1405 = vmatprep.subr.bf16.mxu0 0
      %1406 = vmatpush1.bf16.msra.mxu0 %v1178
      %1407 = vmatprep.subr.bf16.mxu0 0
      %1408 = vmatpush1.bf16.msra.mxu0 %v1179
      %1409 = vmatprep.subr.bf16.mxu0 0
      %1410 = vmatpush1.bf16.msra.mxu0 %v1180
      %1411 = vmatprep.subr.bf16.mxu0 0
      %1412 = vmatpush1.bf16.msra.mxu0 %v1181
      %1413 = vmatprep.subr.bf16.mxu0 0
      %1414 = vmatpush1.bf16.msra.mxu0 %v1182
      %1415 = vmatprep.subr.bf16.mxu0 0
      %1416 = vmatpush1.bf16.msra.mxu0 %v1183
      %1417 = vmatprep.subr.bf16.mxu0 0
      %1418 = vmatpush1.bf16.msra.mxu0 %v1184
      %1419 = vmatprep.subr.bf16.mxu0 0
      %1420 = vmatpush1.bf16.msra.mxu0 %v1185
      %1421 = vmatprep.subr.bf16.mxu0 0
      %1422 = vmatpush1.bf16.msra.mxu0 %v1186
      %1423 = vmatprep.subr.bf16.mxu0 0
      %1424 = vmatpush1.bf16.msra.mxu0 %v1187
      %1425 = vmatprep.subr.bf16.mxu0 0
      %1426 = vmatpush1.bf16.msra.mxu0 %v1188
      %1427 = vmatprep.subr.bf16.mxu0 0
      %1428 = vmatpush1.bf16.msra.mxu0 %v1189
      %1429 = vmatprep.subr.bf16.mxu0 0
      %1430 = vmatpush1.bf16.msra.mxu0 %v1190
      %1431 = vmatprep.subr.bf16.mxu0 0
      %1432 = vmatpush1.bf16.msra.mxu0 %v1191
      %1433 = vmatprep.mubr.bf16.mxu0 %v625
      %1434 = vmatmul.mubr.bf16.gmra.mrb[0].mxu0 %v688
      %v1435 = vpop.f32.mrb[0].mxu0
      %v1436 = vadd.f32 %v1339, %v1435
      %v1437 = vpop.f32.mrb[0].mxu0
      %v1438 = vpop.f32.mrb[0].mxu0
      %v1439 = vadd.f32 %v1342, %v1438
      %v1440 = vpop.f32.mrb[0].mxu0
      %1441 = vmatprep.mubr.bf16.mxu0 %v626
      %1442 = vmatmul.mubr.bf16.gmra.mrb[0].mxu0 %v689
      %v1443 = vpop.f32.mrb[0].mxu0
      %v1444 = vadd.f32 %v1347, %v1443
      %v1445 = vpop.f32.mrb[0].mxu0
      %v1446 = vpop.f32.mrb[0].mxu0
      %v1447 = vadd.f32 %v1350, %v1446
      %v1448 = vpop.f32.mrb[0].mxu0
      %1449 = vmatprep.mubr.bf16.mxu0 %v627
      %1450 = vmatmul.mubr.bf16.gmra.mrb[0].mxu0 %v690
      %v1451 = vpop.f32.mrb[0].mxu0
      %v1452 = vadd.f32 %v1355, %v1451
      %v1453 = vpop.f32.mrb[0].mxu0
      %v1454 = vpop.f32.mrb[0].mxu0
      %v1455 = vadd.f32 %v1358, %v1454
      %v1456 = vpop.f32.mrb[0].mxu0
      %1457 = vmatprep.mubr.bf16.mxu0 %v628
      %1458 = vmatmul.mubr.bf16.gmra.mrb[0].mxu0 %v691
      %v1459 = vpop.f32.mrb[0].mxu0
      %v1460 = vadd.f32 %v1363, %v1459
      %v1461 = vpop.f32.mrb[0].mxu0
      %v1462 = vpop.f32.mrb[0].mxu0
      %v1463 = vadd.f32 %v1366, %v1462
      %v1464 = vpop.f32.mrb[0].mxu0
      %1465 = vmatprep.mubr.bf16.mxu0 %v629
      %1466 = vmatmul.mubr.bf16.gmra.mrb[0].mxu0 %v692
      %v1467 = vpop.f32.mrb[0].mxu0
      %v1468 = vadd.f32 %v1371, %v1467
      %v1469 = vpop.f32.mrb[0].mxu0
      %v1470 = vpop.f32.mrb[0].mxu0
      %v1471 = vadd.f32 %v1374, %v1470
      %v1472 = vpop.f32.mrb[0].mxu0
      %1473 = vmatprep.mubr.bf16.mxu0 %v630
      %1474 = vmatmul.mubr.bf16.gmra.mrb[0].mxu0 %v693
      %v1475 = vpop.f32.mrb[0].mxu0
      %v1476 = vadd.f32 %v1379, %v1475
      %v1477 = vpop.f32.mrb[0].mxu0
      %v1478 = vpop.f32.mrb[0].mxu0
      %v1479 = vadd.f32 %v1382, %v1478
      %v1480 = vpop.f32.mrb[0].mxu0
      %1481 = vmatprep.mubr.bf16.mxu0 %v631
      %1482 = vmatmul.mubr.bf16.gmra.mrb[0].mxu0 %v694
      %v1483 = vpop.f32.mrb[0].mxu0
      %v1484 = vadd.f32 %v1387, %v1483
      %v1485 = vpop.f32.mrb[0].mxu0
      %v1486 = vpop.f32.mrb[0].mxu0
      %v1487 = vadd.f32 %v1390, %v1486
      %v1488 = vpop.f32.mrb[0].mxu0
      %1489 = vmatprep.mubr.bf16.mxu0 %v706
      %1490 = vmatmul.mubr.bf16.gmra.mrb[0].mxu0 %v695
      %v1491 = vpop.f32.mrb[0].mxu0
      %v1492 = vadd.f32 %v1395, %v1491
      %v1493 = vpop.f32.mrb[0].mxu0
      %v1494 = vpop.f32.mrb[0].mxu0
      %v1495 = vadd.f32 %v1398, %v1494
      %v1496 = vpop.f32.mrb[0].mxu0
      %1497 = vdwg.mxu0
      %1498 = vmatprep.subr.bf16.mxu0 0
      %1499 = vmatpush1.bf16.msra.mxu0 %v1192
      %1500 = vmatprep.subr.bf16.mxu0 0
      %1501 = vmatpush1.bf16.msra.mxu0 %v1193
      %1502 = vmatprep.subr.bf16.mxu0 0
      %1503 = vmatpush1.bf16.msra.mxu0 %v1194
      %1504 = vmatprep.subr.bf16.mxu0 0
      %1505 = vmatpush1.bf16.msra.mxu0 %v1195
      %1506 = vmatprep.subr.bf16.mxu0 0
      %1507 = vmatpush1.bf16.msra.mxu0 %v1196
      %1508 = vmatprep.subr.bf16.mxu0 0
      %1509 = vmatpush1.bf16.msra.mxu0 %v1197
      %1510 = vmatprep.subr.bf16.mxu0 0
      %1511 = vmatpush1.bf16.msra.mxu0 %v1198
      %1512 = vmatprep.subr.bf16.mxu0 0
      %1513 = vmatpush1.bf16.msra.mxu0 %v1199
      %1514 = vmatprep.subr.bf16.mxu0 0
      %1515 = vmatpush1.bf16.msra.mxu0 %v1200
      %1516 = vmatprep.subr.bf16.mxu0 0
      %1517 = vmatpush1.bf16.msra.mxu0 %v1201
      %1518 = vmatprep.subr.bf16.mxu0 0
      %1519 = vmatpush1.bf16.msra.mxu0 %v1202
      %1520 = vmatprep.subr.bf16.mxu0 0
      %1521 = vmatpush1.bf16.msra.mxu0 %v1203
      %1522 = vmatprep.subr.bf16.mxu0 0
      %1523 = vmatpush1.bf16.msra.mxu0 %v1204
      %1524 = vmatprep.subr.bf16.mxu0 0
      %1525 = vmatpush1.bf16.msra.mxu0 %v1205
      %1526 = vmatprep.subr.bf16.mxu0 0
      %1527 = vmatpush1.bf16.msra.mxu0 %v1206
      %1528 = vmatprep.subr.bf16.mxu0 0
      %1529 = vmatpush1.bf16.msra.mxu0 %v1207
      %1530 = vmatprep.mubr.bf16.mxu0 %v689
      %1531 = vmatmul.mubr.bf16.gmra.mrb[0].mxu0 %v657
      %v1532 = vpop.f32.mrb[0].mxu0
      %v1533 = vadd.f32 %v1436, %v1532
      %v1534 = vpop.f32.mrb[0].mxu0
      %v1535 = vpop.f32.mrb[0].mxu0
      %v1536 = vadd.f32 %v1439, %v1535
      %v1537 = vpop.f32.mrb[0].mxu0
      %1538 = vmatprep.mubr.bf16.mxu0 %v690
      %1539 = vmatmul.mubr.bf16.gmra.mrb[0].mxu0 %v658
      %v1540 = vpop.f32.mrb[0].mxu0
      %v1541 = vadd.f32 %v1444, %v1540
      %v1542 = vpop.f32.mrb[0].mxu0
      %v1543 = vpop.f32.mrb[0].mxu0
      %v1544 = vadd.f32 %v1447, %v1543
      %v1545 = vpop.f32.mrb[0].mxu0
      %1546 = vmatprep.mubr.bf16.mxu0 %v691
      %1547 = vmatmul.mubr.bf16.gmra.mrb[0].mxu0 %v659
      %v1548 = vpop.f32.mrb[0].mxu0
      %v1549 = vadd.f32 %v1452, %v1548
      %v1550 = vpop.f32.mrb[0].mxu0
      %v1551 = vpop.f32.mrb[0].mxu0
      %v1552 = vadd.f32 %v1455, %v1551
      %v1553 = vpop.f32.mrb[0].mxu0
      %1554 = vmatprep.mubr.bf16.mxu0 %v692
      %1555 = vmatmul.mubr.bf16.gmra.mrb[0].mxu0 %v660
      %v1556 = vpop.f32.mrb[0].mxu0
      %v1557 = vadd.f32 %v1460, %v1556
      %v1558 = vpop.f32.mrb[0].mxu0
      %v1559 = vpop.f32.mrb[0].mxu0
      %v1560 = vadd.f32 %v1463, %v1559
      %v1561 = vpop.f32.mrb[0].mxu0
      %1562 = vmatprep.mubr.bf16.mxu0 %v693
      %1563 = vmatmul.mubr.bf16.gmra.mrb[0].mxu0 %v661
      %v1564 = vpop.f32.mrb[0].mxu0
      %v1565 = vadd.f32 %v1468, %v1564
      %v1566 = vpop.f32.mrb[0].mxu0
      %v1567 = vpop.f32.mrb[0].mxu0
      %v1568 = vadd.f32 %v1471, %v1567
      %v1569 = vpop.f32.mrb[0].mxu0
      %1570 = vmatprep.mubr.bf16.mxu0 %v694
      %1571 = vmatmul.mubr.bf16.gmra.mrb[0].mxu0 %v662
      %v1572 = vpop.f32.mrb[0].mxu0
      %v1573 = vadd.f32 %v1476, %v1572
      %v1574 = vpop.f32.mrb[0].mxu0
      %v1575 = vpop.f32.mrb[0].mxu0
      %v1576 = vadd.f32 %v1479, %v1575
      %v1577 = vpop.f32.mrb[0].mxu0
      %1578 = vmatprep.mubr.bf16.mxu0 %v695
      %1579 = vmatmul.mubr.bf16.gmra.mrb[0].mxu0 %v663
      %v1580 = vpop.f32.mrb[0].mxu0
      %v1581 = vadd.f32 %v1484, %v1580
      %v1582 = vpop.f32.mrb[0].mxu0
      %v1583 = vpop.f32.mrb[0].mxu0
      %v1584 = vadd.f32 %v1487, %v1583
      %v1585 = vpop.f32.mrb[0].mxu0
      %1586 = vmatprep.mubr.bf16.mxu0 %v714
      %1587 = vmatmul.mubr.bf16.gmra.mrb[0].mxu0 %v710
      %v1588 = vpop.f32.mrb[0].mxu0
      %v1589 = vadd.f32 %v1492, %v1588
      %v1590 = vpop.f32.mrb[0].mxu0
      %v1591 = vpop.f32.mrb[0].mxu0
      %v1592 = vadd.f32 %v1495, %v1591
      %v1593 = vpop.f32.mrb[0].mxu0
      %1594 = vdwg.mxu0
      %1595 = vmatprep.subr.bf16.mxu0 0
      %1596 = vmatpush1.bf16.msra.mxu0 %v1208
      %1597 = vmatprep.subr.bf16.mxu0 0
      %1598 = vmatpush1.bf16.msra.mxu0 %v1209
      %1599 = vmatprep.subr.bf16.mxu0 0
      %1600 = vmatpush1.bf16.msra.mxu0 %v1210
      %1601 = vmatprep.subr.bf16.mxu0 0
      %1602 = vmatpush1.bf16.msra.mxu0 %v1211
      %1603 = vmatprep.subr.bf16.mxu0 0
      %1604 = vmatpush1.bf16.msra.mxu0 %v1212
      %1605 = vmatprep.subr.bf16.mxu0 0
      %1606 = vmatpush1.bf16.msra.mxu0 %v1213
      %1607 = vmatprep.subr.bf16.mxu0 0
      %1608 = vmatpush1.bf16.msra.mxu0 %v1214
      %1609 = vmatprep.subr.bf16.mxu0 0
      %1610 = vmatpush1.bf16.msra.mxu0 %v1215
      %1611 = vmatprep.subr.bf16.mxu0 0
      %1612 = vmatpush1.bf16.msra.mxu0 %v1216
      %1613 = vmatprep.subr.bf16.mxu0 0
      %1614 = vmatpush1.bf16.msra.mxu0 %v1217
      %1615 = vmatprep.subr.bf16.mxu0 0
      %1616 = vmatpush1.bf16.msra.mxu0 %v1218
      %1617 = vmatprep.subr.bf16.mxu0 0
      %1618 = vmatpush1.bf16.msra.mxu0 %v1219
      %1619 = vmatprep.subr.bf16.mxu0 0
      %1620 = vmatpush1.bf16.msra.mxu0 %v1220
      %1621 = vmatprep.subr.bf16.mxu0 0
      %1622 = vmatpush1.bf16.msra.mxu0 %v1221
      %1623 = vmatprep.subr.bf16.mxu0 0
      %1624 = vmatpush1.bf16.msra.mxu0 %v1222
      %1625 = vmatprep.subr.bf16.mxu0 0
      %1626 = vmatpush1.bf16.msra.mxu0 %v1223
      %1627 = vmatprep.mubr.bf16.mxu0 %v658
      %1628 = vmatmul.mubr.bf16.gmra.mrb[0].mxu0 %v626
      %v1629 = vpop.f32.mrb[0].mxu0
      %v1630 = vadd.f32 %v1533, %v1629
      %v1631 = vpop.f32.mrb[0].mxu0
      %v1632 = vpop.f32.mrb[0].mxu0
      %v1633 = vadd.f32 %v1536, %v1632
      %v1634 = vpop.f32.mrb[0].mxu0
      %1635 = vmatprep.mubr.bf16.mxu0 %v659
      %1636 = vmatmul.mubr.bf16.gmra.mrb[0].mxu0 %v627
      %v1637 = vpop.f32.mrb[0].mxu0
      %v1638 = vadd.f32 %v1541, %v1637
      %v1639 = vpop.f32.mrb[0].mxu0
      %v1640 = vpop.f32.mrb[0].mxu0
      %v1641 = vadd.f32 %v1544, %v1640
      %v1642 = vpop.f32.mrb[0].mxu0
      %1643 = vmatprep.mubr.bf16.mxu0 %v660
      %1644 = vmatmul.mubr.bf16.gmra.mrb[0].mxu0 %v628
      %v1645 = vpop.f32.mrb[0].mxu0
      %v1646 = vadd.f32 %v1549, %v1645
      %v1647 = vpop.f32.mrb[0].mxu0
      %v1648 = vpop.f32.mrb[0].mxu0
      %v1649 = vadd.f32 %v1552, %v1648
      %v1650 = vpop.f32.mrb[0].mxu0
      %1651 = vmatprep.mubr.bf16.mxu0 %v661
      %1652 = vmatmul.mubr.bf16.gmra.mrb[0].mxu0 %v629
      %v1653 = vpop.f32.mrb[0].mxu0
      %v1654 = vadd.f32 %v1557, %v1653
      %v1655 = vpop.f32.mrb[0].mxu0
      %v1656 = vpop.f32.mrb[0].mxu0
      %v1657 = vadd.f32 %v1560, %v1656
      %v1658 = vpop.f32.mrb[0].mxu0
      %1659 = vmatprep.mubr.bf16.mxu0 %v662
      %1660 = vmatmul.mubr.bf16.gmra.mrb[0].mxu0 %v630
      %v1661 = vpop.f32.mrb[0].mxu0
      %v1662 = vadd.f32 %v1565, %v1661
      %v1663 = vpop.f32.mrb[0].mxu0
      %v1664 = vpop.f32.mrb[0].mxu0
      %v1665 = vadd.f32 %v1568, %v1664
      %v1666 = vpop.f32.mrb[0].mxu0
      %1667 = vmatprep.mubr.bf16.mxu0 %v663
      %1668 = vmatmul.mubr.bf16.gmra.mrb[0].mxu0 %v631
      %v1669 = vpop.f32.mrb[0].mxu0
      %v1670 = vadd.f32 %v1573, %v1669
      %v1671 = vpop.f32.mrb[0].mxu0
      %v1672 = vpop.f32.mrb[0].mxu0
      %v1673 = vadd.f32 %v1576, %v1672
      %v1674 = vpop.f32.mrb[0].mxu0
      %1675 = vmatprep.mubr.bf16.mxu0 %v710
      %1676 = vmatmul.mubr.bf16.gmra.mrb[0].mxu0 %v706
      %v1677 = vpop.f32.mrb[0].mxu0
      %v1678 = vadd.f32 %v1581, %v1677
      %v1679 = vpop.f32.mrb[0].mxu0
      %v1680 = vpop.f32.mrb[0].mxu0
      %v1681 = vadd.f32 %v1584, %v1680
      %v1682 = vpop.f32.mrb[0].mxu0
      %1683 = vmatprep.mubr.bf16.mxu0 %v722
      %1684 = vmatmul.mubr.bf16.gmra.mrb[0].mxu0 %v718
      %v1685 = vpop.f32.mrb[0].mxu0
      %v1686 = vadd.f32 %v1589, %v1685
      %v1687 = vpop.f32.mrb[0].mxu0
      %v1688 = vpop.f32.mrb[0].mxu0
      %v1689 = vadd.f32 %v1592, %v1688
      %v1690 = vpop.f32.mrb[0].mxu0
      %1691 = vdwg.mxu0
      %1692 = vmatprep.subr.bf16.mxu0 0
      %1693 = vmatpush1.bf16.msra.mxu0 %v1224
      %1694 = vmatprep.subr.bf16.mxu0 0
      %1695 = vmatpush1.bf16.msra.mxu0 %v1225
      %1696 = vmatprep.subr.bf16.mxu0 0
      %1697 = vmatpush1.bf16.msra.mxu0 %v1226
      %1698 = vmatprep.subr.bf16.mxu0 0
      %1699 = vmatpush1.bf16.msra.mxu0 %v1227
      %1700 = vmatprep.subr.bf16.mxu0 0
      %1701 = vmatpush1.bf16.msra.mxu0 %v1228
      %1702 = vmatprep.subr.bf16.mxu0 0
      %1703 = vmatpush1.bf16.msra.mxu0 %v1229
      %1704 = vmatprep.subr.bf16.mxu0 0
      %1705 = vmatpush1.bf16.msra.mxu0 %v1230
      %1706 = vmatprep.subr.bf16.mxu0 0
      %1707 = vmatpush1.bf16.msra.mxu0 %v1231
      %1708 = vmatprep.subr.bf16.mxu0 0
      %1709 = vmatpush1.bf16.msra.mxu0 0
      %1710 = vmatprep.subr.bf16.mxu0 0
      %1711 = vmatpush1.bf16.msra.mxu0 0
      %1712 = vmatprep.subr.bf16.mxu0 0
      %1713 = vmatpush1.bf16.msra.mxu0 0
      %1714 = vmatprep.subr.bf16.mxu0 0
      %1715 = vmatpush1.bf16.msra.mxu0 0
      %1716 = vmatprep.subr.bf16.mxu0 0
      %1717 = vmatpush1.bf16.msra.mxu0 0
      %1718 = vmatprep.subr.bf16.mxu0 0
      %1719 = vmatpush1.bf16.msra.mxu0 0
      %1720 = vmatprep.subr.bf16.mxu0 0
      %1721 = vmatpush1.bf16.msra.mxu0 0
      %1722 = vmatprep.subr.bf16.mxu0 0
      %1723 = vmatpush1.bf16.msra.mxu0 0
      %1724 = vmatprep.mubr.bf16.mxu0 0
      %1725 = vmatmul.mubr.bf16.gmra.mrb[0].mxu0 %v690
      %v1726 = vpop.f32.mrb[0].mxu0
      %v1727 = vadd.f32 %v1630, %v1726
      %v1728 = vpop.f32.mrb[0].mxu0
      %v1729 = vpop.f32.mrb[0].mxu0
      %v1730 = vadd.f32 %v1633, %v1729
      %v1731 = vpop.f32.mrb[0].mxu0
      %1732 = vmatprep.mubr.bf16.mxu0 0
      %1733 = vmatmul.mubr.bf16.gmra.mrb[0].mxu0 %v691
      %v1734 = vpop.f32.mrb[0].mxu0
      %v1735 = vadd.f32 %v1638, %v1734
      %v1736 = vpop.f32.mrb[0].mxu0
      %v1737 = vpop.f32.mrb[0].mxu0
      %v1738 = vadd.f32 %v1641, %v1737
      %v1739 = vpop.f32.mrb[0].mxu0
      %1740 = vmatprep.mubr.bf16.mxu0 0
      %1741 = vmatmul.mubr.bf16.gmra.mrb[0].mxu0 %v692
      %v1742 = vpop.f32.mrb[0].mxu0
      %v1743 = vadd.f32 %v1646, %v1742
      %v1744 = vpop.f32.mrb[0].mxu0
      %v1745 = vpop.f32.mrb[0].mxu0
      %v1746 = vadd.f32 %v1649, %v1745
      %v1747 = vpop.f32.mrb[0].mxu0
      %1748 = vmatprep.mubr.bf16.mxu0 0
      %1749 = vmatmul.mubr.bf16.gmra.mrb[0].mxu0 %v693
      %v1750 = vpop.f32.mrb[0].mxu0
      %v1751 = vadd.f32 %v1654, %v1750
      %v1752 = vpop.f32.mrb[0].mxu0
      %v1753 = vpop.f32.mrb[0].mxu0
      %v1754 = vadd.f32 %v1657, %v1753
      %v1755 = vpop.f32.mrb[0].mxu0
      %1756 = vmatprep.mubr.bf16.mxu0 0
      %1757 = vmatmul.mubr.bf16.gmra.mrb[0].mxu0 %v694
      %v1758 = vpop.f32.mrb[0].mxu0
      %v1759 = vadd.f32 %v1662, %v1758
      %v1760 = vpop.f32.mrb[0].mxu0
      %v1761 = vpop.f32.mrb[0].mxu0
      %v1762 = vadd.f32 %v1665, %v1761
      %v1763 = vpop.f32.mrb[0].mxu0
      %1764 = vmatprep.mubr.bf16.mxu0 0
      %1765 = vmatmul.mubr.bf16.gmra.mrb[0].mxu0 %v695
      %v1766 = vpop.f32.mrb[0].mxu0
      %v1767 = vadd.f32 %v1670, %v1766
      %v1768 = vpop.f32.mrb[0].mxu0
      %v1769 = vpop.f32.mrb[0].mxu0
      %v1770 = vadd.f32 %v1673, %v1769
      %v1771 = vpop.f32.mrb[0].mxu0
      %1772 = vmatprep.mubr.bf16.mxu0 0
      %1773 = vmatmul.mubr.bf16.gmra.mrb[0].mxu0 %v714
      %v1774 = vpop.f32.mrb[0].mxu0
      %v1775 = vadd.f32 %v1678, %v1774
      %v1776 = vpop.f32.mrb[0].mxu0
      %v1777 = vpop.f32.mrb[0].mxu0
      %v1778 = vadd.f32 %v1681, %v1777
      %v1779 = vpop.f32.mrb[0].mxu0
      %1780 = vmatprep.mubr.bf16.mxu0 0
      %1781 = vmatmul.mubr.bf16.gmra.mrb[0].mxu0 %v726
      %v1782 = vpop.f32.mrb[0].mxu0
      %v1783 = vadd.f32 %v1686, %v1782
      %v1784 = vpop.f32.mrb[0].mxu0
      %v1785 = vpop.f32.mrb[0].mxu0
      %v1786 = vadd.f32 %v1689, %v1785
      %v1787 = vpop.f32.mrb[0].mxu0
      %1788 = vdwg.mxu0
      %1789 = vst [vmem:[%s221] sm:$0xff] %v1727
      %1790 = vst [vmem:[%s221 + $0x8] sm:$0xff] %v1730
      %1791 = vst [vmem:[%s221 + $0x10] sm:$0xff] %v1735
      %1792 = vst [vmem:[%s221 + $0x18] sm:$0xff] %v1738
      %1793 = vst [vmem:[%s221 + $0x20] sm:$0xff] %v1743
      %1794 = vst [vmem:[%s221 + $0x28] sm:$0xff] %v1746
      %1795 = vst [vmem:[%s221 + $0x30] sm:$0xff] %v1751
      %1796 = vst [vmem:[%s221 + $0x38] sm:$0xff] %v1754
      %1797 = vst [vmem:[%s221 + $0x40] sm:$0xff] %v1759
      %1798 = vst [vmem:[%s221 + $0x48] sm:$0xff] %v1762
      %1799 = vst [vmem:[%s221 + $0x50] sm:$0xff] %v1767
      %1800 = vst [vmem:[%s221 + $0x58] sm:$0xff] %v1770
      %1801 = vst [vmem:[%s221 + $0x60] sm:$0xff] %v1775
      %1802 = vst [vmem:[%s221 + $0x68] sm:$0xff] %v1778
      %1803 = vst [vmem:[%s221 + $0x70] sm:$0xff] %v1783
      %1804 = vst [vmem:[%s221 + $0x78] sm:$0xff] %v1786
      %v1805 = vadd.f32 %v1727, %v1730
      %v1806 = vadd.f32 %v1805, %v1735
      %v1807 = vadd.f32 %v1806, %v1738
      %v1808 = vadd.f32 %v1807, %v1743
      %v1809 = vadd.f32 %v1808, %v1746
      %v1810 = vadd.f32 %v1809, %v1751
      %v1811 = vadd.f32 %v1810, %v1754
      %v1812 = vadd.f32 %v1811, %v1759
      %v1813 = vadd.f32 %v1812, %v1762
      %v1814 = vadd.f32 %v1813, %v1767
      %v1815 = vadd.f32 %v1814, %v1770
      %v1816 = vadd.f32 %v1815, %v1775
      %v1817 = vadd.f32 %v1816, %v1778
      %v1818 = vadd.f32 %v1817, %v1783
      %v1819 = vadd.f32 %v1818, %v1786
      %v1820 = vrot.slane %v1819, 4
      %v1821 = vadd.f32 %v1819, %v1820
      %v1822 = vrot.slane %v1821, 2
      %v1823 = vadd.f32 %v1821, %v1822
      %v1824 = vrot.slane %v1823, 1
      %v1825 = vadd.f32 %v1823, %v1824
      %v1826 = vmul.f32 %v1727, %v1727
      %v1827 = vmul.f32 %v1730, %v1730
      %v1828 = vmul.f32 %v1735, %v1735
      %v1829 = vmul.f32 %v1738, %v1738
      %v1830 = vmul.f32 %v1743, %v1743
      %v1831 = vmul.f32 %v1746, %v1746
      %v1832 = vmul.f32 %v1751, %v1751
      %v1833 = vmul.f32 %v1754, %v1754
      %v1834 = vmul.f32 %v1759, %v1759
      %v1835 = vmul.f32 %v1762, %v1762
      %v1836 = vmul.f32 %v1767, %v1767
      %v1837 = vmul.f32 %v1770, %v1770
      %v1838 = vmul.f32 %v1775, %v1775
      %v1839 = vmul.f32 %v1778, %v1778
      %v1840 = vmul.f32 %v1783, %v1783
      %v1841 = vmul.f32 %v1786, %v1786
      %v1842 = vadd.f32 %v1826, %v1827
      %v1843 = vadd.f32 %v1842, %v1828
      %v1844 = vadd.f32 %v1843, %v1829
      %v1845 = vadd.f32 %v1844, %v1830
      %v1846 = vadd.f32 %v1845, %v1831
      %v1847 = vadd.f32 %v1846, %v1832
      %v1848 = vadd.f32 %v1847, %v1833
      %v1849 = vadd.f32 %v1848, %v1834
      %v1850 = vadd.f32 %v1849, %v1835
      %v1851 = vadd.f32 %v1850, %v1836
      %v1852 = vadd.f32 %v1851, %v1837
      %v1853 = vadd.f32 %v1852, %v1838
      %v1854 = vadd.f32 %v1853, %v1839
      %v1855 = vadd.f32 %v1854, %v1840
      %v1856 = vadd.f32 %v1855, %v1841
      %v1857 = vrot.slane %v1856, 4
      %v1858 = vadd.f32 %v1856, %v1857
      %v1859 = vrot.slane %v1858, 2
      %v1860 = vadd.f32 %v1858, %v1859
      %v1861 = vrot.slane %v1860, 1
      %v1862 = vadd.f32 %v1860, %v1861
      %vm1863 = vcmask 1040384
      %v1864 = vsel %vm1863, %v1825, %v1862
      %1865 = vst [vmem:[%s230] sm:$0x3] %v1864
      %s1866 = smul.u32 8, %s20
      %p1867 = scmp.lt.s32.totalorder %s19, 1
      %s1868 = scalar_select %p1867, %s19, 1
      %p1869 = scmp.lt.s32.totalorder %s1866, 15
      %s1870 = scalar_select %p1869, %s1866, 15
      %s1871 = smul.addr %s1870, 2
      %s1872 = smul.addr %s1868, 32
      %s1873 = sadd.s32 %s1871, %s1872
      %s1874 = smul.addr %s1873, 8
      %s1875 = scalar_lea.vmem %s2, %s1874
      %p1876 = scmp.lt.s32.totalorder %s19, 1
      %s1877 = scalar_select %p1876, %s19, 1
      %p1878 = scmp.lt.s32.totalorder %s20, 1
      %s1879 = scalar_select %p1878, %s20, 1
      %s1880 = smul.addr %s1877, 2
      %s1881 = sadd.s32 %s1879, %s1880
      %s1882 = smul.addr %s1881, 2
      %s1883 = scalar_lea.vmem %s3, %s1882
      // Predicated region
      $region29: #{resnet_block.3} parent=27 // pred_check
        %p1884 = pneg %p96
      $region30: #{resnet_block.3} parent=27 // pred_check_branch
        %1886 = sbr.rel (%p1884) target = $region32
      $region31: #{resnet_block.3} parent=27 // pred_region
        %s1887 = smul.u32 8, %s20
      $region32: #{resnet_block.3} parent=27 // pred_fallthru
        _
      // Predicated region
      $region33: #{resnet_block.3} parent=27 // pred_check
        %p1888 = pneg %p124
      $region34: #{resnet_block.3} parent=27 // pred_check_branch
        %1890 = sbr.rel (%p1888) target = $region36
      $region35: #{resnet_block.3} parent=27 // pred_region
        _
      $region36: #{resnet_block.3} parent=27 // pred_fallthru
        _
    $region28: #{resnet_block.3} parent=5 // pred_fallthru
      _
    %p1891 = scmp.le.s32.totalorder 2, %s10
    // Predicated region
    $region37: #{resnet_block.3} parent=5 // pred_check
      %p1892 = pneg %p1891
    $region38: #{resnet_block.3} parent=5 // pred_check_branch
      %1894 = sbr.rel (%p1892) target = $region40
    $region39: #{resnet_block.3} parent=5 // pred_region
      %s1895 = ssub.s32 %s10, 2
      // Predicated region
      $region41: #{resnet_block.3} parent=39 // pred_check
        %p1896 = pneg %p102
      $region42: #{resnet_block.3} parent=39 // pred_check_branch
        %1898 = sbr.rel (%p1896) target = $region44
      $region43: #{resnet_block.3} parent=39 // pred_region
        %s1899 = smul.u32 8, %s22
        %p1900 = scmp.lt.s32.totalorder %s21, 1
        %s1901 = scalar_select %p1900, %s21, 1
        %p1902 = scmp.lt.s32.totalorder %s1899, 15
        %s1903 = scalar_select %p1902, %s1899, 15
        %s1904 = smul.addr %s1903, 2
        %s1905 = smul.addr %s1901, 32
        %s1906 = sadd.s32 %s1904, %s1905
        %s1907 = smul.addr %s1906, 8
        %s1908 = scalar_lea.vmem %s2, %s1907
      $region44: #{resnet_block.3} parent=39 // pred_fallthru
        _
      // Predicated region
      $region45: #{resnet_block.3} parent=39 // pred_check
        %p1909 = pneg %p130
      $region46: #{resnet_block.3} parent=39 // pred_check_branch
        %1911 = sbr.rel (%p1909) target = $region48
      $region47: #{resnet_block.3} parent=39 // pred_region
        %p1912 = scmp.lt.s32.totalorder %s21, 1
        %s1913 = scalar_select %p1912, %s21, 1
        %p1914 = scmp.lt.s32.totalorder %s22, 1
        %s1915 = scalar_select %p1914, %s22, 1
        %s1916 = smul.addr %s1913, 2
        %s1917 = sadd.s32 %s1915, %s1916
        %s1918 = smul.addr %s1917, 2
        %s1919 = scalar_lea.vmem %s3, %s1918
      $region48: #{resnet_block.3} parent=39 // pred_fallthru
        _
    $region40: #{resnet_block.3} parent=5 // pred_fallthru
      _
  $region6: #{resnet_block.3} parent=0 // loop_footer
    %s14 = sadd.s32 1, %s10
  $region7: #{resnet_block.3} parent=0 // loop_footer_branch
    %9 = sbr.rel target = $region3
  $region8: #{resnet_block.3} parent=0 // loop_exit
    _

// kernel: resnet_block.4
$region0: #{resnet_block.4}
  #allocation0 [shape = 'u32[]', space=smem, size = 0x4, offset = 0x4, fixed_abs, tag = 'smem constant byte address 0x4 - core index']
  #allocation1 [shape = 'u32[144,128]{1,0:T(1,128)}', space=vmem, size = 0x12000, scoped, tag = 'internal scratch']
  %s0 = inlined_call_operand.vmem [shape: f32[2,2,10,18,128], index: 0, kind: input, shape index: {}]
  %s1 = inlined_call_operand.vmem [shape: f32[1,128], index: 1, kind: input, shape index: {}]
  %s2 = inlined_call_operand.vmem [shape: f32[1,128], index: 2, kind: input, shape index: {}]
  %s3 = inlined_call_operand.vmem [shape: bf16[1152,128], index: 3, kind: input, shape index: {}]
  %s4 = inlined_call_operand.vmem [shape: f32[2,16,16,128], index: 4, kind: output, shape index: {0}]
  %s5 = inlined_call_operand.vmem [shape: f32[2,2,2,128], index: 5, kind: output, shape index: {1}]
  %6 = xla_tuple %s4, %s5
  %s7 = sld [smem:[#allocation0]]
  $region57: #{resnet_block.4} parent=0
    _
  %s9 = ssub.s32 1, %s7
  %s10 = scalar_select 0, %s9, %s7
  loop: start=0, step=1, limit=6
  $region2: #{resnet_block.4} parent=0 // loop_pre_header
    _
  $region3: #{resnet_block.4} parent=0 // loop_header
    %s12 = sphi 0, %s16
    %p13 = scmp.ge.s32.totalorder %s12, 6
    %s19 = sphi 0, %s31
    %s20 = sphi 0, %s27
    %s21 = sphi 0, %s19
    %s22 = sphi 0, %s20
    %s23 = sphi 0, %s21
    %s24 = sphi 0, %s22
    %s36 = sphi 0, %s38
    %s39 = sphi 0, %s36
    %s40 = sphi 0, %s39
    %s56 = sphi 0, %s40
    %s60 = sphi 0, %s60
    %s62 = sphi 0, %s60
    %s63 = sphi 0, %s62
    %s77 = sphi 0, %s63
    %s81 = sphi 0, %s81
    %s83 = sphi 0, %s81
    %s84 = sphi 0, %s83
    %s98 = sphi 0, %s84
    %s102 = sphi 0, %s102
    %s104 = sphi 0, %s102
    %s105 = sphi 0, %s104
    %s119 = sphi 0, %s105
    %s127 = sphi 0, %s129
    %s130 = sphi 0, %s127
    %s131 = sphi 0, %s130
    %s147 = sphi 0, %s131
    %s155 = sphi 0, %s157
    %s158 = sphi 0, %s155
    %s159 = sphi 0, %s158
    %s175 = sphi 0, %s159
  $region4: #{resnet_block.4} parent=0 // loop_header_branch
    %15 = sbr.rel (%p13) target = $region8
  $region5: #{resnet_block.4} parent=0 // loop_body
    %s17 = ssub.s32 %s12, 1
    %s18 = ssub.s32 %s12, 2
    %s25 = sadd.s32 1, %s20
    %p26 = scmp.ge.s32.totalorder %s25, 2
    %s27 = scalar_select %p26, 0, %s25
    %s28 = sadd.s32 1, %s19
    %s29 = scalar_select %p26, %s28, %s19
    %p30 = scmp.ge.s32.totalorder %s29, 2
    %s31 = scalar_select %p30, 0, %s29
    %s32 = ssub.s32 %s19, %s31
    %s33 = ssub.s32 %s20, %s27
    %s34 = sor.u32 %s32, %s33
    %p35 = scmp.eq.s32.totalorder %s34, 0
    %s37 = sadd.s32 %s36, 1
    %s38 = scalar_select %p35, %s36, %s37
    %p41 = pneg %p35
    %p42 = scmp.eq.s32.totalorder %s12, 3
    %p43 = por %p41, %p42
    %p44 = scmp.ne.s32.totalorder %s36, %s39
    %p45 = scmp.eq.s32.totalorder %s12, 0
    %p46 = por %p44, %p45
    %p47 = scmp.ne.s32.totalorder %s36, %s39
    %p48 = scmp.eq.s32.totalorder %s17, 3
    %p49 = por %p47, %p48
    %p50 = scmp.ne.s32.totalorder %s39, %s40
    %p51 = scmp.eq.s32.totalorder %s17, 0
    %p52 = por %p50, %p51
    %p53 = scmp.ne.s32.totalorder %s39, %s40
    %p54 = scmp.eq.s32.totalorder %s18, 3
    %p55 = por %p53, %p54
    %p57 = scmp.ne.s32.totalorder %s40, %s56
    %p58 = scmp.eq.s32.totalorder %s18, 0
    %p59 = por %p57, %p58
    %s61 = sadd.s32 %s60, 1
    %p64 = scmp.eq.s32.totalorder %s12, 3
    %p65 = scmp.ne.s32.totalorder %s60, %s62
    %p66 = scmp.eq.s32.totalorder %s12, 0
    %p67 = por %p65, %p66
    %p68 = scmp.ne.s32.totalorder %s60, %s62
    %p69 = scmp.eq.s32.totalorder %s17, 3
    %p70 = por %p68, %p69
    %p71 = scmp.ne.s32.totalorder %s62, %s63
    %p72 = scmp.eq.s32.totalorder %s17, 0
    %p73 = por %p71, %p72
    %p74 = scmp.ne.s32.totalorder %s62, %s63
    %p75 = scmp.eq.s32.totalorder %s18, 3
    %p76 = por %p74, %p75
    %p78 = scmp.ne.s32.totalorder %s63, %s77
    %p79 = scmp.eq.s32.totalorder %s18, 0
    %p80 = por %p78, %p79
    %s82 = sadd.s32 %s81, 1
    %p85 = scmp.eq.s32.totalorder %s12, 3
    %p86 = scmp.ne.s32.totalorder %s81, %s83
    %p87 = scmp.eq.s32.totalorder %s12, 0
    %p88 = por %p86, %p87
    %p89 = scmp.ne.s32.totalorder %s81, %s83
    %p90 = scmp.eq.s32.totalorder %s17, 3
    %p91 = por %p89, %p90
    %p92 = scmp.ne.s32.totalorder %s83, %s84
    %p93 = scmp.eq.s32.totalorder %s17, 0
    %p94 = por %p92, %p93
    %p95 = scmp.ne.s32.totalorder %s83, %s84
    %p96 = scmp.eq.s32.totalorder %s18, 3
    %p97 = por %p95, %p96
    %p99 = scmp.ne.s32.totalorder %s84, %s98
    %p100 = scmp.eq.s32.totalorder %s18, 0
    %p101 = por %p99, %p100
    %s103 = sadd.s32 %s102, 1
    %p106 = scmp.eq.s32.totalorder %s12, 3
    %p107 = scmp.ne.s32.totalorder %s102, %s104
    %p108 = scmp.eq.s32.totalorder %s12, 0
    %p109 = por %p107, %p108
    %p110 = scmp.ne.s32.totalorder %s102, %s104
    %p111 = scmp.eq.s32.totalorder %s17, 3
    %p112 = por %p110, %p111
    %p113 = scmp.ne.s32.totalorder %s104, %s105
    %p114 = scmp.eq.s32.totalorder %s17, 0
    %p115 = por %p113, %p114
    %p116 = scmp.ne.s32.totalorder %s104, %s105
    %p117 = scmp.eq.s32.totalorder %s18, 3
    %p118 = por %p116, %p117
    %p120 = scmp.ne.s32.totalorder %s105, %s119
    %p121 = scmp.eq.s32.totalorder %s18, 0
    %p122 = por %p120, %p121
    %s123 = ssub.s32 %s19, %s31
    %s124 = ssub.s32 %s20, %s27
    %s125 = sor.u32 %s123, %s124
    %p126 = scmp.eq.s32.totalorder %s125, 0
    %s128 = sadd.s32 %s127, 1
    %s129 = scalar_select %p126, %s127, %s128
    %p132 = pneg %p126
    %p133 = scmp.eq.s32.totalorder %s12, 3
    %p134 = por %p132, %p133
    %p135 = scmp.ne.s32.totalorder %s127, %s130
    %p136 = scmp.eq.s32.totalorder %s12, 0
    %p137 = por %p135, %p136
    %p138 = scmp.ne.s32.totalorder %s127, %s130
    %p139 = scmp.eq.s32.totalorder %s17, 3
    %p140 = por %p138, %p139
    %p141 = scmp.ne.s32.totalorder %s130, %s131
    %p142 = scmp.eq.s32.totalorder %s17, 0
    %p143 = por %p141, %p142
    %p144 = scmp.ne.s32.totalorder %s130, %s131
    %p145 = scmp.eq.s32.totalorder %s18, 3
    %p146 = por %p144, %p145
    %p148 = scmp.ne.s32.totalorder %s131, %s147
    %p149 = scmp.eq.s32.totalorder %s18, 0
    %p150 = por %p148, %p149
    %s151 = ssub.s32 %s19, %s31
    %s152 = ssub.s32 %s20, %s27
    %s153 = sor.u32 %s151, %s152
    %p154 = scmp.eq.s32.totalorder %s153, 0
    %s156 = sadd.s32 %s155, 1
    %s157 = scalar_select %p154, %s155, %s156
    %p160 = pneg %p154
    %p161 = scmp.eq.s32.totalorder %s12, 3
    %p162 = por %p160, %p161
    %p163 = scmp.ne.s32.totalorder %s155, %s158
    %p164 = scmp.eq.s32.totalorder %s12, 0
    %p165 = por %p163, %p164
    %p166 = scmp.ne.s32.totalorder %s155, %s158
    %p167 = scmp.eq.s32.totalorder %s17, 3
    %p168 = por %p166, %p167
    %p169 = scmp.ne.s32.totalorder %s158, %s159
    %p170 = scmp.eq.s32.totalorder %s17, 0
    %p171 = por %p169, %p170
    %p172 = scmp.ne.s32.totalorder %s158, %s159
    %p173 = scmp.eq.s32.totalorder %s18, 3
    %p174 = por %p172, %p173
    %p176 = scmp.ne.s32.totalorder %s159, %s175
    %p177 = scmp.eq.s32.totalorder %s18, 0
    %p178 = por %p176, %p177
    %p179 = scmp.le.s32.totalorder 1, %s12
    %p180 = scmp.lt.s32.totalorder %s12, 5
    %p181 = pnand %p179, %p180
    %p182 = pneg %p181
    // Predicated region
    $region9: #{resnet_block.4} parent=5 // pred_check
      _
    $region10: #{resnet_block.4} parent=5 // pred_check_branch
      %184 = sbr.rel (%p181) target = $region12
    $region11: #{resnet_block.4} parent=5 // pred_region
      %s185 = ssub.s32 %s12, 1
      // Predicated region
      $region13: #{resnet_block.4} parent=11 // pred_check
        %p186 = pneg %p73
      $region14: #{resnet_block.4} parent=11 // pred_check_branch
        %188 = sbr.rel (%p186) target = $region16
      $region15: #{resnet_block.4} parent=11 // pred_region
        _
      $region16: #{resnet_block.4} parent=11 // pred_fallthru
        _
      // Predicated region
      $region17: #{resnet_block.4} parent=11 // pred_check
        %p189 = pneg %p94
      $region18: #{resnet_block.4} parent=11 // pred_check_branch
        %191 = sbr.rel (%p189) target = $region20
      $region19: #{resnet_block.4} parent=11 // pred_region
        _
      $region20: #{resnet_block.4} parent=11 // pred_fallthru
        _
      // Predicated region
      $region21: #{resnet_block.4} parent=11 // pred_check
        %p192 = pneg %p115
      $region22: #{resnet_block.4} parent=11 // pred_check_branch
        %194 = sbr.rel (%p192) target = $region24
      $region23: #{resnet_block.4} parent=11 // pred_region
        _
      $region24: #{resnet_block.4} parent=11 // pred_fallthru
        _
    $region12: #{resnet_block.4} parent=5 // pred_fallthru
      _
    %p195 = scmp.lt.s32.totalorder %s12, 4
    // Predicated region
    $region25: #{resnet_block.4} parent=5 // pred_check
      %p196 = pneg %p195
    $region26: #{resnet_block.4} parent=5 // pred_check_branch
      %198 = sbr.rel (%p196) target = $region28
    $region27: #{resnet_block.4} parent=5 // pred_region
      // Predicated region
      $region29: #{resnet_block.4} parent=27 // pred_check
        %p199 = pneg %p46
      $region30: #{resnet_block.4} parent=27 // pred_check_branch
        %201 = sbr.rel (%p199) target = $region32
      $region31: #{resnet_block.4} parent=27 // pred_region
        %p202 = scmp.lt.s32.totalorder %s19, 1
        %s203 = scalar_select %p202, %s19, 1
        %p204 = scmp.lt.s32.totalorder %s20, 1
        %s205 = scalar_select %p204, %s20, 1
        %s206 = smul.addr %s205, 30
        %s207 = smul.addr %s203, 60
        %s208 = sadd.s32 %s206, %s207
        %s209 = smul.addr %s208, 8
        %s210 = scalar_lea.vmem %s0, %s209
      $region32: #{resnet_block.4} parent=27 // pred_fallthru
        _
    $region28: #{resnet_block.4} parent=5 // pred_fallthru
      _
    %p211 = scmp.le.s32.totalorder 1, %s12
    %p212 = scmp.lt.s32.totalorder %s12, 5
    %p213 = pnand %p211, %p212
    %p214 = pneg %p213
    // Predicated region
    $region33: #{resnet_block.4} parent=5 // pred_check
      _
    $region34: #{resnet_block.4} parent=5 // pred_check_branch
      %216 = sbr.rel (%p213) target = $region36
    $region35: #{resnet_block.4} parent=5 // pred_region
      %s217 = ssub.s32 %s12, 1
      %p218 = scmp.lt.s32.totalorder %s21, 1
      %s219 = scalar_select %p218, %s21, 1
      %p220 = scmp.lt.s32.totalorder %s22, 1
      %s221 = scalar_select %p220, %s22, 1
      %s222 = smul.addr %s221, 30
      %s223 = smul.addr %s219, 60
      %s224 = sadd.s32 %s222, %s223
      %s225 = smul.addr %s224, 8
      %s226 = scalar_lea.vmem %s0, %s225
      %p227 = pneg %p52
      %p228 = pneg %p49
      %p229 = pneg %p73
      %p230 = pneg %p70
      %p231 = pneg %p94
      %p232 = pneg %p91
      %p233 = pneg %p115
      %p234 = pneg %p112
      %p235 = pneg %p143
      %p236 = pneg %p140
      %s237 = smul.u32 8, %s22
      %p238 = scmp.lt.s32.totalorder %s21, 1
      %s239 = scalar_select %p238, %s21, 1
      %p240 = scmp.lt.s32.totalorder %s237, 15
      %s241 = scalar_select %p240, %s237, 15
      %s242 = smul.addr %s241, 2
      %s243 = smul.addr %s239, 32
      %s244 = sadd.s32 %s242, %s243
      %s245 = smul.addr %s244, 8
      %s246 = scalar_lea.vmem %s4, %s245
      %p247 = pneg %p171
      %p248 = pneg %p168
      %p249 = scmp.lt.s32.totalorder %s21, 1
      %s250 = scalar_select %p249, %s21, 1
      %p251 = scmp.lt.s32.totalorder %s22, 1
      %s252 = scalar_select %p251, %s22, 1
      %s253 = smul.addr %s250, 2
      %s254 = sadd.s32 %s252, %s253
      %s255 = smul.addr %s254, 2
      %s256 = scalar_lea.vmem %s5, %s255
      %p257 = scmp.lt.s32.totalorder %s21, 1
      %s258 = scalar_select %p257, %s21, 1
      %p259 = scmp.lt.s32.totalorder %s22, 1
      %s260 = scalar_select %p259, %s22, 1
      %s261 = smul.addr %s260, 30
      %s262 = smul.addr %s258, 60
      %s263 = sadd.s32 %s261, %s262
      %s264 = smul.addr %s263, 8
      %s265 = scalar_lea.vmem %s0, %s264
      %s266 = smul.u32 8, %s22
      %p267 = scmp.lt.s32.totalorder %s21, 1
      %s268 = scalar_select %p267, %s21, 1
      %p269 = scmp.lt.s32.totalorder %s266, 15
      %s270 = scalar_select %p269, %s266, 15
      %s271 = smul.addr %s270, 2
      %s272 = smul.addr %s268, 32
      %s273 = sadd.s32 %s271, %s272
      %s274 = smul.addr %s273, 8
      %s275 = scalar_lea.vmem %s4, %s274
      %s276 = smul.u32 8, %s22
      %p277 = scmp.lt.s32.totalorder %s21, 1
      %s278 = scalar_select %p277, %s21, 1
      %p279 = scmp.lt.s32.totalorder %s22, 1
      %s280 = scalar_select %p279, %s22, 1
      %s281 = smul.addr %s278, 2
      %s282 = sadd.s32 %s280, %s281
      %s283 = smul.addr %s282, 2
      %s284 = scalar_lea.vmem %s5, %s283
      %v286 = vld [vmem:[%s265] sm:$0xff]
      %v287 = vld [vmem:[%s265 + $0x8] sm:$0xff]
      %v288 = vld [vmem:[%s265 + $0x10] sm:$0x3]
      %v289 = vld [vmem:[%s265 + $0x18] sm:$0xff]
      %v290 = vld [vmem:[%s265 + $0x20] sm:$0xff]
      %v291 = vld [vmem:[%s265 + $0x28] sm:$0x3]
      %v292 = vld [vmem:[%s265 + $0x30] sm:$0xff]
      %v293 = vld [vmem:[%s265 + $0x38] sm:$0xff]
      %v294 = vld [vmem:[%s265 + $0x40] sm:$0x3]
      %v295 = vld [vmem:[%s265 + $0x48] sm:$0xff]
      %v296 = vld [vmem:[%s265 + $0x50] sm:$0xff]
      %v297 = vld [vmem:[%s265 + $0x58] sm:$0x3]
      %v298 = vld [vmem:[%s265 + $0x60] sm:$0xff]
      %v299 = vld [vmem:[%s265 + $0x68] sm:$0xff]
      %v300 = vld [vmem:[%s265 + $0x70] sm:$0x3]
      %v301 = vld [vmem:[%s265 + $0x78] sm:$0xff]
      %v302 = vld [vmem:[%s265 + $0x80] sm:$0xff]
      %v303 = vld [vmem:[%s265 + $0x88] sm:$0x3]
      %v304 = vld [vmem:[%s265 + $0x90] sm:$0xff]
      %v305 = vld [vmem:[%s265 + $0x98] sm:$0xff]
      %v306 = vld [vmem:[%s265 + $0xa0] sm:$0x3]
      %v307 = vld [vmem:[%s265 + $0xa8] sm:$0xff]
      %v308 = vld [vmem:[%s265 + $0xb0] sm:$0xff]
      %v309 = vld [vmem:[%s265 + $0xb8] sm:$0x3]
      %v310 = vld [vmem:[%s265 + $0xc0] sm:$0xff]
      %v311 = vld [vmem:[%s265 + $0xc8] sm:$0xff]
      %v312 = vld [vmem:[%s265 + $0xd0] sm:$0x3]
      %v313 = vld [vmem:[%s265 + $0xd8] sm:$0xff]
      %v314 = vld [vmem:[%s265 + $0xe0] sm:$0xff]
      %v315 = vld [vmem:[%s265 + $0xe8] sm:$0x3]
      %v316 = vld [vmem:[%s1] sm:$0x1]
      %v318 = vlaneseq
      %v319 = vshrl.u32 %v318, 7
      %v320 = vsub.s32 0, %v319
      %v321 = vrot.slane %v316, %v320
      %v323 = vmul.f32 %v286, %v321
      %v324 = vmul.f32 %v287, %v321
      %v325 = vmul.f32 %v288, %v321
      %v326 = vmul.f32 %v289, %v321
      %v327 = vmul.f32 %v290, %v321
      %v328 = vmul.f32 %v291, %v321
      %v329 = vmul.f32 %v292, %v321
      %v330 = vmul.f32 %v293, %v321
      %v331 = vmul.f32 %v294, %v321
      %v332 = vmul.f32 %v295, %v321
      %v333 = vmul.f32 %v296, %v321
      %v334 = vmul.f32 %v297, %v321
      %v335 = vmul.f32 %v298, %v321
      %v336 = vmul.f32 %v299, %v321
      %v337 = vmul.f32 %v300, %v321
      %v338 = vmul.f32 %v301, %v321
      %v339 = vmul.f32 %v302, %v321
      %v340 = vmul.f32 %v303, %v321
      %v341 = vmul.f32 %v304, %v321
      %v342 = vmul.f32 %v305, %v321
      %v343 = vmul.f32 %v306, %v321
      %v344 = vmul.f32 %v307, %v321
      %v345 = vmul.f32 %v308, %v321
      %v346 = vmul.f32 %v309, %v321
      %v347 = vmul.f32 %v310, %v321
      %v348 = vmul.f32 %v311, %v321
      %v349 = vmul.f32 %v312, %v321
      %v350 = vmul.f32 %v313, %v321
      %v351 = vmul.f32 %v314, %v321
      %v352 = vmul.f32 %v315, %v321
      %v353 = vld [vmem:[%s2] sm:$0x1]
      %v355 = vlaneseq
      %v356 = vshrl.u32 %v355, 7
      %v357 = vsub.s32 0, %v356
      %v358 = vrot.slane %v353, %v357
      %v360 = vadd.f32 %v323, %v358
      %v361 = vadd.f32 %v324, %v358
      %v362 = vadd.f32 %v325, %v358
      %v363 = vadd.f32 %v326, %v358
      %v364 = vadd.f32 %v327, %v358
      %v365 = vadd.f32 %v328, %v358
      %v366 = vadd.f32 %v329, %v358
      %v367 = vadd.f32 %v330, %v358
      %v368 = vadd.f32 %v331, %v358
      %v369 = vadd.f32 %v332, %v358
      %v370 = vadd.f32 %v333, %v358
      %v371 = vadd.f32 %v334, %v358
      %v372 = vadd.f32 %v335, %v358
      %v373 = vadd.f32 %v336, %v358
      %v374 = vadd.f32 %v337, %v358
      %v375 = vadd.f32 %v338, %v358
      %v376 = vadd.f32 %v339, %v358
      %v377 = vadd.f32 %v340, %v358
      %v378 = vadd.f32 %v341, %v358
      %v379 = vadd.f32 %v342, %v358
      %v380 = vadd.f32 %v343, %v358
      %v381 = vadd.f32 %v344, %v358
      %v382 = vadd.f32 %v345, %v358
      %v383 = vadd.f32 %v346, %v358
      %v384 = vadd.f32 %v347, %v358
      %v385 = vadd.f32 %v348, %v358
      %v386 = vadd.f32 %v349, %v358
      %v387 = vadd.f32 %v350, %v358
      %v388 = vadd.f32 %v351, %v358
      %v389 = vadd.f32 %v352, %v358
      %v390 = vmax.f32 %v360, 0.0
      %v391 = vmax.f32 %v361, 0.0
      %v392 = vmax.f32 %v362, 0.0
      %v393 = vmax.f32 %v363, 0.0
      %v394 = vmax.f32 %v364, 0.0
      %v395 = vmax.f32 %v365, 0.0
      %v396 = vmax.f32 %v366, 0.0
      %v397 = vmax.f32 %v367, 0.0
      %v398 = vmax.f32 %v368, 0.0
      %v399 = vmax.f32 %v369, 0.0
      %v400 = vmax.f32 %v370, 0.0
      %v401 = vmax.f32 %v371, 0.0
      %v402 = vmax.f32 %v372, 0.0
      %v403 = vmax.f32 %v373, 0.0
      %v404 = vmax.f32 %v374, 0.0
      %v405 = vmax.f32 %v375, 0.0
      %v406 = vmax.f32 %v376, 0.0
      %v407 = vmax.f32 %v377, 0.0
      %v408 = vmax.f32 %v378, 0.0
      %v409 = vmax.f32 %v379, 0.0
      %v410 = vmax.f32 %v380, 0.0
      %v411 = vmax.f32 %v381, 0.0
      %v412 = vmax.f32 %v382, 0.0
      %v413 = vmax.f32 %v383, 0.0
      %v414 = vmax.f32 %v384, 0.0
      %v415 = vmax.f32 %v385, 0.0
      %v416 = vmax.f32 %v386, 0.0
      %v417 = vmax.f32 %v387, 0.0
      %v418 = vmax.f32 %v388, 0.0
      %v419 = vmax.f32 %v389, 0.0
      %v420 = vpack.c.bf16 %v391, %v390
      %v421 = vpack.c.bf16 %v392, %v392
      %v422 = vpack.c.bf16 %v394, %v393
      %v423 = vpack.c.bf16 %v395, %v395
      %v424 = vpack.c.bf16 %v397, %v396
      %v425 = vpack.c.bf16 %v398, %v398
      %v426 = vpack.c.bf16 %v400, %v399
      %v427 = vpack.c.bf16 %v401, %v401
      %v428 = vpack.c.bf16 %v403, %v402
      %v429 = vpack.c.bf16 %v404, %v404
      %v430 = vpack.c.bf16 %v406, %v405
      %v431 = vpack.c.bf16 %v407, %v407
      %v432 = vpack.c.bf16 %v409, %v408
      %v433 = vpack.c.bf16 %v410, %v410
      %v434 = vpack.c.bf16 %v412, %v411
      %v435 = vpack.c.bf16 %v413, %v413
      %v436 = vpack.c.bf16 %v415, %v414
      %v437 = vpack.c.bf16 %v416, %v416
      %v438 = vpack.c.bf16 %v418, %v417
      %v439 = vpack.c.bf16 %v419, %v419
      %vm440 = vsmask.f32 7424
      %v442 = vshrl.u32 %v420, 16
      %v444 = vshll.u32 %v420, 16
      %v446 = vrot.slane %v444, 1
      %v447 = vor.u32 %v442, %v446
      %v449 = vshll.u32 %v421, 16
      %v451 = vrot.slane %v449, 1
      %v452 = vsel %vm440, %v447, %v451
      %v454 = vshrl.u32 %v422, 16
      %v456 = vshll.u32 %v422, 16
      %v458 = vrot.slane %v456, 1
      %v459 = vor.u32 %v454, %v458
      %v461 = vshll.u32 %v423, 16
      %v463 = vrot.slane %v461, 1
      %v464 = vsel %vm440, %v459, %v463
      %v466 = vshrl.u32 %v424, 16
      %v468 = vshll.u32 %v424, 16
      %v470 = vrot.slane %v468, 1
      %v471 = vor.u32 %v466, %v470
      %v473 = vshll.u32 %v425, 16
      %v475 = vrot.slane %v473, 1
      %v476 = vsel %vm440, %v471, %v475
      %v478 = vshrl.u32 %v426, 16
      %v480 = vshll.u32 %v426, 16
      %v482 = vrot.slane %v480, 1
      %v483 = vor.u32 %v478, %v482
      %v485 = vshll.u32 %v427, 16
      %v487 = vrot.slane %v485, 1
      %v488 = vsel %vm440, %v483, %v487
      %v490 = vshrl.u32 %v428, 16
      %v492 = vshll.u32 %v428, 16
      %v494 = vrot.slane %v492, 1
      %v495 = vor.u32 %v490, %v494
      %v497 = vshll.u32 %v429, 16
      %v499 = vrot.slane %v497, 1
      %v500 = vsel %vm440, %v495, %v499
      %v502 = vshrl.u32 %v430, 16
      %v504 = vshll.u32 %v430, 16
      %v506 = vrot.slane %v504, 1
      %v507 = vor.u32 %v502, %v506
      %v509 = vshll.u32 %v431, 16
      %v511 = vrot.slane %v509, 1
      %v512 = vsel %vm440, %v507, %v511
      %v514 = vshrl.u32 %v432, 16
      %v516 = vshll.u32 %v432, 16
      %v518 = vrot.slane %v516, 1
      %v519 = vor.u32 %v514, %v518
      %v521 = vshll.u32 %v433, 16
      %v523 = vrot.slane %v521, 1
      %v524 = vsel %vm440, %v519, %v523
      %v526 = vshrl.u32 %v434, 16
      %v528 = vshll.u32 %v434, 16
      %v530 = vrot.slane %v528, 1
      %v531 = vor.u32 %v526, %v530
      %v533 = vshll.u32 %v435, 16
      %v535 = vrot.slane %v533, 1
      %v536 = vsel %vm440, %v531, %v535
      %vm561 = vcmask 1046528
      %v562 = vrot.slane %v420, 1
      %v563 = vrot.slane %v421, 1
      %v564 = vsel %vm561, %v562, %v563
      %v565 = vrot.slane %v422, 1
      %v566 = vrot.slane %v423, 1
      %v567 = vsel %vm561, %v565, %v566
      %v568 = vrot.slane %v424, 1
      %v569 = vrot.slane %v425, 1
      %v570 = vsel %vm561, %v568, %v569
      %v571 = vrot.slane %v426, 1
      %v572 = vrot.slane %v427, 1
      %v573 = vsel %vm561, %v571, %v572
      %v574 = vrot.slane %v428, 1
      %v575 = vrot.slane %v429, 1
      %v576 = vsel %vm561, %v574, %v575
      %v577 = vrot.slane %v430, 1
      %v578 = vrot.slane %v431, 1
      %v579 = vsel %vm561, %v577, %v578
      %v580 = vrot.slane %v432, 1
      %v581 = vrot.slane %v433, 1
      %v582 = vsel %vm561, %v580, %v581
      %v583 = vrot.slane %v434, 1
      %v584 = vrot.slane %v435, 1
      %v585 = vsel %vm561, %v583, %v584
      %v595 = vshrl.u32 %v436, 16
      %v597 = vshll.u32 %v436, 16
      %v599 = vrot.slane %v597, 1
      %v600 = vor.u32 %v595, %v599
      %v602 = vshll.u32 %v437, 16
      %v604 = vrot.slane %v602, 1
      %v605 = vsel %vm440, %v600, %v604
      %v609 = vrot.slane %v436, 1
      %v610 = vrot.slane %v437, 1
      %v611 = vsel %vm561, %v609, %v610
      %v614 = vshrl.u32 %v438, 16
      %v616 = vshll.u32 %v438, 16
      %v618 = vrot.slane %v616, 1
      %v619 = vor.u32 %v614, %v618
      %v621 = vshll.u32 %v439, 16
      %v623 = vrot.slane %v621, 1
      %v624 = vsel %vm440, %v619, %v623
      %v628 = vrot.slane %v438, 1
      %v629 = vrot.slane %v439, 1
      %v630 = vsel %vm561, %v628, %v629
      %v632 = vld [vmem:[%s3] sm:$0xf]
      %v633 = vld [vmem:[%s3 + $0x4] sm:$0xf]
      %v634 = vld [vmem:[%s3 + $0x8] sm:$0xf]
      %v635 = vld [vmem:[%s3 + $0xc] sm:$0xf]
      %v636 = vld [vmem:[%s3 + $0x10] sm:$0xf]
      %v637 = vld [vmem:[%s3 + $0x14] sm:$0xf]
      %v638 = vld [vmem:[%s3 + $0x18] sm:$0xf]
      %v639 = vld [vmem:[%s3 + $0x1c] sm:$0xf]
      %v640 = vld [vmem:[%s3 + $0x20] sm:$0xf]
      %v641 = vld [vmem:[%s3 + $0x24] sm:$0xf]
      %v642 = vld [vmem:[%s3 + $0x28] sm:$0xf]
      %v643 = vld [vmem:[%s3 + $0x2c] sm:$0xf]
      %v644 = vld [vmem:[%s3 + $0x30] sm:$0xf]
      %v645 = vld [vmem:[%s3 + $0x34] sm:$0xf]
      %v646 = vld [vmem:[%s3 + $0x38] sm:$0xf]
      %v647 = vld [vmem:[%s3 + $0x3c] sm:$0xf]
      %v648 = vld [vmem:[%s3 + $0x40] sm:$0xf]
      %v649 = vld [vmem:[%s3 + $0x44] sm:$0xf]
      %v650 = vld [vmem:[%s3 + $0x48] sm:$0xf]
      %v651 = vld [vmem:[%s3 + $0x4c] sm:$0xf]
      %v652 = vld [vmem:[%s3 + $0x50] sm:$0xf]
      %v653 = vld [vmem:[%s3 + $0x54] sm:$0xf]
      %v654 = vld [vmem:[%s3 + $0x58] sm:$0xf]
      %v655 = vld [vmem:[%s3 + $0x5c] sm:$0xf]
      %v656 = vld [vmem:[%s3 + $0x60] sm:$0xf]
      %v657 = vld [vmem:[%s3 + $0x64] sm:$0xf]
      %v658 = vld [vmem:[%s3 + $0x68] sm:$0xf]
      %v659 = vld [vmem:[%s3 + $0x6c] sm:$0xf]
      %v660 = vld [vmem:[%s3 + $0x70] sm:$0xf]
      %v661 = vld [vmem:[%s3 + $0x74] sm:$0xf]
      %v662 = vld [vmem:[%s3 + $0x78] sm:$0xf]
      %v663 = vld [vmem:[%s3 + $0x7c] sm:$0xf]
      %v664 = vld [vmem:[%s3 + $0x80] sm:$0xf]
      %v665 = vld [vmem:[%s3 + $0x84] sm:$0xf]
      %v666 = vld [vmem:[%s3 + $0x88] sm:$0xf]
      %v667 = vld [vmem:[%s3 + $0x8c] sm:$0xf]
      %v668 = vld [vmem:[%s3 + $0x90] sm:$0xf]
      %v669 = vld [vmem:[%s3 + $0x94] sm:$0xf]
      %v670 = vld [vmem:[%s3 + $0x98] sm:$0xf]
      %v671 = vld [vmem:[%s3 + $0x9c] sm:$0xf]
      %v672 = vld [vmem:[%s3 + $0xa0] sm:$0xf]
      %v673 = vld [vmem:[%s3 + $0xa4] sm:$0xf]
      %v674 = vld [vmem:[%s3 + $0xa8] sm:$0xf]
      %v675 = vld [vmem:[%s3 + $0xac] sm:$0xf]
      %v676 = vld [vmem:[%s3 + $0xb0] sm:$0xf]
      %v677 = vld [vmem:[%s3 + $0xb4] sm:$0xf]
      %v678 = vld [vmem:[%s3 + $0xb8] sm:$0xf]
      %v679 = vld [vmem:[%s3 + $0xbc] sm:$0xf]
      %v680 = vld [vmem:[%s3 + $0xc0] sm:$0xf]
      %v681 = vld [vmem:[%s3 + $0xc4] sm:$0xf]
      %v682 = vld [vmem:[%s3 + $0xc8] sm:$0xf]
      %v683 = vld [vmem:[%s3 + $0xcc] sm:$0xf]
      %v684 = vld [vmem:[%s3 + $0xd0] sm:$0xf]
      %v685 = vld [vmem:[%s3 + $0xd4] sm:$0xf]
      %v686 = vld [vmem:[%s3 + $0xd8] sm:$0xf]
      %v687 = vld [vmem:[%s3 + $0xdc] sm:$0xf]
      %v688 = vld [vmem:[%s3 + $0xe0] sm:$0xf]
      %v689 = vld [vmem:[%s3 + $0xe4] sm:$0xf]
      %v690 = vld [vmem:[%s3 + $0xe8] sm:$0xf]
      %v691 = vld [vmem:[%s3 + $0xec] sm:$0xf]
      %v692 = vld [vmem:[%s3 + $0xf0] sm:$0xf]
      %v693 = vld [vmem:[%s3 + $0xf4] sm:$0xf]
      %v694 = vld [vmem:[%s3 + $0xf8] sm:$0xf]
      %v695 = vld [vmem:[%s3 + $0xfc] sm:$0xf]
      %v696 = vld [vmem:[%s3 + $0x100] sm:$0xf]
      %v697 = vld [vmem:[%s3 + $0x104] sm:$0xf]
      %v698 = vld [vmem:[%s3 + $0x108] sm:$0xf]
      %v699 = vld [vmem:[%s3 + $0x10c] sm:$0xf]
      %v700 = vld [vmem:[%s3 + $0x110] sm:$0xf]
      %v701 = vld [vmem:[%s3 + $0x114] sm:$0xf]
      %v702 = vld [vmem:[%s3 + $0x118] sm:$0xf]
      %v703 = vld [vmem:[%s3 + $0x11c] sm:$0xf]
      %v704 = vld [vmem:[%s3 + $0x120] sm:$0xf]
      %v705 = vld [vmem:[%s3 + $0x124] sm:$0xf]
      %v706 = vld [vmem:[%s3 + $0x128] sm:$0xf]
      %v707 = vld [vmem:[%s3 + $0x12c] sm:$0xf]
      %v708 = vld [vmem:[%s3 + $0x130] sm:$0xf]
      %v709 = vld [vmem:[%s3 + $0x134] sm:$0xf]
      %v710 = vld [vmem:[%s3 + $0x138] sm:$0xf]
      %v711 = vld [vmem:[%s3 + $0x13c] sm:$0xf]
      %v712 = vld [vmem:[%s3 + $0x140] sm:$0xf]
      %v713 = vld [vmem:[%s3 + $0x144] sm:$0xf]
      %v714 = vld [vmem:[%s3 + $0x148] sm:$0xf]
      %v715 = vld [vmem:[%s3 + $0x14c] sm:$0xf]
      %v716 = vld [vmem:[%s3 + $0x150] sm:$0xf]
      %v717 = vld [vmem:[%s3 + $0x154] sm:$0xf]
      %v718 = vld [vmem:[%s3 + $0x158] sm:$0xf]
      %v719 = vld [vmem:[%s3 + $0x15c] sm:$0xf]
      %v720 = vld [vmem:[%s3 + $0x160] sm:$0xf]
      %v721 = vld [vmem:[%s3 + $0x164] sm:$0xf]
      %v722 = vld [vmem:[%s3 + $0x168] sm:$0xf]
      %v723 = vld [vmem:[%s3 + $0x16c] sm:$0xf]
      %v724 = vld [vmem:[%s3 + $0x170] sm:$0xf]
      %v725 = vld [vmem:[%s3 + $0x174] sm:$0xf]
      %v726 = vld [vmem:[%s3 + $0x178] sm:$0xf]
      %v727 = vld [vmem:[%s3 + $0x17c] sm:$0xf]
      %v728 = vld [vmem:[%s3 + $0x180] sm:$0xf]
      %v729 = vld [vmem:[%s3 + $0x184] sm:$0xf]
      %v730 = vld [vmem:[%s3 + $0x188] sm:$0xf]
      %v731 = vld [vmem:[%s3 + $0x18c] sm:$0xf]
      %v732 = vld [vmem:[%s3 + $0x190] sm:$0xf]
      %v733 = vld [vmem:[%s3 + $0x194] sm:$0xf]
      %v734 = vld [vmem:[%s3 + $0x198] sm:$0xf]
      %v735 = vld [vmem:[%s3 + $0x19c] sm:$0xf]
      %v736 = vld [vmem:[%s3 + $0x1a0] sm:$0xf]
      %v737 = vld [vmem:[%s3 + $0x1a4] sm:$0xf]
      %v738 = vld [vmem:[%s3 + $0x1a8] sm:$0xf]
      %v739 = vld [vmem:[%s3 + $0x1ac] sm:$0xf]
      %v740 = vld [vmem:[%s3 + $0x1b0] sm:$0xf]
      %v741 = vld [vmem:[%s3 + $0x1b4] sm:$0xf]
      %v742 = vld [vmem:[%s3 + $0x1b8] sm:$0xf]
      %v743 = vld [vmem:[%s3 + $0x1bc] sm:$0xf]
      %v744 = vld [vmem:[%s3 + $0x1c0] sm:$0xf]
      %v745 = vld [vmem:[%s3 + $0x1c4] sm:$0xf]
      %v746 = vld [vmem:[%s3 + $0x1c8] sm:$0xf]
      %v747 = vld [vmem:[%s3 + $0x1cc] sm:$0xf]
      %v748 = vld [vmem:[%s3 + $0x1d0] sm:$0xf]
      %v749 = vld [vmem:[%s3 + $0x1d4] sm:$0xf]
      %v750 = vld [vmem:[%s3 + $0x1d8] sm:$0xf]
      %v751 = vld [vmem:[%s3 + $0x1dc] sm:$0xf]
      %v752 = vld [vmem:[%s3 + $0x1e0] sm:$0xf]
      %v753 = vld [vmem:[%s3 + $0x1e4] sm:$0xf]
      %v754 = vld [vmem:[%s3 + $0x1e8] sm:$0xf]
      %v755 = vld [vmem:[%s3 + $0x1ec] sm:$0xf]
      %v756 = vld [vmem:[%s3 + $0x1f0] sm:$0xf]
      %v757 = vld [vmem:[%s3 + $0x1f4] sm:$0xf]
      %v758 = vld [vmem:[%s3 + $0x1f8] sm:$0xf]
      %v759 = vld [vmem:[%s3 + $0x1fc] sm:$0xf]
      %v760 = vld [vmem:[%s3 + $0x200] sm:$0xf]
      %v761 = vld [vmem:[%s3 + $0x204] sm:$0xf]
      %v762 = vld [vmem:[%s3 + $0x208] sm:$0xf]
      %v763 = vld [vmem:[%s3 + $0x20c] sm:$0xf]
      %v764 = vld [vmem:[%s3 + $0x210] sm:$0xf]
      %v765 = vld [vmem:[%s3 + $0x214] sm:$0xf]
      %v766 = vld [vmem:[%s3 + $0x218] sm:$0xf]
      %v767 = vld [vmem:[%s3 + $0x21c] sm:$0xf]
      %v768 = vld [vmem:[%s3 + $0x220] sm:$0xf]
      %v769 = vld [vmem:[%s3 + $0x224] sm:$0xf]
      %v770 = vld [vmem:[%s3 + $0x228] sm:$0xf]
      %v771 = vld [vmem:[%s3 + $0x22c] sm:$0xf]
      %v772 = vld [vmem:[%s3 + $0x230] sm:$0xf]
      %v773 = vld [vmem:[%s3 + $0x234] sm:$0xf]
      %v774 = vld [vmem:[%s3 + $0x238] sm:$0xf]
      %v775 = vld [vmem:[%s3 + $0x23c] sm:$0xf]
      %v920 = vunpack.c.l.b16 %v632
      %v921 = vunpack.c.l.b16 %v633
      %v922 = vunpack.c.l.b16 %v634
      %v923 = vunpack.c.l.b16 %v635
      %v924 = vunpack.c.l.b16 %v636
      %v925 = vunpack.c.l.b16 %v637
      %v926 = vunpack.c.l.b16 %v638
      %v927 = vunpack.c.l.b16 %v639
      %v928 = vunpack.c.l.b16 %v640
      %v929 = vunpack.c.l.b16 %v641
      %v930 = vunpack.c.l.b16 %v642
      %v931 = vunpack.c.l.b16 %v643
      %v932 = vunpack.c.l.b16 %v644
      %v933 = vunpack.c.l.b16 %v645
      %v934 = vunpack.c.l.b16 %v646
      %v935 = vunpack.c.l.b16 %v647
      %v936 = vunpack.c.l.b16 %v648
      %v937 = vunpack.c.l.b16 %v649
      %v938 = vunpack.c.l.b16 %v650
      %v939 = vunpack.c.l.b16 %v651
      %v940 = vunpack.c.l.b16 %v652
      %v941 = vunpack.c.l.b16 %v653
      %v942 = vunpack.c.l.b16 %v654
      %v943 = vunpack.c.l.b16 %v655
      %v944 = vunpack.c.l.b16 %v656
      %v945 = vunpack.c.l.b16 %v657
      %v946 = vunpack.c.l.b16 %v658
      %v947 = vunpack.c.l.b16 %v659
      %v948 = vunpack.c.l.b16 %v660
      %v949 = vunpack.c.l.b16 %v661
      %v950 = vunpack.c.l.b16 %v662
      %v951 = vunpack.c.l.b16 %v663
      %v952 = vunpack.c.l.b16 %v664
      %v953 = vunpack.c.l.b16 %v665
      %v954 = vunpack.c.l.b16 %v666
      %v955 = vunpack.c.l.b16 %v667
      %v956 = vunpack.c.l.b16 %v668
      %v957 = vunpack.c.l.b16 %v669
      %v958 = vunpack.c.l.b16 %v670
      %v959 = vunpack.c.l.b16 %v671
      %v960 = vunpack.c.l.b16 %v672
      %v961 = vunpack.c.l.b16 %v673
      %v962 = vunpack.c.l.b16 %v674
      %v963 = vunpack.c.l.b16 %v675
      %v964 = vunpack.c.l.b16 %v676
      %v965 = vunpack.c.l.b16 %v677
      %v966 = vunpack.c.l.b16 %v678
      %v967 = vunpack.c.l.b16 %v679
      %v968 = vunpack.c.l.b16 %v680
      %v969 = vunpack.c.l.b16 %v681
      %v970 = vunpack.c.l.b16 %v682
      %v971 = vunpack.c.l.b16 %v683
      %v972 = vunpack.c.l.b16 %v684
      %v973 = vunpack.c.l.b16 %v685
      %v974 = vunpack.c.l.b16 %v686
      %v975 = vunpack.c.l.b16 %v687
      %v976 = vunpack.c.l.b16 %v688
      %v977 = vunpack.c.l.b16 %v689
      %v978 = vunpack.c.l.b16 %v690
      %v979 = vunpack.c.l.b16 %v691
      %v980 = vunpack.c.l.b16 %v692
      %v981 = vunpack.c.l.b16 %v693
      %v982 = vunpack.c.l.b16 %v694
      %v983 = vunpack.c.l.b16 %v695
      %v984 = vunpack.c.l.b16 %v696
      %v985 = vunpack.c.l.b16 %v697
      %v986 = vunpack.c.l.b16 %v698
      %v987 = vunpack.c.l.b16 %v699
      %v988 = vunpack.c.l.b16 %v700
      %v989 = vunpack.c.l.b16 %v701
      %v990 = vunpack.c.l.b16 %v702
      %v991 = vunpack.c.l.b16 %v703
      %v992 = vunpack.c.l.b16 %v704
      %v993 = vunpack.c.l.b16 %v705
      %v994 = vunpack.c.l.b16 %v706
      %v995 = vunpack.c.l.b16 %v707
      %v996 = vunpack.c.l.b16 %v708
      %v997 = vunpack.c.l.b16 %v709
      %v998 = vunpack.c.l.b16 %v710
      %v999 = vunpack.c.l.b16 %v711
      %v1000 = vunpack.c.l.b16 %v712
      %v1001 = vunpack.c.l.b16 %v713
      %v1002 = vunpack.c.l.b16 %v714
      %v1003 = vunpack.c.l.b16 %v715
      %v1004 = vunpack.c.l.b16 %v716
      %v1005 = vunpack.c.l.b16 %v717
      %v1006 = vunpack.c.l.b16 %v718
      %v1007 = vunpack.c.l.b16 %v719
      %v1008 = vunpack.c.l.b16 %v720
      %v1009 = vunpack.c.l.b16 %v721
      %v1010 = vunpack.c.l.b16 %v722
      %v1011 = vunpack.c.l.b16 %v723
      %v1012 = vunpack.c.l.b16 %v724
      %v1013 = vunpack.c.l.b16 %v725
      %v1014 = vunpack.c.l.b16 %v726
      %v1015 = vunpack.c.l.b16 %v727
      %v1016 = vunpack.c.l.b16 %v728
      %v1017 = vunpack.c.l.b16 %v729
      %v1018 = vunpack.c.l.b16 %v730
      %v1019 = vunpack.c.l.b16 %v731
      %v1020 = vunpack.c.l.b16 %v732
      %v1021 = vunpack.c.l.b16 %v733
      %v1022 = vunpack.c.l.b16 %v734
      %v1023 = vunpack.c.l.b16 %v735
      %v1024 = vunpack.c.l.b16 %v736
      %v1025 = vunpack.c.l.b16 %v737
      %v1026 = vunpack.c.l.b16 %v738
      %v1027 = vunpack.c.l.b16 %v739
      %v1028 = vunpack.c.l.b16 %v740
      %v1029 = vunpack.c.l.b16 %v741
      %v1030 = vunpack.c.l.b16 %v742
      %v1031 = vunpack.c.l.b16 %v743
      %v1032 = vunpack.c.l.b16 %v744
      %v1033 = vunpack.c.l.b16 %v745
      %v1034 = vunpack.c.l.b16 %v746
      %v1035 = vunpack.c.l.b16 %v747
      %v1036 = vunpack.c.l.b16 %v748
      %v1037 = vunpack.c.l.b16 %v749
      %v1038 = vunpack.c.l.b16 %v750
      %v1039 = vunpack.c.l.b16 %v751
      %v1040 = vunpack.c.l.b16 %v752
      %v1041 = vunpack.c.l.b16 %v753
      %v1042 = vunpack.c.l.b16 %v754
      %v1043 = vunpack.c.l.b16 %v755
      %v1044 = vunpack.c.l.b16 %v756
      %v1045 = vunpack.c.l.b16 %v757
      %v1046 = vunpack.c.l.b16 %v758
      %v1047 = vunpack.c.l.b16 %v759
      %v1048 = vunpack.c.l.b16 %v760
      %v1049 = vunpack.c.l.b16 %v761
      %v1050 = vunpack.c.l.b16 %v762
      %v1051 = vunpack.c.l.b16 %v763
      %v1052 = vunpack.c.l.b16 %v764
      %v1053 = vunpack.c.l.b16 %v765
      %v1054 = vunpack.c.l.b16 %v766
      %v1055 = vunpack.c.l.b16 %v767
      %v1056 = vunpack.c.l.b16 %v768
      %v1057 = vunpack.c.l.b16 %v769
      %v1058 = vunpack.c.l.b16 %v770
      %v1059 = vunpack.c.l.b16 %v771
      %v1060 = vunpack.c.l.b16 %v772
      %v1061 = vunpack.c.l.b16 %v773
      %v1062 = vunpack.c.l.b16 %v774
      %v1063 = vunpack.c.l.b16 %v775
      %v1064 = vpack.c.b16 %v921, %v920
      %v1065 = vpack.c.b16 %v923, %v922
      %v1066 = vpack.c.b16 %v925, %v924
      %v1067 = vpack.c.b16 %v927, %v926
      %v1068 = vpack.c.b16 %v929, %v928
      %v1069 = vpack.c.b16 %v931, %v930
      %v1070 = vpack.c.b16 %v933, %v932
      %v1071 = vpack.c.b16 %v935, %v934
      %v1072 = vpack.c.b16 %v937, %v936
      %v1073 = vpack.c.b16 %v939, %v938
      %v1074 = vpack.c.b16 %v941, %v940
      %v1075 = vpack.c.b16 %v943, %v942
      %v1076 = vpack.c.b16 %v945, %v944
      %v1077 = vpack.c.b16 %v947, %v946
      %v1078 = vpack.c.b16 %v949, %v948
      %v1079 = vpack.c.b16 %v951, %v950
      %v1080 = vpack.c.b16 %v953, %v952
      %v1081 = vpack.c.b16 %v955, %v954
      %v1082 = vpack.c.b16 %v957, %v956
      %v1083 = vpack.c.b16 %v959, %v958
      %v1084 = vpack.c.b16 %v961, %v960
      %v1085 = vpack.c.b16 %v963, %v962
      %v1086 = vpack.c.b16 %v965, %v964
      %v1087 = vpack.c.b16 %v967, %v966
      %v1088 = vpack.c.b16 %v969, %v968
      %v1089 = vpack.c.b16 %v971, %v970
      %v1090 = vpack.c.b16 %v973, %v972
      %v1091 = vpack.c.b16 %v975, %v974
      %v1092 = vpack.c.b16 %v977, %v976
      %v1093 = vpack.c.b16 %v979, %v978
      %v1094 = vpack.c.b16 %v981, %v980
      %v1095 = vpack.c.b16 %v983, %v982
      %v1096 = vpack.c.b16 %v985, %v984
      %v1097 = vpack.c.b16 %v987, %v986
      %v1098 = vpack.c.b16 %v989, %v988
      %v1099 = vpack.c.b16 %v991, %v990
      %v1100 = vpack.c.b16 %v993, %v992
      %v1101 = vpack.c.b16 %v995, %v994
      %v1102 = vpack.c.b16 %v997, %v996
      %v1103 = vpack.c.b16 %v999, %v998
      %v1104 = vpack.c.b16 %v1001, %v1000
      %v1105 = vpack.c.b16 %v1003, %v1002
      %v1106 = vpack.c.b16 %v1005, %v1004
      %v1107 = vpack.c.b16 %v1007, %v1006
      %v1108 = vpack.c.b16 %v1009, %v1008
      %v1109 = vpack.c.b16 %v1011, %v1010
      %v1110 = vpack.c.b16 %v1013, %v1012
      %v1111 = vpack.c.b16 %v1015, %v1014
      %v1112 = vpack.c.b16 %v1017, %v1016
      %v1113 = vpack.c.b16 %v1019, %v1018
      %v1114 = vpack.c.b16 %v1021, %v1020
      %v1115 = vpack.c.b16 %v1023, %v1022
      %v1116 = vpack.c.b16 %v1025, %v1024
      %v1117 = vpack.c.b16 %v1027, %v1026
      %v1118 = vpack.c.b16 %v1029, %v1028
      %v1119 = vpack.c.b16 %v1031, %v1030
      %v1120 = vpack.c.b16 %v1033, %v1032
      %v1121 = vpack.c.b16 %v1035, %v1034
      %v1122 = vpack.c.b16 %v1037, %v1036
      %v1123 = vpack.c.b16 %v1039, %v1038
      %v1124 = vpack.c.b16 %v1041, %v1040
      %v1125 = vpack.c.b16 %v1043, %v1042
      %v1126 = vpack.c.b16 %v1045, %v1044
      %v1127 = vpack.c.b16 %v1047, %v1046
      %v1128 = vpack.c.b16 %v1049, %v1048
      %v1129 = vpack.c.b16 %v1051, %v1050
      %v1130 = vpack.c.b16 %v1053, %v1052
      %v1131 = vpack.c.b16 %v1055, %v1054
      %v1132 = vpack.c.b16 %v1057, %v1056
      %v1133 = vpack.c.b16 %v1059, %v1058
      %v1134 = vpack.c.b16 %v1061, %v1060
      %v1135 = vpack.c.b16 %v1063, %v1062
      %1208 = vmatprep.subr.bf16.mxu0 0
      %1209 = vmatpush1.bf16.msra.mxu0 %v1064
      %1210 = vmatprep.subr.bf16.mxu0 0
      %1211 = vmatpush1.bf16.msra.mxu0 %v1065
      %1212 = vmatprep.subr.bf16.mxu0 0
      %1213 = vmatpush1.bf16.msra.mxu0 %v1066
      %1214 = vmatprep.subr.bf16.mxu0 0
      %1215 = vmatpush1.bf16.msra.mxu0 %v1067
      %1216 = vmatprep.subr.bf16.mxu0 0
      %1217 = vmatpush1.bf16.msra.mxu0 %v1068
      %1218 = vmatprep.subr.bf16.mxu0 0
      %1219 = vmatpush1.bf16.msra.mxu0 %v1069
      %1220 = vmatprep.subr.bf16.mxu0 0
      %1221 = vmatpush1.bf16.msra.mxu0 %v1070
      %1222 = vmatprep.subr.bf16.mxu0 0
      %1223 = vmatpush1.bf16.msra.mxu0 %v1071
      %1224 = vmatprep.subr.bf16.mxu0 0
      %1225 = vmatpush1.bf16.msra.mxu0 %v1072
      %1226 = vmatprep.subr.bf16.mxu0 0
      %1227 = vmatpush1.bf16.msra.mxu0 %v1073
      %1228 = vmatprep.subr.bf16.mxu0 0
      %1229 = vmatpush1.bf16.msra.mxu0 %v1074
      %1230 = vmatprep.subr.bf16.mxu0 0
      %1231 = vmatpush1.bf16.msra.mxu0 %v1075
      %1232 = vmatprep.subr.bf16.mxu0 0
      %1233 = vmatpush1.bf16.msra.mxu0 %v1076
      %1234 = vmatprep.subr.bf16.mxu0 0
      %1235 = vmatpush1.bf16.msra.mxu0 %v1077
      %1236 = vmatprep.subr.bf16.mxu0 0
      %1237 = vmatpush1.bf16.msra.mxu0 %v1078
      %1238 = vmatprep.subr.bf16.mxu0 0
      %1239 = vmatpush1.bf16.msra.mxu0 %v1079
      %1240 = vmatprep.mubr.bf16.mxu0 %v452
      %1241 = vmatmul.mubr.bf16.gmra.mrb[0].mxu0 %v420
      %v1242 = vpop.f32.mrb[0].mxu0
      %v1243 = vadd.f32 0.0, %v1242
      %v1244 = vpop.f32.mrb[0].mxu0
      %v1245 = vpop.f32.mrb[0].mxu0
      %v1246 = vadd.f32 0.0, %v1245
      %v1247 = vpop.f32.mrb[0].mxu0
      %1248 = vmatprep.mubr.bf16.mxu0 %v464
      %1249 = vmatmul.mubr.bf16.gmra.mrb[0].mxu0 %v422
      %v1250 = vpop.f32.mrb[0].mxu0
      %v1251 = vadd.f32 0.0, %v1250
      %v1252 = vpop.f32.mrb[0].mxu0
      %v1253 = vpop.f32.mrb[0].mxu0
      %v1254 = vadd.f32 0.0, %v1253
      %v1255 = vpop.f32.mrb[0].mxu0
      %1256 = vmatprep.mubr.bf16.mxu0 %v476
      %1257 = vmatmul.mubr.bf16.gmra.mrb[0].mxu0 %v424
      %v1258 = vpop.f32.mrb[0].mxu0
      %v1259 = vadd.f32 0.0, %v1258
      %v1260 = vpop.f32.mrb[0].mxu0
      %v1261 = vpop.f32.mrb[0].mxu0
      %v1262 = vadd.f32 0.0, %v1261
      %v1263 = vpop.f32.mrb[0].mxu0
      %1264 = vmatprep.mubr.bf16.mxu0 %v488
      %1265 = vmatmul.mubr.bf16.gmra.mrb[0].mxu0 %v426
      %v1266 = vpop.f32.mrb[0].mxu0
      %v1267 = vadd.f32 0.0, %v1266
      %v1268 = vpop.f32.mrb[0].mxu0
      %v1269 = vpop.f32.mrb[0].mxu0
      %v1270 = vadd.f32 0.0, %v1269
      %v1271 = vpop.f32.mrb[0].mxu0
      %1272 = vmatprep.mubr.bf16.mxu0 %v500
      %1273 = vmatmul.mubr.bf16.gmra.mrb[0].mxu0 %v428
      %v1274 = vpop.f32.mrb[0].mxu0
      %v1275 = vadd.f32 0.0, %v1274
      %v1276 = vpop.f32.mrb[0].mxu0
      %v1277 = vpop.f32.mrb[0].mxu0
      %v1278 = vadd.f32 0.0, %v1277
      %v1279 = vpop.f32.mrb[0].mxu0
      %1280 = vmatprep.mubr.bf16.mxu0 %v512
      %1281 = vmatmul.mubr.bf16.gmra.mrb[0].mxu0 %v430
      %v1282 = vpop.f32.mrb[0].mxu0
      %v1283 = vadd.f32 0.0, %v1282
      %v1284 = vpop.f32.mrb[0].mxu0
      %v1285 = vpop.f32.mrb[0].mxu0
      %v1286 = vadd.f32 0.0, %v1285
      %v1287 = vpop.f32.mrb[0].mxu0
      %1288 = vmatprep.mubr.bf16.mxu0 %v524
      %1289 = vmatmul.mubr.bf16.gmra.mrb[0].mxu0 %v432
      %v1290 = vpop.f32.mrb[0].mxu0
      %v1291 = vadd.f32 0.0, %v1290
      %v1292 = vpop.f32.mrb[0].mxu0
      %v1293 = vpop.f32.mrb[0].mxu0
      %v1294 = vadd.f32 0.0, %v1293
      %v1295 = vpop.f32.mrb[0].mxu0
      %1296 = vmatprep.mubr.bf16.mxu0 %v536
      %1297 = vmatmul.mubr.bf16.gmra.mrb[0].mxu0 %v434
      %v1298 = vpop.f32.mrb[0].mxu0
      %v1299 = vadd.f32 0.0, %v1298
      %v1300 = vpop.f32.mrb[0].mxu0
      %v1301 = vpop.f32.mrb[0].mxu0
      %v1302 = vadd.f32 0.0, %v1301
      %v1303 = vpop.f32.mrb[0].mxu0
      %1304 = vdwg.mxu0
      %1305 = vmatprep.subr.bf16.mxu0 0
      %1306 = vmatpush1.bf16.msra.mxu0 %v1080
      %1307 = vmatprep.subr.bf16.mxu0 0
      %1308 = vmatpush1.bf16.msra.mxu0 %v1081
      %1309 = vmatprep.subr.bf16.mxu0 0
      %1310 = vmatpush1.bf16.msra.mxu0 %v1082
      %1311 = vmatprep.subr.bf16.mxu0 0
      %1312 = vmatpush1.bf16.msra.mxu0 %v1083
      %1313 = vmatprep.subr.bf16.mxu0 0
      %1314 = vmatpush1.bf16.msra.mxu0 %v1084
      %1315 = vmatprep.subr.bf16.mxu0 0
      %1316 = vmatpush1.bf16.msra.mxu0 %v1085
      %1317 = vmatprep.subr.bf16.mxu0 0
      %1318 = vmatpush1.bf16.msra.mxu0 %v1086
      %1319 = vmatprep.subr.bf16.mxu0 0
      %1320 = vmatpush1.bf16.msra.mxu0 %v1087
      %1321 = vmatprep.subr.bf16.mxu0 0
      %1322 = vmatpush1.bf16.msra.mxu0 %v1088
      %1323 = vmatprep.subr.bf16.mxu0 0
      %1324 = vmatpush1.bf16.msra.mxu0 %v1089
      %1325 = vmatprep.subr.bf16.mxu0 0
      %1326 = vmatpush1.bf16.msra.mxu0 %v1090
      %1327 = vmatprep.subr.bf16.mxu0 0
      %1328 = vmatpush1.bf16.msra.mxu0 %v1091
      %1329 = vmatprep.subr.bf16.mxu0 0
      %1330 = vmatpush1.bf16.msra.mxu0 %v1092
      %1331 = vmatprep.subr.bf16.mxu0 0
      %1332 = vmatpush1.bf16.msra.mxu0 %v1093
      %1333 = vmatprep.subr.bf16.mxu0 0
      %1334 = vmatpush1.bf16.msra.mxu0 %v1094
      %1335 = vmatprep.subr.bf16.mxu0 0
      %1336 = vmatpush1.bf16.msra.mxu0 %v1095
      %1337 = vmatprep.mubr.bf16.mxu0 %v422
      %1338 = vmatmul.mubr.bf16.gmra.mrb[0].mxu0 %v564
      %v1339 = vpop.f32.mrb[0].mxu0
      %v1340 = vadd.f32 %v1243, %v1339
      %v1341 = vpop.f32.mrb[0].mxu0
      %v1342 = vpop.f32.mrb[0].mxu0
      %v1343 = vadd.f32 %v1246, %v1342
      %v1344 = vpop.f32.mrb[0].mxu0
      %1345 = vmatprep.mubr.bf16.mxu0 %v424
      %1346 = vmatmul.mubr.bf16.gmra.mrb[0].mxu0 %v567
      %v1347 = vpop.f32.mrb[0].mxu0
      %v1348 = vadd.f32 %v1251, %v1347
      %v1349 = vpop.f32.mrb[0].mxu0
      %v1350 = vpop.f32.mrb[0].mxu0
      %v1351 = vadd.f32 %v1254, %v1350
      %v1352 = vpop.f32.mrb[0].mxu0
      %1353 = vmatprep.mubr.bf16.mxu0 %v426
      %1354 = vmatmul.mubr.bf16.gmra.mrb[0].mxu0 %v570
      %v1355 = vpop.f32.mrb[0].mxu0
      %v1356 = vadd.f32 %v1259, %v1355
      %v1357 = vpop.f32.mrb[0].mxu0
      %v1358 = vpop.f32.mrb[0].mxu0
      %v1359 = vadd.f32 %v1262, %v1358
      %v1360 = vpop.f32.mrb[0].mxu0
      %1361 = vmatprep.mubr.bf16.mxu0 %v428
      %1362 = vmatmul.mubr.bf16.gmra.mrb[0].mxu0 %v573
      %v1363 = vpop.f32.mrb[0].mxu0
      %v1364 = vadd.f32 %v1267, %v1363
      %v1365 = vpop.f32.mrb[0].mxu0
      %v1366 = vpop.f32.mrb[0].mxu0
      %v1367 = vadd.f32 %v1270, %v1366
      %v1368 = vpop.f32.mrb[0].mxu0
      %1369 = vmatprep.mubr.bf16.mxu0 %v430
      %1370 = vmatmul.mubr.bf16.gmra.mrb[0].mxu0 %v576
      %v1371 = vpop.f32.mrb[0].mxu0
      %v1372 = vadd.f32 %v1275, %v1371
      %v1373 = vpop.f32.mrb[0].mxu0
      %v1374 = vpop.f32.mrb[0].mxu0
      %v1375 = vadd.f32 %v1278, %v1374
      %v1376 = vpop.f32.mrb[0].mxu0
      %1377 = vmatprep.mubr.bf16.mxu0 %v432
      %1378 = vmatmul.mubr.bf16.gmra.mrb[0].mxu0 %v579
      %v1379 = vpop.f32.mrb[0].mxu0
      %v1380 = vadd.f32 %v1283, %v1379
      %v1381 = vpop.f32.mrb[0].mxu0
      %v1382 = vpop.f32.mrb[0].mxu0
      %v1383 = vadd.f32 %v1286, %v1382
      %v1384 = vpop.f32.mrb[0].mxu0
      %1385 = vmatprep.mubr.bf16.mxu0 %v434
      %1386 = vmatmul.mubr.bf16.gmra.mrb[0].mxu0 %v582
      %v1387 = vpop.f32.mrb[0].mxu0
      %v1388 = vadd.f32 %v1291, %v1387
      %v1389 = vpop.f32.mrb[0].mxu0
      %v1390 = vpop.f32.mrb[0].mxu0
      %v1391 = vadd.f32 %v1294, %v1390
      %v1392 = vpop.f32.mrb[0].mxu0
      %1393 = vmatprep.mubr.bf16.mxu0 %v436
      %1394 = vmatmul.mubr.bf16.gmra.mrb[0].mxu0 %v585
      %v1395 = vpop.f32.mrb[0].mxu0
      %v1396 = vadd.f32 %v1299, %v1395
      %v1397 = vpop.f32.mrb[0].mxu0
      %v1398 = vpop.f32.mrb[0].mxu0
      %v1399 = vadd.f32 %v1302, %v1398
      %v1400 = vpop.f32.mrb[0].mxu0
      %1401 = vdwg.mxu0
      %1402 = vmatprep.subr.bf16.mxu0 0
      %1403 = vmatpush1.bf16.msra.mxu0 %v1096
      %1404 = vmatprep.subr.bf16.mxu0 0
      %1405 = vmatpush1.bf16.msra.mxu0 %v1097
      %1406 = vmatprep.subr.bf16.mxu0 0
      %1407 = vmatpush1.bf16.msra.mxu0 %v1098
      %1408 = vmatprep.subr.bf16.mxu0 0
      %1409 = vmatpush1.bf16.msra.mxu0 %v1099
      %1410 = vmatprep.subr.bf16.mxu0 0
      %1411 = vmatpush1.bf16.msra.mxu0 %v1100
      %1412 = vmatprep.subr.bf16.mxu0 0
      %1413 = vmatpush1.bf16.msra.mxu0 %v1101
      %1414 = vmatprep.subr.bf16.mxu0 0
      %1415 = vmatpush1.bf16.msra.mxu0 %v1102
      %1416 = vmatprep.subr.bf16.mxu0 0
      %1417 = vmatpush1.bf16.msra.mxu0 %v1103
      %1418 = vmatprep.subr.bf16.mxu0 0
      %1419 = vmatpush1.bf16.msra.mxu0 %v1104
      %1420 = vmatprep.subr.bf16.mxu0 0
      %1421 = vmatpush1.bf16.msra.mxu0 %v1105
      %1422 = vmatprep.subr.bf16.mxu0 0
      %1423 = vmatpush1.bf16.msra.mxu0 %v1106
      %1424 = vmatprep.subr.bf16.mxu0 0
      %1425 = vmatpush1.bf16.msra.mxu0 %v1107
      %1426 = vmatprep.subr.bf16.mxu0 0
      %1427 = vmatpush1.bf16.msra.mxu0 %v1108
      %1428 = vmatprep.subr.bf16.mxu0 0
      %1429 = vmatpush1.bf16.msra.mxu0 %v1109
      %1430 = vmatprep.subr.bf16.mxu0 0
      %1431 = vmatpush1.bf16.msra.mxu0 %v1110
      %1432 = vmatprep.subr.bf16.mxu0 0
      %1433 = vmatpush1.bf16.msra.mxu0 %v1111
      %1434 = vmatprep.mubr.bf16.mxu0 %v567
      %1435 = vmatmul.mubr.bf16.gmra.mrb[0].mxu0 %v464
      %v1436 = vpop.f32.mrb[0].mxu0
      %v1437 = vadd.f32 %v1340, %v1436
      %v1438 = vpop.f32.mrb[0].mxu0
      %v1439 = vpop.f32.mrb[0].mxu0
      %v1440 = vadd.f32 %v1343, %v1439
      %v1441 = vpop.f32.mrb[0].mxu0
      %1442 = vmatprep.mubr.bf16.mxu0 %v570
      %1443 = vmatmul.mubr.bf16.gmra.mrb[0].mxu0 %v476
      %v1444 = vpop.f32.mrb[0].mxu0
      %v1445 = vadd.f32 %v1348, %v1444
      %v1446 = vpop.f32.mrb[0].mxu0
      %v1447 = vpop.f32.mrb[0].mxu0
      %v1448 = vadd.f32 %v1351, %v1447
      %v1449 = vpop.f32.mrb[0].mxu0
      %1450 = vmatprep.mubr.bf16.mxu0 %v573
      %1451 = vmatmul.mubr.bf16.gmra.mrb[0].mxu0 %v488
      %v1452 = vpop.f32.mrb[0].mxu0
      %v1453 = vadd.f32 %v1356, %v1452
      %v1454 = vpop.f32.mrb[0].mxu0
      %v1455 = vpop.f32.mrb[0].mxu0
      %v1456 = vadd.f32 %v1359, %v1455
      %v1457 = vpop.f32.mrb[0].mxu0
      %1458 = vmatprep.mubr.bf16.mxu0 %v576
      %1459 = vmatmul.mubr.bf16.gmra.mrb[0].mxu0 %v500
      %v1460 = vpop.f32.mrb[0].mxu0
      %v1461 = vadd.f32 %v1364, %v1460
      %v1462 = vpop.f32.mrb[0].mxu0
      %v1463 = vpop.f32.mrb[0].mxu0
      %v1464 = vadd.f32 %v1367, %v1463
      %v1465 = vpop.f32.mrb[0].mxu0
      %1466 = vmatprep.mubr.bf16.mxu0 %v579
      %1467 = vmatmul.mubr.bf16.gmra.mrb[0].mxu0 %v512
      %v1468 = vpop.f32.mrb[0].mxu0
      %v1469 = vadd.f32 %v1372, %v1468
      %v1470 = vpop.f32.mrb[0].mxu0
      %v1471 = vpop.f32.mrb[0].mxu0
      %v1472 = vadd.f32 %v1375, %v1471
      %v1473 = vpop.f32.mrb[0].mxu0
      %1474 = vmatprep.mubr.bf16.mxu0 %v582
      %1475 = vmatmul.mubr.bf16.gmra.mrb[0].mxu0 %v524
      %v1476 = vpop.f32.mrb[0].mxu0
      %v1477 = vadd.f32 %v1380, %v1476
      %v1478 = vpop.f32.mrb[0].mxu0
      %v1479 = vpop.f32.mrb[0].mxu0
      %v1480 = vadd.f32 %v1383, %v1479
      %v1481 = vpop.f32.mrb[0].mxu0
      %1482 = vmatprep.mubr.bf16.mxu0 %v585
      %1483 = vmatmul.mubr.bf16.gmra.mrb[0].mxu0 %v536
      %v1484 = vpop.f32.mrb[0].mxu0
      %v1485 = vadd.f32 %v1388, %v1484
      %v1486 = vpop.f32.mrb[0].mxu0
      %v1487 = vpop.f32.mrb[0].mxu0
      %v1488 = vadd.f32 %v1391, %v1487
      %v1489 = vpop.f32.mrb[0].mxu0
      %1490 = vmatprep.mubr.bf16.mxu0 %v611
      %1491 = vmatmul.mubr.bf16.gmra.mrb[0].mxu0 %v605
      %v1492 = vpop.f32.mrb[0].mxu0
      %v1493 = vadd.f32 %v1396, %v1492
      %v1494 = vpop.f32.mrb[0].mxu0
      %v1495 = vpop.f32.mrb[0].mxu0
      %v1496 = vadd.f32 %v1399, %v1495
      %v1497 = vpop.f32.mrb[0].mxu0
      %1498 = vdwg.mxu0
      %1499 = vmatprep.subr.bf16.mxu0 0
      %1500 = vmatpush1.bf16.msra.mxu0 %v1112
      %1501 = vmatprep.subr.bf16.mxu0 0
      %1502 = vmatpush1.bf16.msra.mxu0 %v1113
      %1503 = vmatprep.subr.bf16.mxu0 0
      %1504 = vmatpush1.bf16.msra.mxu0 %v1114
      %1505 = vmatprep.subr.bf16.mxu0 0
      %1506 = vmatpush1.bf16.msra.mxu0 %v1115
      %1507 = vmatprep.subr.bf16.mxu0 0
      %1508 = vmatpush1.bf16.msra.mxu0 %v1116
      %1509 = vmatprep.subr.bf16.mxu0 0
      %1510 = vmatpush1.bf16.msra.mxu0 %v1117
      %1511 = vmatprep.subr.bf16.mxu0 0
      %1512 = vmatpush1.bf16.msra.mxu0 %v1118
      %1513 = vmatprep.subr.bf16.mxu0 0
      %1514 = vmatpush1.bf16.msra.mxu0 %v1119
      %1515 = vmatprep.subr.bf16.mxu0 0
      %1516 = vmatpush1.bf16.msra.mxu0 %v1120
      %1517 = vmatprep.subr.bf16.mxu0 0
      %1518 = vmatpush1.bf16.msra.mxu0 %v1121
      %1519 = vmatprep.subr.bf16.mxu0 0
      %1520 = vmatpush1.bf16.msra.mxu0 %v1122
      %1521 = vmatprep.subr.bf16.mxu0 0
      %1522 = vmatpush1.bf16.msra.mxu0 %v1123
      %1523 = vmatprep.subr.bf16.mxu0 0
      %1524 = vmatpush1.bf16.msra.mxu0 %v1124
      %1525 = vmatprep.subr.bf16.mxu0 0
      %1526 = vmatpush1.bf16.msra.mxu0 %v1125
      %1527 = vmatprep.subr.bf16.mxu0 0
      %1528 = vmatpush1.bf16.msra.mxu0 %v1126
      %1529 = vmatprep.subr.bf16.mxu0 0
      %1530 = vmatpush1.bf16.msra.mxu0 %v1127
      %1531 = vmatprep.mubr.bf16.mxu0 %v476
      %1532 = vmatmul.mubr.bf16.gmra.mrb[0].mxu0 %v424
      %v1533 = vpop.f32.mrb[0].mxu0
      %v1534 = vadd.f32 %v1437, %v1533
      %v1535 = vpop.f32.mrb[0].mxu0
      %v1536 = vpop.f32.mrb[0].mxu0
      %v1537 = vadd.f32 %v1440, %v1536
      %v1538 = vpop.f32.mrb[0].mxu0
      %1539 = vmatprep.mubr.bf16.mxu0 %v488
      %1540 = vmatmul.mubr.bf16.gmra.mrb[0].mxu0 %v426
      %v1541 = vpop.f32.mrb[0].mxu0
      %v1542 = vadd.f32 %v1445, %v1541
      %v1543 = vpop.f32.mrb[0].mxu0
      %v1544 = vpop.f32.mrb[0].mxu0
      %v1545 = vadd.f32 %v1448, %v1544
      %v1546 = vpop.f32.mrb[0].mxu0
      %1547 = vmatprep.mubr.bf16.mxu0 %v500
      %1548 = vmatmul.mubr.bf16.gmra.mrb[0].mxu0 %v428
      %v1549 = vpop.f32.mrb[0].mxu0
      %v1550 = vadd.f32 %v1453, %v1549
      %v1551 = vpop.f32.mrb[0].mxu0
      %v1552 = vpop.f32.mrb[0].mxu0
      %v1553 = vadd.f32 %v1456, %v1552
      %v1554 = vpop.f32.mrb[0].mxu0
      %1555 = vmatprep.mubr.bf16.mxu0 %v512
      %1556 = vmatmul.mubr.bf16.gmra.mrb[0].mxu0 %v430
      %v1557 = vpop.f32.mrb[0].mxu0
      %v1558 = vadd.f32 %v1461, %v1557
      %v1559 = vpop.f32.mrb[0].mxu0
      %v1560 = vpop.f32.mrb[0].mxu0
      %v1561 = vadd.f32 %v1464, %v1560
      %v1562 = vpop.f32.mrb[0].mxu0
      %1563 = vmatprep.mubr.bf16.mxu0 %v524
      %1564 = vmatmul.mubr.bf16.gmra.mrb[0].mxu0 %v432
      %v1565 = vpop.f32.mrb[0].mxu0
      %v1566 = vadd.f32 %v1469, %v1565
      %v1567 = vpop.f32.mrb[0].mxu0
      %v1568 = vpop.f32.mrb[0].mxu0
      %v1569 = vadd.f32 %v1472, %v1568
      %v1570 = vpop.f32.mrb[0].mxu0
      %1571 = vmatprep.mubr.bf16.mxu0 %v536
      %1572 = vmatmul.mubr.bf16.gmra.mrb[0].mxu0 %v434
      %v1573 = vpop.f32.mrb[0].mxu0
      %v1574 = vadd.f32 %v1477, %v1573
      %v1575 = vpop.f32.mrb[0].mxu0
      %v1576 = vpop.f32.mrb[0].mxu0
      %v1577 = vadd.f32 %v1480, %v1576
      %v1578 = vpop.f32.mrb[0].mxu0
      %1579 = vmatprep.mubr.bf16.mxu0 %v605
      %1580 = vmatmul.mubr.bf16.gmra.mrb[0].mxu0 %v436
      %v1581 = vpop.f32.mrb[0].mxu0
      %v1582 = vadd.f32 %v1485, %v1581
      %v1583 = vpop.f32.mrb[0].mxu0
      %v1584 = vpop.f32.mrb[0].mxu0
      %v1585 = vadd.f32 %v1488, %v1584
      %v1586 = vpop.f32.mrb[0].mxu0
      %1587 = vmatprep.mubr.bf16.mxu0 %v624
      %1588 = vmatmul.mubr.bf16.gmra.mrb[0].mxu0 %v438
      %v1589 = vpop.f32.mrb[0].mxu0
      %v1590 = vadd.f32 %v1493, %v1589
      %v1591 = vpop.f32.mrb[0].mxu0
      %v1592 = vpop.f32.mrb[0].mxu0
      %v1593 = vadd.f32 %v1496, %v1592
      %v1594 = vpop.f32.mrb[0].mxu0
      %1595 = vdwg.mxu0
      %1596 = vmatprep.subr.bf16.mxu0 0
      %1597 = vmatpush1.bf16.msra.mxu0 %v1128
      %1598 = vmatprep.subr.bf16.mxu0 0
      %1599 = vmatpush1.bf16.msra.mxu0 %v1129
      %1600 = vmatprep.subr.bf16.mxu0 0
      %1601 = vmatpush1.bf16.msra.mxu0 %v1130
      %1602 = vmatprep.subr.bf16.mxu0 0
      %1603 = vmatpush1.bf16.msra.mxu0 %v1131
      %1604 = vmatprep.subr.bf16.mxu0 0
      %1605 = vmatpush1.bf16.msra.mxu0 %v1132
      %1606 = vmatprep.subr.bf16.mxu0 0
      %1607 = vmatpush1.bf16.msra.mxu0 %v1133
      %1608 = vmatprep.subr.bf16.mxu0 0
      %1609 = vmatpush1.bf16.msra.mxu0 %v1134
      %1610 = vmatprep.subr.bf16.mxu0 0
      %1611 = vmatpush1.bf16.msra.mxu0 %v1135
      %1612 = vmatprep.subr.bf16.mxu0 0
      %1613 = vmatpush1.bf16.msra.mxu0 0
      %1614 = vmatprep.subr.bf16.mxu0 0
      %1615 = vmatpush1.bf16.msra.mxu0 0
      %1616 = vmatprep.subr.bf16.mxu0 0
      %1617 = vmatpush1.bf16.msra.mxu0 0
      %1618 = vmatprep.subr.bf16.mxu0 0
      %1619 = vmatpush1.bf16.msra.mxu0 0
      %1620 = vmatprep.subr.bf16.mxu0 0
      %1621 = vmatpush1.bf16.msra.mxu0 0
      %1622 = vmatprep.subr.bf16.mxu0 0
      %1623 = vmatpush1.bf16.msra.mxu0 0
      %1624 = vmatprep.subr.bf16.mxu0 0
      %1625 = vmatpush1.bf16.msra.mxu0 0
      %1626 = vmatprep.subr.bf16.mxu0 0
      %1627 = vmatpush1.bf16.msra.mxu0 0
      %1628 = vmatprep.mubr.bf16.mxu0 0
      %1629 = vmatmul.mubr.bf16.gmra.mrb[0].mxu0 %v570
      %v1630 = vpop.f32.mrb[0].mxu0
      %v1631 = vadd.f32 %v1534, %v1630
      %v1632 = vpop.f32.mrb[0].mxu0
      %v1633 = vpop.f32.mrb[0].mxu0
      %v1634 = vadd.f32 %v1537, %v1633
      %v1635 = vpop.f32.mrb[0].mxu0
      %1636 = vmatprep.mubr.bf16.mxu0 0
      %1637 = vmatmul.mubr.bf16.gmra.mrb[0].mxu0 %v573
      %v1638 = vpop.f32.mrb[0].mxu0
      %v1639 = vadd.f32 %v1542, %v1638
      %v1640 = vpop.f32.mrb[0].mxu0
      %v1641 = vpop.f32.mrb[0].mxu0
      %v1642 = vadd.f32 %v1545, %v1641
      %v1643 = vpop.f32.mrb[0].mxu0
      %1644 = vmatprep.mubr.bf16.mxu0 0
      %1645 = vmatmul.mubr.bf16.gmra.mrb[0].mxu0 %v576
      %v1646 = vpop.f32.mrb[0].mxu0
      %v1647 = vadd.f32 %v1550, %v1646
      %v1648 = vpop.f32.mrb[0].mxu0
      %v1649 = vpop.f32.mrb[0].mxu0
      %v1650 = vadd.f32 %v1553, %v1649
      %v1651 = vpop.f32.mrb[0].mxu0
      %1652 = vmatprep.mubr.bf16.mxu0 0
      %1653 = vmatmul.mubr.bf16.gmra.mrb[0].mxu0 %v579
      %v1654 = vpop.f32.mrb[0].mxu0
      %v1655 = vadd.f32 %v1558, %v1654
      %v1656 = vpop.f32.mrb[0].mxu0
      %v1657 = vpop.f32.mrb[0].mxu0
      %v1658 = vadd.f32 %v1561, %v1657
      %v1659 = vpop.f32.mrb[0].mxu0
      %1660 = vmatprep.mubr.bf16.mxu0 0
      %1661 = vmatmul.mubr.bf16.gmra.mrb[0].mxu0 %v582
      %v1662 = vpop.f32.mrb[0].mxu0
      %v1663 = vadd.f32 %v1566, %v1662
      %v1664 = vpop.f32.mrb[0].mxu0
      %v1665 = vpop.f32.mrb[0].mxu0
      %v1666 = vadd.f32 %v1569, %v1665
      %v1667 = vpop.f32.mrb[0].mxu0
      %1668 = vmatprep.mubr.bf16.mxu0 0
      %1669 = vmatmul.mubr.bf16.gmra.mrb[0].mxu0 %v585
      %v1670 = vpop.f32.mrb[0].mxu0
      %v1671 = vadd.f32 %v1574, %v1670
      %v1672 = vpop.f32.mrb[0].mxu0
      %v1673 = vpop.f32.mrb[0].mxu0
      %v1674 = vadd.f32 %v1577, %v1673
      %v1675 = vpop.f32.mrb[0].mxu0
      %1676 = vmatprep.mubr.bf16.mxu0 0
      %1677 = vmatmul.mubr.bf16.gmra.mrb[0].mxu0 %v611
      %v1678 = vpop.f32.mrb[0].mxu0
      %v1679 = vadd.f32 %v1582, %v1678
      %v1680 = vpop.f32.mrb[0].mxu0
      %v1681 = vpop.f32.mrb[0].mxu0
      %v1682 = vadd.f32 %v1585, %v1681
      %v1683 = vpop.f32.mrb[0].mxu0
      %1684 = vmatprep.mubr.bf16.mxu0 0
      %1685 = vmatmul.mubr.bf16.gmra.mrb[0].mxu0 %v630
      %v1686 = vpop.f32.mrb[0].mxu0
      %v1687 = vadd.f32 %v1590, %v1686
      %v1688 = vpop.f32.mrb[0].mxu0
      %v1689 = vpop.f32.mrb[0].mxu0
      %v1690 = vadd.f32 %v1593, %v1689
      %v1691 = vpop.f32.mrb[0].mxu0
      %1692 = vdwg.mxu0
      %1693 = vst [vmem:[%s275] sm:$0xff] %v1631
      %1694 = vst [vmem:[%s275 + $0x8] sm:$0xff] %v1634
      %1695 = vst [vmem:[%s275 + $0x10] sm:$0xff] %v1639
      %1696 = vst [vmem:[%s275 + $0x18] sm:$0xff] %v1642
      %1697 = vst [vmem:[%s275 + $0x20] sm:$0xff] %v1647
      %1698 = vst [vmem:[%s275 + $0x28] sm:$0xff] %v1650
      %1699 = vst [vmem:[%s275 + $0x30] sm:$0xff] %v1655
      %1700 = vst [vmem:[%s275 + $0x38] sm:$0xff] %v1658
      %1701 = vst [vmem:[%s275 + $0x40] sm:$0xff] %v1663
      %1702 = vst [vmem:[%s275 + $0x48] sm:$0xff] %v1666
      %1703 = vst [vmem:[%s275 + $0x50] sm:$0xff] %v1671
      %1704 = vst [vmem:[%s275 + $0x58] sm:$0xff] %v1674
      %1705 = vst [vmem:[%s275 + $0x60] sm:$0xff] %v1679
      %1706 = vst [vmem:[%s275 + $0x68] sm:$0xff] %v1682
      %1707 = vst [vmem:[%s275 + $0x70] sm:$0xff] %v1687
      %1708 = vst [vmem:[%s275 + $0x78] sm:$0xff] %v1690
      %v1709 = vadd.f32 %v1631, %v1634
      %v1710 = vadd.f32 %v1709, %v1639
      %v1711 = vadd.f32 %v1710, %v1642
      %v1712 = vadd.f32 %v1711, %v1647
      %v1713 = vadd.f32 %v1712, %v1650
      %v1714 = vadd.f32 %v1713, %v1655
      %v1715 = vadd.f32 %v1714, %v1658
      %v1716 = vadd.f32 %v1715, %v1663
      %v1717 = vadd.f32 %v1716, %v1666
      %v1718 = vadd.f32 %v1717, %v1671
      %v1719 = vadd.f32 %v1718, %v1674
      %v1720 = vadd.f32 %v1719, %v1679
      %v1721 = vadd.f32 %v1720, %v1682
      %v1722 = vadd.f32 %v1721, %v1687
      %v1723 = vadd.f32 %v1722, %v1690
      %v1724 = vrot.slane %v1723, 4
      %v1725 = vadd.f32 %v1723, %v1724
      %v1726 = vrot.slane %v1725, 2
      %v1727 = vadd.f32 %v1725, %v1726
      %v1728 = vrot.slane %v1727, 1
      %v1729 = vadd.f32 %v1727, %v1728
      %v1730 = vmul.f32 %v1631, %v1631
      %v1731 = vmul.f32 %v1634, %v1634
      %v1732 = vmul.f32 %v1639, %v1639
      %v1733 = vmul.f32 %v1642, %v1642
      %v1734 = vmul.f32 %v1647, %v1647
      %v1735 = vmul.f32 %v1650, %v1650
      %v1736 = vmul.f32 %v1655, %v1655
      %v1737 = vmul.f32 %v1658, %v1658
      %v1738 = vmul.f32 %v1663, %v1663
      %v1739 = vmul.f32 %v1666, %v1666
      %v1740 = vmul.f32 %v1671, %v1671
      %v1741 = vmul.f32 %v1674, %v1674
      %v1742 = vmul.f32 %v1679, %v1679
      %v1743 = vmul.f32 %v1682, %v1682
      %v1744 = vmul.f32 %v1687, %v1687
      %v1745 = vmul.f32 %v1690, %v1690
      %v1746 = vadd.f32 %v1730, %v1731
      %v1747 = vadd.f32 %v1746, %v1732
      %v1748 = vadd.f32 %v1747, %v1733
      %v1749 = vadd.f32 %v1748, %v1734
      %v1750 = vadd.f32 %v1749, %v1735
      %v1751 = vadd.f32 %v1750, %v1736
      %v1752 = vadd.f32 %v1751, %v1737
      %v1753 = vadd.f32 %v1752, %v1738
      %v1754 = vadd.f32 %v1753, %v1739
      %v1755 = vadd.f32 %v1754, %v1740
      %v1756 = vadd.f32 %v1755, %v1741
      %v1757 = vadd.f32 %v1756, %v1742
      %v1758 = vadd.f32 %v1757, %v1743
      %v1759 = vadd.f32 %v1758, %v1744
      %v1760 = vadd.f32 %v1759, %v1745
      %v1761 = vrot.slane %v1760, 4
      %v1762 = vadd.f32 %v1760, %v1761
      %v1763 = vrot.slane %v1762, 2
      %v1764 = vadd.f32 %v1762, %v1763
      %v1765 = vrot.slane %v1764, 1
      %v1766 = vadd.f32 %v1764, %v1765
      %vm1767 = vcmask 1040384
      %v1768 = vsel %vm1767, %v1729, %v1766
      %1769 = vst [vmem:[%s284] sm:$0x3] %v1768
      %s1770 = smul.u32 8, %s22
      %p1771 = scmp.lt.s32.totalorder %s21, 1
      %s1772 = scalar_select %p1771, %s21, 1
      %p1773 = scmp.lt.s32.totalorder %s1770, 15
      %s1774 = scalar_select %p1773, %s1770, 15
      %s1775 = smul.addr %s1774, 2
      %s1776 = smul.addr %s1772, 32
      %s1777 = sadd.s32 %s1775, %s1776
      %s1778 = smul.addr %s1777, 8
      %s1779 = scalar_lea.vmem %s4, %s1778
      %p1780 = scmp.lt.s32.totalorder %s21, 1
      %s1781 = scalar_select %p1780, %s21, 1
      %p1782 = scmp.lt.s32.totalorder %s22, 1
      %s1783 = scalar_select %p1782, %s22, 1
      %s1784 = smul.addr %s1781, 2
      %s1785 = sadd.s32 %s1783, %s1784
      %s1786 = smul.addr %s1785, 2
      %s1787 = scalar_lea.vmem %s5, %s1786
      // Predicated region
      $region37: #{resnet_block.4} parent=35 // pred_check
        %p1788 = pneg %p140
      $region38: #{resnet_block.4} parent=35 // pred_check_branch
        %1790 = sbr.rel (%p1788) target = $region40
      $region39: #{resnet_block.4} parent=35 // pred_region
        %s1791 = smul.u32 8, %s22
      $region40: #{resnet_block.4} parent=35 // pred_fallthru
        _
      // Predicated region
      $region41: #{resnet_block.4} parent=35 // pred_check
        %p1792 = pneg %p168
      $region42: #{resnet_block.4} parent=35 // pred_check_branch
        %1794 = sbr.rel (%p1792) target = $region44
      $region43: #{resnet_block.4} parent=35 // pred_region
        _
      $region44: #{resnet_block.4} parent=35 // pred_fallthru
        _
    $region36: #{resnet_block.4} parent=5 // pred_fallthru
      _
    %p1795 = scmp.le.s32.totalorder 2, %s12
    // Predicated region
    $region45: #{resnet_block.4} parent=5 // pred_check
      %p1796 = pneg %p1795
    $region46: #{resnet_block.4} parent=5 // pred_check_branch
      %1798 = sbr.rel (%p1796) target = $region48
    $region47: #{resnet_block.4} parent=5 // pred_region
      %s1799 = ssub.s32 %s12, 2
      // Predicated region
      $region49: #{resnet_block.4} parent=47 // pred_check
        %p1800 = pneg %p146
      $region50: #{resnet_block.4} parent=47 // pred_check_branch
        %1802 = sbr.rel (%p1800) target = $region52
      $region51: #{resnet_block.4} parent=47 // pred_region
        %s1803 = smul.u32 8, %s24
        %p1804 = scmp.lt.s32.totalorder %s23, 1
        %s1805 = scalar_select %p1804, %s23, 1
        %p1806 = scmp.lt.s32.totalorder %s1803, 15
        %s1807 = scalar_select %p1806, %s1803, 15
        %s1808 = smul.addr %s1807, 2
        %s1809 = smul.addr %s1805, 32
        %s1810 = sadd.s32 %s1808, %s1809
        %s1811 = smul.addr %s1810, 8
        %s1812 = scalar_lea.vmem %s4, %s1811
      $region52: #{resnet_block.4} parent=47 // pred_fallthru
        _
      // Predicated region
      $region53: #{resnet_block.4} parent=47 // pred_check
        %p1813 = pneg %p174
      $region54: #{resnet_block.4} parent=47 // pred_check_branch
        %1815 = sbr.rel (%p1813) target = $region56
      $region55: #{resnet_block.4} parent=47 // pred_region
        %p1816 = scmp.lt.s32.totalorder %s23, 1
        %s1817 = scalar_select %p1816, %s23, 1
        %p1818 = scmp.lt.s32.totalorder %s24, 1
        %s1819 = scalar_select %p1818, %s24, 1
        %s1820 = smul.addr %s1817, 2
        %s1821 = sadd.s32 %s1819, %s1820
        %s1822 = smul.addr %s1821, 2
        %s1823 = scalar_lea.vmem %s5, %s1822
      $region56: #{resnet_block.4} parent=47 // pred_fallthru
        _
    $region48: #{resnet_block.4} parent=5 // pred_fallthru
      _
  $region6: #{resnet_block.4} parent=0 // loop_footer
    %s16 = sadd.s32 1, %s12
  $region7: #{resnet_block.4} parent=0 // loop_footer_branch
    %11 = sbr.rel target = $region3
  $region8: #{resnet_block.4} parent=0 // loop_exit
    _

</llo_original>
